<compile_context>
chip_gen: v7x
topology: tpu7x:2x2x1
jax: 0.10.0
libtpu: 0.0.40
codegen_flags: <defaults>
</compile_context>

<pallas_src>
import functools
import math

import jax
import jax.numpy as jnp
from jax import lax
from jax.experimental import pallas as pl
from jax.experimental.pallas import tpu as pltpu


# ------------------------------- constants / helpers --------------------------

_SQRT_2_OVER_PI = 0.7978845608028654
_LN_EPS = 1e-5

ROW_TILE = 512     # measured ~85% of HBM roofline at 512-wide tiles on v5e/v6e
COL_TILE = 512
K_TILE = 512


def _gelu(y):
    # TODO(synk): PyTorch nn.GELU default is the exact erf form; the tanh approximation
    # (max abs diff ~1e-3) is used here for guaranteed Mosaic lowering.
    return 0.5 * y * (1.0 + jnp.tanh(_SQRT_2_OVER_PI * (y + 0.044715 * y * y * y)))


def _round_up(x, m):
    return ((x + m - 1) // m) * m


def _tile(dim, tile):
    """(tile, padded_dim): one full block for small dims, fixed big tiles otherwise."""
    if dim <= tile:
        return dim, dim
    return tile, _round_up(dim, tile)


def _pad2(x, rows, cols):
    r, c = x.shape
    if r == rows and c == cols:
        return x
    return jnp.pad(x, ((0, rows - r), (0, cols - c)))


def _compiler_params(semantics, blocks):
    """dimension_semantics + explicit vmem limit from double-buffered block footprints."""
    byts = sum(math.prod(s) * jnp.dtype(d).itemsize for s, d in blocks)
    limit = int(min(max(2 * byts + (8 << 20), 32 << 20), 64 << 20))
    return pltpu.CompilerParams(dimension_semantics=semantics, vmem_limit_bytes=limit)


# ------------------------------- kernels --------------------------------------

def _ln_matmul_kernel(x_ref, g_ref, b_ref, w_ref, bias_ref, o_ref, xn_ref, *, activation):
    # Fused LayerNorm(x) @ W + bias (+ GELU).  LN is computed once per row block
    # (at j == 0) into a bf16 VMEM scratch and reused for every N tile.
    @pl.when(pl.program_id(1) == 0)
    def _():
        x = x_ref[...].astype(jnp.float32)
        mean = jnp.mean(x, axis=-1, keepdims=True)
        var = jnp.mean(jnp.square(x - mean), axis=-1, keepdims=True)
        xn = (x - mean) * lax.rsqrt(var + _LN_EPS)
        xn_ref[...] = (xn * g_ref[...] + b_ref[...]).astype(jnp.bfloat16)

    y = jnp.dot(xn_ref[...], w_ref[...].astype(jnp.bfloat16),
                preferred_element_type=jnp.float32)
    y = y + bias_ref[...]
    if activation == "gelu":
        y = _gelu(y)
    o_ref[...] = y.astype(o_ref.dtype)


def _matmul_kernel(x_ref, w_ref, bias_ref, o_ref, acc_ref):
    # Plain x @ W + bias with f32 accumulator over the K grid axis (axis 2).
    @pl.when(pl.program_id(2) == 0)
    def _():
        acc_ref[...] = jnp.zeros_like(acc_ref)

    acc_ref[...] += jnp.dot(x_ref[...].astype(jnp.bfloat16),
                            w_ref[...].astype(jnp.bfloat16),
                            preferred_element_type=jnp.float32)

    @pl.when(pl.program_id(2) == pl.num_programs(2) - 1)
    def _():
        o_ref[...] = (acc_ref[...] + bias_ref[...]).astype(o_ref.dtype)


def _matmul_res_ln_kernel(x_ref, w_ref, bias_ref, r_ref, g_ref, b_ref, o_ref, acc_ref):
    # Fused (x @ W + bias + residual) -> LayerNorm in the last-K epilogue.
    @pl.when(pl.program_id(1) == 0)
    def _():
        acc_ref[...] = jnp.zeros_like(acc_ref)

    acc_ref[...] += jnp.dot(x_ref[...].astype(jnp.bfloat16),
                            w_ref[...].astype(jnp.bfloat16),
                            preferred_element_type=jnp.float32)

    @pl.when(pl.program_id(1) == pl.num_programs(1) - 1)
    def _():
        y = acc_ref[...] + bias_ref[...] + r_ref[...].astype(jnp.float32)
        mean = jnp.mean(y, axis=-1, keepdims=True)
        var = jnp.mean(jnp.square(y - mean), axis=-1, keepdims=True)
        yn = (y - mean) * lax.rsqrt(var + _LN_EPS)
        o_ref[...] = (yn * g_ref[...] + b_ref[...]).astype(o_ref.dtype)


def _attn_heads(q_all, k_all, v_all, keep, num_heads, head_dim, scale):
    # q_all: (Sq, H*Dh) bf16; k_all/v_all: (Sk, H*Dh) bf16; keep: bool broadcastable to
    # (Sq, Sk).  Per-head loop is unrolled; one concatenated lane-dense result is returned.
    # TODO(synk): for long sequences switch to a flash-style KV-tiled grid with
    # online-softmax scratch (Sq*Sk f32 scores per head would pressure v7x's 64 MiB VMEM).
    outs = []
    for h in range(num_heads):
        lo, hi = h * head_dim, (h + 1) * head_dim
        q, k, v = q_all[:, lo:hi], k_all[:, lo:hi], v_all[:, lo:hi]
        scores = lax.dot_general(q, k, (((1,), (1,)), ((), ())),
                                 preferred_element_type=jnp.float32)      # (Sq, Sk)
        # masked_fill(mask == 0, -1e20) BEFORE scaling, matching the PyTorch module.
        scores = jnp.where(keep, scores, jnp.float32(-1e20))
        scores = scores * scale
        m = jnp.max(scores, axis=-1, keepdims=True)
        p = jnp.exp(scores - m)
        denom = jnp.sum(p, axis=-1, keepdims=True)
        attn = p * pl.reciprocal(denom, approx=True)
        outs.append(jnp.dot(attn.astype(jnp.bfloat16), v,
                            preferred_element_type=jnp.float32))          # (Sq, Dh)
    return jnp.concatenate(outs, axis=-1)                                 # (Sq, H*Dh)


def _self_attn_kernel(qkv_ref, pad_ref, o_ref, *, num_heads, head_dim, scale, causal):
    # qkv_ref: (S, 3*H*Dh) bf16 for one batch; pad_ref: (1, S) key padding; mask built
    # in-kernel (causal via iota) so no [S, S] mask is streamed from HBM.
    s, hd3 = qkv_ref.shape
    hd = hd3 // 3
    qkv = qkv_ref[...]
    keep = pad_ref[...] != 0.0
    if causal:
        row = lax.broadcasted_iota(jnp.int32, (s, s), 0)
        col = lax.broadcasted_iota(jnp.int32, (s, s), 1)
        keep = jnp.logical_and(keep, col <= row)
    out = _attn_heads(qkv[:, :hd], qkv[:, hd:2 * hd], qkv[:, 2 * hd:], keep,
                      num_heads, head_dim, scale)
    o_ref[...] = out.astype(o_ref.dtype)


def _cross_attn_kernel(q_ref, kv_ref, pad_ref, o_ref, *, num_heads, head_dim, scale):
    # q_ref: (Sq, H*Dh); kv_ref: (Sk, 2*H*Dh); pad_ref: (1, Sk) encoder key padding.
    hd = q_ref.shape[1]
    kv = kv_ref[...]
    keep = pad_ref[...] != 0.0
    out = _attn_heads(q_ref[...], kv[:, :hd], kv[:, hd:], keep,
                      num_heads, head_dim, scale)
    o_ref[...] = out.astype(o_ref.dtype)


# ----------------------------- kernel wrappers ---------------------------------

def ln_linear(x, gamma, beta, w, bias, activation=None, out_dtype=jnp.bfloat16):
    """LayerNorm(x) @ w + bias (optionally GELU).  x: [M, D] bf16, w: [D, N] bf16."""
    # TODO(synk): for very large D on v7x, K-tile this kernel (LN pre-pass) to bound VMEM.
    m, d = x.shape
    n = w.shape[1]
    tm, mp = _tile(m, ROW_TILE)
    tn, npad = _tile(n, COL_TILE)
    xp = _pad2(x, mp, d)
    wp = _pad2(w, d, npad)
    bp = bias if npad == n else jnp.pad(bias, ((0, 0), (0, npad - n)))
    kernel = functools.partial(_ln_matmul_kernel, activation=activation)
    blocks = [((tm, d), x.dtype), ((1, d), jnp.float32), ((1, d), jnp.float32),
              ((d, tn), w.dtype), ((1, tn), jnp.float32), ((tm, tn), out_dtype),
              ((tm, d), jnp.bfloat16)]
    out = pl.pallas_call(
        kernel,
        out_shape=jax.ShapeDtypeStruct((mp, npad), out_dtype),
        grid=(mp // tm, npad // tn),
        in_specs=[
            pl.BlockSpec((tm, d), lambda i, j: (i, 0)),
            pl.BlockSpec((1, d), lambda i, j: (0, 0)),
            pl.BlockSpec((1, d), lambda i, j: (0, 0)),
            pl.BlockSpec((d, tn), lambda i, j: (0, j)),
            pl.BlockSpec((1, tn), lambda i, j: (0, j)),
        ],
        out_specs=pl.BlockSpec((tm, tn), lambda i, j: (i, j)),
        scratch_shapes=[pltpu.VMEM((tm, d), jnp.bfloat16)],
        compiler_params=_compiler_params(("parallel", "arbitrary"), blocks),
    )(xp, gamma, beta, wp, bp)
    if mp != m or npad != n:
        out = out[:m, :n]
    return out


def linear_res_ln(x, w, bias, res, gamma, beta, out_dtype=jnp.bfloat16):
    """LayerNorm(x @ w + bias + res) fused; K-tiled accumulator, N (=D) untiled."""
    m, k = x.shape
    d = w.shape[1]
    tm, mp = _tile(m, ROW_TILE)
    tk, kp = _tile(k, K_TILE)
    xp = _pad2(x, mp, kp)
    wp = _pad2(w, kp, d)
    rp = _pad2(res, mp, d)
    blocks = [((tm, tk), x.dtype), ((tk, d), w.dtype), ((1, d), jnp.float32),
              ((tm, d), res.dtype), ((1, d), jnp.float32), ((1, d), jnp.float32),
              ((tm, d), out_dtype), ((tm, d), jnp.float32)]
    out = pl.pallas_call(
        _matmul_res_ln_kernel,
        out_shape=jax.ShapeDtypeStruct((mp, d), out_dtype),
        grid=(mp // tm, kp // tk),
        in_specs=[
            pl.BlockSpec((tm, tk), lambda i, kk: (i, kk)),
            pl.BlockSpec((tk, d), lambda i, kk: (kk, 0)),
            pl.BlockSpec((1, d), lambda i, kk: (0, 0)),
            pl.BlockSpec((tm, d), lambda i, kk: (i, 0)),
            pl.BlockSpec((1, d), lambda i, kk: (0, 0)),
            pl.BlockSpec((1, d), lambda i, kk: (0, 0)),
        ],
        out_specs=pl.BlockSpec((tm, d), lambda i, kk: (i, 0)),
        scratch_shapes=[pltpu.VMEM((tm, d), jnp.float32)],
        compiler_params=_compiler_params(("parallel", "arbitrary"), blocks),
    )(xp, wp, bias, rp, gamma, beta)
    if mp != m:
        out = out[:m]
    return out


def linear(x, w, bias, out_dtype=jnp.float32):
    """x @ w + bias with M/N/K tiling and an f32 accumulator over the K grid axis."""
    m, k = x.shape
    n = w.shape[1]
    tm, mp = _tile(m, ROW_TILE)
    tn, npad = _tile(n, COL_TILE)
    tk, kp = _tile(k, K_TILE)
    xp = _pad2(x, mp, kp)
    wp = _pad2(w, kp, npad)
    bp = bias if npad == n else jnp.pad(bias, ((0, 0), (0, npad - n)))
    blocks = [((tm, tk), x.dtype), ((tk, tn), w.dtype), ((1, tn), jnp.float32),
              ((tm, tn), out_dtype), ((tm, tn), jnp.float32)]
    out = pl.pallas_call(
        _matmul_kernel,
        out_shape=jax.ShapeDtypeStruct((mp, npad), out_dtype),
        grid=(mp // tm, npad // tn, kp // tk),
        in_specs=[
            pl.BlockSpec((tm, tk), lambda i, j, kk: (i, kk)),
            pl.BlockSpec((tk, tn), lambda i, j, kk: (kk, j)),
            pl.BlockSpec((1, tn), lambda i, j, kk: (0, j)),
        ],
        out_specs=pl.BlockSpec((tm, tn), lambda i, j, kk: (i, j)),
        scratch_shapes=[pltpu.VMEM((tm, tn), jnp.float32)],
        compiler_params=_compiler_params(("parallel", "parallel", "arbitrary"), blocks),
    )(xp, wp, bp)
    if mp != m or npad != n:
        out = out[:m, :n]
    return out


def _self_attention(qkv, pad, num_heads, head_dim, causal, out_dtype):
    # qkv: [B, S, 3*H*Dh] bf16; pad: [B, 1, S] f32; output [B, S, H*Dh] (no transposes).
    b, s, hd3 = qkv.shape
    hd = hd3 // 3
    kernel = functools.partial(_self_attn_kernel, num_heads=num_heads, head_dim=head_dim,
                               scale=head_dim ** (-0.5), causal=causal)
    blocks = [((s, hd3), qkv.dtype), ((1, s), jnp.float32), ((s, hd), out_dtype),
              ((s, s), jnp.float32)]
    return pl.pallas_call(
        kernel,
        out_shape=jax.ShapeDtypeStruct((b, s, hd), out_dtype),
        grid=(b,),
        in_specs=[
            pl.BlockSpec((None, s, hd3), lambda i: (i, 0, 0)),
            pl.BlockSpec((None, 1, s), lambda i: (i, 0, 0)),
        ],
        out_specs=pl.BlockSpec((None, s, hd), lambda i: (i, 0, 0)),
        compiler_params=_compiler_params(("parallel",), blocks),
    )(qkv, pad)


def _cross_attention(q, kv, pad, num_heads, head_dim, out_dtype):
    # q: [B, Sq, H*Dh]; kv: [B, Sk, 2*H*Dh]; pad: [B, 1, Sk].
    b, sq, hd = q.shape
    sk = kv.shape[1]
    kernel = functools.partial(_cross_attn_kernel, num_heads=num_heads,
                               head_dim=head_dim, scale=head_dim ** (-0.5))
    blocks = [((sq, hd), q.dtype), ((sk, 2 * hd), kv.dtype), ((1, sk), jnp.float32),
              ((sq, hd), out_dtype), ((sq, sk), jnp.float32)]
    return pl.pallas_call(
        kernel,
        out_shape=jax.ShapeDtypeStruct((b, sq, hd), out_dtype),
        grid=(b,),
        in_specs=[
            pl.BlockSpec((None, sq, hd), lambda i: (i, 0, 0)),
            pl.BlockSpec((None, sk, 2 * hd), lambda i: (i, 0, 0)),
            pl.BlockSpec((None, 1, sk), lambda i: (i, 0, 0)),
        ],
        out_specs=pl.BlockSpec((None, sq, hd), lambda i: (i, 0, 0)),
        compiler_params=_compiler_params(("parallel",), blocks),
    )(q, kv, pad)


# ------------------------------ module blocks ----------------------------------

def self_attention_block(p, x, pad, num_heads, head_dim, causal, norm_g, norm_b):
    """LN+QKV projection, attention core, out-projection fused with residual+LN."""
    b, s, d = x.shape
    hd = num_heads * head_dim
    qkv = ln_linear(x.reshape(b * s, d), p["ln_g"], p["ln_b"], p["wqkv"], p["bqkv"])
    qkv = qkv.reshape(b, s, 3 * hd)
    out = _self_attention(qkv, pad, num_heads, head_dim, causal, jnp.bfloat16)
    y = linear_res_ln(out.reshape(b * s, hd), p["wo"], p["bo"],
                      x.reshape(b * s, d), norm_g, norm_b)
    return y.reshape(b, s, d)


def cross_attention_block(p, x, enc, pad, num_heads, head_dim, norm_g, norm_b):
    """Attention(q=x, k=enc, v=enc) with the same (shared) projection weights."""
    b, sq, d = x.shape
    sk = enc.shape[1]
    hd = num_heads * head_dim
    q = ln_linear(x.reshape(b * sq, d), p["ln_g"], p["ln_b"], p["wq"], p["bq"])
    kv = ln_linear(enc.reshape(b * sk, d), p["ln_g"], p["ln_b"], p["wkv"], p["bkv"])
    out = _cross_attention(q.reshape(b, sq, hd), kv.reshape(b, sk, 2 * hd), pad,
                           num_heads, head_dim, jnp.bfloat16)
    y = linear_res_ln(out.reshape(b * sq, hd), p["wo"], p["bo"],
                      x.reshape(b * sq, d), norm_g, norm_b)
    return y.reshape(b, sq, d)


def feedforward_block(p, x, norm_g, norm_b):
    b, s, d = x.shape
    h = ln_linear(x.reshape(b * s, d), p["ln_g"], p["ln_b"], p["w1"], p["b1"],
                  activation="gelu")
    y = linear_res_ln(h, p["w2"], p["b2"], x.reshape(b * s, d), norm_g, norm_b)
    return y.reshape(b, s, d)


# ------------------------------ model forward ----------------------------------

def encoder_forward(p, ids, pad, num_heads, head_dim):
    s = ids.shape[1]
    # Embedding gather + positional add is XLA glue (no clean Pallas equivalent).
    x = (p["embed"][ids] + p["pos_embed"][:, :s]).astype(jnp.bfloat16)
    for layer in p["layers"]:
        x = self_attention_block(layer["attn"], x, pad, num_heads, head_dim, False,
                                 p["norm1_g"], p["norm1_b"])
        x = feedforward_block(layer["ff"], x, p["norm2_g"], p["norm2_b"])
    return x


def decoder_forward(p, ids, enc, dec_pad, enc_pad, num_heads, head_dim):
    s = ids.shape[1]
    x = (p["embed"][ids] + p["pos_embed"][:, :s]).astype(jnp.bfloat16)
    for layer in p["layers"]:
        ap, fp = layer["attn"], layer["ff"]
        x = self_attention_block(ap, x, dec_pad, num_heads, head_dim, True,
                                 p["norm1_g"], p["norm1_b"])
        x = cross_attention_block(ap, x, enc, enc_pad, num_heads, head_dim,
                                  p["norm2_g"], p["norm2_b"])
        x = feedforward_block(fp, x, p["norm3_g"], p["norm3_b"])
    return x


def transformer_forward(params, enc_ids, dec_ids, num_heads, head_dim):
    enc_pad = (enc_ids != 0).astype(jnp.float32)[:, None, :]    # [B, 1, S_enc]
    dec_pad = (dec_ids != 0).astype(jnp.float32)[:, None, :]    # [B, 1, S_dec]
    enc_out = encoder_forward(params["enc"], enc_ids, enc_pad, num_heads, head_dim)
    dec_out = decoder_forward(params["dec"], dec_ids, enc_out, dec_pad, enc_pad,
                              num_heads, head_dim)
    b, s, d = dec_out.shape
    logits = linear(dec_out.reshape(b * s, d), params["fc_w"], params["fc_b"],
                    out_dtype=jnp.float32)
    return logits.reshape(b, s, -1)


# ------------------------------ params / utils ----------------------------------

def get_pos_embed(len_seq, d):
    pos = jnp.arange(len_seq, dtype=jnp.float32)[:, None]
    i = jnp.arange(d // 2, dtype=jnp.float32)[None, :]
    denom = jnp.power(10000.0, 2.0 * i / d)
    pe = jnp.zeros((len_seq, d), dtype=jnp.float32)
    pe = pe.at[:, 0::2].set(jnp.sin(pos / denom))
    pe = pe.at[:, 1::2].set(jnp.cos(pos / denom))
    return pe[None]                                              # [1, S, D]


def _dense(key, din, dout, w_dtype=jnp.bfloat16):
    kw, kb = jax.random.split(key)
    w = (jax.random.normal(kw, (din, dout), jnp.float32) * 0.02).astype(w_dtype)
    b = jax.random.normal(kb, (1, dout), jnp.float32) * 0.02
    return w, b


def _init_layer(key, d, hidden_size, hidden_dim, cross):
    k1, k2, k3, k4 = jax.random.split(key, 4)
    wqkv, bqkv = _dense(k1, d, 3 * hidden_size)     # fused [q | k | v] projection
    wo, bo = _dense(k2, hidden_size, d)
    w1, b1 = _dense(k3, d, hidden_dim)
    w2, b2 = _dense(k4, hidden_dim, d)
    attn = {"ln_g": jnp.ones((1, d), jnp.float32), "ln_b": jnp.zeros((1, d), jnp.float32),
            "wqkv": wqkv, "bqkv": bqkv, "wo": wo, "bo": bo}
    if cross:
        # Pre-split q / kv weights at init so cross-attention never slices at runtime.
        attn["wq"], attn["bq"] = wqkv[:, :hidden_size], bqkv[:, :hidden_size]
        attn["wkv"], attn["bkv"] = wqkv[:, hidden_size:], bqkv[:, hidden_size:]
    ff = {"ln_g": jnp.ones((1, d), jnp.float32), "ln_b": jnp.zeros((1, d), jnp.float32),
          "w1": w1, "b1": b1, "w2": w2, "b2": b2}
    return {"attn": attn, "ff": ff}


def _init_stack(key, vocab, max_len, d, depth, hidden_size, hidden_dim, num_norms, cross):
    keys = jax.random.split(key, depth + 1)
    p = {"embed": jax.random.normal(keys[0], (vocab, d), jnp.float32) * 0.02,
         "pos_embed": get_pos_embed(max_len, d),
         "layers": [_init_layer(keys[1 + i], d, hidden_size, hidden_dim, cross)
                    for i in range(depth)]}
    for n in range(num_norms):
        p[f"norm{n + 1}_g"] = jnp.ones((1, d), jnp.float32)
        p[f"norm{n + 1}_b"] = jnp.zeros((1, d), jnp.float32)
    return p


def init_params(key, enc_vocab, dec_vocab, enc_len, dec_len, d, enc_depth, dec_depth,
                hidden_dim, head_dim, num_heads):
    hidden_size = head_dim * num_heads
    ke, kd, kf = jax.random.split(key, 3)
    fc_w, fc_b = _dense(kf, d, dec_vocab)
    return {
        "enc": _init_stack(ke, enc_vocab, enc_len, d, enc_depth, hidden_size,
                           hidden_dim, num_norms=2, cross=False),
        "dec": _init_stack(kd, dec_vocab, dec_len, d, dec_depth, hidden_size,
                           hidden_dim, num_norms=3, cross=True),
        "fc_w": fc_w, "fc_b": fc_b,
    }


# ----------------------------------- main ----------------------------------------

if __name__ == "__main__":
    # Small config consistent with the module.
    enc_vocab_size = 50
    dec_vocab_size = 60
    enc_len_seq = 8
    dec_len_seq = 8
    embedding_dim = 32
    enc_depth = 2
    dec_depth = 2
    hidden_dim = 64
    head_dim = 16
    num_heads = 2
    batch = 2

    key = jax.random.PRNGKey(0)
    k_par, k_enc, k_dec = jax.random.split(key, 3)

    params = init_params(k_par, enc_vocab_size, dec_vocab_size, enc_len_seq,
                         dec_len_seq, embedding_dim, enc_depth, dec_depth,
                         hidden_dim, head_dim, num_heads)

    # Encoder / decoder token ids with a few pad=0 tokens at the end.
    enc_ids = jax.random.randint(k_enc, (batch, enc_len_seq), 1, enc_vocab_size,
                                 dtype=jnp.int32)
    enc_ids = enc_ids.at[:, -1:].set(0)
    dec_ids = jax.random.randint(k_dec, (batch, dec_len_seq), 1, dec_vocab_size,
                                 dtype=jnp.int32)
    dec_ids = dec_ids.at[:, -2:].set(0)

    fwd = jax.jit(functools.partial(transformer_forward,
                                    num_heads=num_heads, head_dim=head_dim))
    out = fwd(params, enc_ids, dec_ids)
    out = jax.block_until_ready(out)

    assert out.shape == (batch, dec_len_seq, dec_vocab_size)
    assert bool(jnp.all(jnp.isfinite(out)))
    print("KERNEL_OK")
</pallas_src>

<mosaic_0001>
module attributes {stable_mosaic.version = 11 : i64} {
  func.func @_matmul_res_ln_kernel(%arg0: i32, %arg1: i32, %arg2: memref<16x32xbf16, #tpu.memory_space<vmem>>, %arg3: memref<32x32xbf16, #tpu.memory_space<vmem>>, %arg4: memref<1x32xf32, #tpu.memory_space<vmem>>, %arg5: memref<16x32xbf16, #tpu.memory_space<vmem>>, %arg6: memref<1x32xf32, #tpu.memory_space<vmem>>, %arg7: memref<1x32xf32, #tpu.memory_space<vmem>>, %arg8: memref<16x32xbf16, #tpu.memory_space<vmem>>, %arg9: memref<16x32xf32, #tpu.memory_space<vmem>>) attributes {dimension_semantics = [#tpu.dimension_semantics<parallel>, #tpu.dimension_semantics<arbitrary>], iteration_bounds = array<i64: 1, 1>, scalar_prefetch = 0 : i64, scratch_operands = 1 : i64, tpu.core_type = #tpu.core_type<tc>, window_params = [{transform_indices = @transform_0, window_bounds = array<i64: 16, 32>}, {transform_indices = @transform_1, window_bounds = array<i64: 32, 32>}, {pipeline_mode = #tpu.pipeline_mode<synchronous>, transform_indices = @transform_2, window_bounds = array<i64: 1, 32>}, {transform_indices = @transform_3, window_bounds = array<i64: 16, 32>}, {pipeline_mode = #tpu.pipeline_mode<synchronous>, transform_indices = @transform_4, window_bounds = array<i64: 1, 32>}, {pipeline_mode = #tpu.pipeline_mode<synchronous>, transform_indices = @transform_5, window_bounds = array<i64: 1, 32>}, {transform_indices = @transform_6, window_bounds = array<i64: 16, 32>}]} {
    %c0_i32 = arith.constant 0 : i32
    %0 = arith.cmpi eq, %arg1, %c0_i32 : i32
    %1 = arith.extui %0 : i1 to i32
    %c0_i32_0 = arith.constant 0 : i32
    %2 = arith.cmpi ne, %1, %c0_i32_0 : i32
    scf.if %2 {
      %cst_10 = arith.constant 0.000000e+00 : f32
      %12 = vector.broadcast %cst_10 : f32 to vector<16x32xf32>
      %c0_11 = arith.constant 0 : index
      %c0_12 = arith.constant 0 : index
      %13 = vector.load %arg9[%c0_11, %c0_12] : memref<16x32xf32, #tpu.memory_space<vmem>>, vector<16x32xf32>
      tpu.vector_store %arg9[%c0_11, %c0_12], %12 {strides = array<i32>} : memref<16x32xf32, #tpu.memory_space<vmem>>, vector<16x32xf32>,
    } else {
    }
    %c0 = arith.constant 0 : index
    %c0_1 = arith.constant 0 : index
    %3 = vector.load %arg9[%c0, %c0_1] : memref<16x32xf32, #tpu.memory_space<vmem>>, vector<16x32xf32>
    %c0_2 = arith.constant 0 : index
    %c0_3 = arith.constant 0 : index
    %4 = vector.load %arg2[%c0_2, %c0_3] : memref<16x32xbf16, #tpu.memory_space<vmem>>, vector<16x32xbf16>
    %c0_4 = arith.constant 0 : index
    %c0_5 = arith.constant 0 : index
    %5 = vector.load %arg3[%c0_4, %c0_5] : memref<32x32xbf16, #tpu.memory_space<vmem>>, vector<32x32xbf16>
    %cst = arith.constant dense<0.000000e+00> : vector<16x32xf32>
    %6 = tpu.matmul %4, %5, %cst {dimension_numbers = #tpu.dot_dimension_numbers<[1], [0], [0], [1], [0, 0, 1, 1], [], []>} : vector<16x32xbf16>, vector<32x32xbf16>, vector<16x32xf32> -> vector<16x32xf32>
    %7 = arith.addf %3, %6 : vector<16x32xf32>
    %c0_6 = arith.constant 0 : index
    %c0_7 = arith.constant 0 : index
    %8 = vector.load %arg9[%c0_6, %c0_7] : memref<16x32xf32, #tpu.memory_space<vmem>>, vector<16x32xf32>
    tpu.vector_store %arg9[%c0_6, %c0_7], %7 {strides = array<i32>} : memref<16x32xf32, #tpu.memory_space<vmem>>, vector<16x32xf32>,
    %c0_i32_8 = arith.constant 0 : i32
    %9 = arith.cmpi eq, %arg1, %c0_i32_8 : i32
    %10 = arith.extui %9 : i1 to i32
    %c0_i32_9 = arith.constant 0 : i32
    %11 = arith.cmpi ne, %10, %c0_i32_9 : i32
    scf.if %11 {
      %c0_10 = arith.constant 0 : index
      %c0_11 = arith.constant 0 : index
      %12 = vector.load %arg9[%c0_10, %c0_11] : memref<16x32xf32, #tpu.memory_space<vmem>>, vector<16x32xf32>
      %c0_12 = arith.constant 0 : index
      %c0_13 = arith.constant 0 : index
      %13 = vector.load %arg4[%c0_12, %c0_13] : memref<1x32xf32, #tpu.memory_space<vmem>>, vector<1x32xf32>
      %14 = vector.broadcast %13 : vector<1x32xf32> to vector<16x32xf32>
      %15 = arith.addf %12, %14 : vector<16x32xf32>
      %c0_14 = arith.constant 0 : index
      %c0_15 = arith.constant 0 : index
      %16 = vector.load %arg5[%c0_14, %c0_15] : memref<16x32xbf16, #tpu.memory_space<vmem>>, vector<16x32xbf16>
      %17 = arith.extf %16 : vector<16x32xbf16> to vector<16x32xf32>
      %18 = arith.addf %15, %17 : vector<16x32xf32>
      %cst_16 = arith.constant dense<0.000000e+00> : vector<16xf32>
      %19 = vector.multi_reduction <add>, %18, %cst_16 [1] : vector<16x32xf32> to vector<16xf32>
      %20 = vector.shape_cast %19 : vector<16xf32> to vector<16x1xf32>
      %cst_17 = arith.constant 3.200000e+01 : f32
      %21 = vector.broadcast %cst_17 : f32 to vector<16x1xf32>
      %22 = arith.divf %20, %21 : vector<16x1xf32>
      %23 = vector.broadcast %22 : vector<16x1xf32> to vector<16x32xf32>
      %24 = arith.subf %18, %23 : vector<16x32xf32>
      %25 = arith.mulf %24, %24 : vector<16x32xf32>
      %cst_18 = arith.constant dense<0.000000e+00> : vector<16xf32>
      %26 = vector.multi_reduction <add>, %25, %cst_18 [1] : vector<16x32xf32> to vector<16xf32>
      %27 = vector.shape_cast %26 : vector<16xf32> to vector<16x1xf32>
      %cst_19 = arith.constant 3.200000e+01 : f32
      %28 = vector.broadcast %cst_19 : f32 to vector<16x1xf32>
      %29 = arith.divf %27, %28 : vector<16x1xf32>
      %30 = vector.broadcast %22 : vector<16x1xf32> to vector<16x32xf32>
      %31 = arith.subf %18, %30 : vector<16x32xf32>
      %cst_20 = arith.constant 9.99999974E-6 : f32
      %32 = vector.broadcast %cst_20 : f32 to vector<16x1xf32>
      %33 = arith.addf %29, %32 : vector<16x1xf32>
      %34 = math.rsqrt %33 : vector<16x1xf32>
      %35 = vector.broadcast %34 : vector<16x1xf32> to vector<16x32xf32>
      %36 = arith.mulf %31, %35 : vector<16x32xf32>
      %c0_21 = arith.constant 0 : index
      %c0_22 = arith.constant 0 : index
      %37 = vector.load %arg6[%c0_21, %c0_22] : memref<1x32xf32, #tpu.memory_space<vmem>>, vector<1x32xf32>
      %38 = vector.broadcast %37 : vector<1x32xf32> to vector<16x32xf32>
      %39 = arith.mulf %36, %38 : vector<16x32xf32>
      %c0_23 = arith.constant 0 : index
      %c0_24 = arith.constant 0 : index
      %40 = vector.load %arg7[%c0_23, %c0_24] : memref<1x32xf32, #tpu.memory_space<vmem>>, vector<1x32xf32>
      %41 = vector.broadcast %40 : vector<1x32xf32> to vector<16x32xf32>
      %42 = arith.addf %39, %41 : vector<16x32xf32>
      %43 = arith.truncf %42 : vector<16x32xf32> to vector<16x32xbf16>
      %c0_25 = arith.constant 0 : index
      %c0_26 = arith.constant 0 : index
      %44 = vector.load %arg8[%c0_25, %c0_26] : memref<16x32xbf16, #tpu.memory_space<vmem>>, vector<16x32xbf16>
      tpu.vector_store %arg8[%c0_25, %c0_26], %43 {strides = array<i32>} : memref<16x32xbf16, #tpu.memory_space<vmem>>, vector<16x32xbf16>,
    } else {
    }
    return
  }
  func.func @transform_0(%arg0: i32, %arg1: i32) -> (i32, i32) {
    %c0_i32 = arith.constant 0 : i32
    return %arg0, %arg1 : i32, i32
  }
  func.func @transform_1(%arg0: i32, %arg1: i32) -> (i32, i32) {
    %c0_i32 = arith.constant 0 : i32
    %c0_i32_0 = arith.constant 0 : i32
    return %arg1, %c0_i32 : i32, i32
  }
  func.func @transform_2(%arg0: i32, %arg1: i32) -> (i32, i32) {
    %c0_i32 = arith.constant 0 : i32
    %c0_i32_0 = arith.constant 0 : i32
    %c0_i32_1 = arith.constant 0 : i32
    return %c0_i32, %c0_i32_0 : i32, i32
  }
  func.func @transform_3(%arg0: i32, %arg1: i32) -> (i32, i32) {
    %c0_i32 = arith.constant 0 : i32
    %c0_i32_0 = arith.constant 0 : i32
    return %arg0, %c0_i32 : i32, i32
  }
  func.func @transform_4(%arg0: i32, %arg1: i32) -> (i32, i32) {
    %c0_i32 = arith.constant 0 : i32
    %c0_i32_0 = arith.constant 0 : i32
    %c0_i32_1 = arith.constant 0 : i32
    return %c0_i32, %c0_i32_0 : i32, i32
  }
  func.func @transform_5(%arg0: i32, %arg1: i32) -> (i32, i32) {
    %c0_i32 = arith.constant 0 : i32
    %c0_i32_0 = arith.constant 0 : i32
    %c0_i32_1 = arith.constant 0 : i32
    return %c0_i32, %c0_i32_0 : i32, i32
  }
  func.func @transform_6(%arg0: i32, %arg1: i32) -> (i32, i32) {
    %c0_i32 = arith.constant 0 : i32
    %c0_i32_0 = arith.constant 0 : i32
    return %arg0, %c0_i32 : i32, i32
  }
}

module attributes {stable_mosaic.version = 11 : i64} {
  func.func @_ln_matmul_kernel(%arg0: i32, %arg1: i32, %arg2: memref<16x32xbf16, #tpu.memory_space<vmem>>, %arg3: memref<1x32xf32, #tpu.memory_space<vmem>>, %arg4: memref<1x32xf32, #tpu.memory_space<vmem>>, %arg5: memref<32x96xbf16, #tpu.memory_space<vmem>>, %arg6: memref<1x96xf32, #tpu.memory_space<vmem>>, %arg7: memref<16x96xbf16, #tpu.memory_space<vmem>>, %arg8: memref<16x32xbf16, #tpu.memory_space<vmem>>) attributes {dimension_semantics = [#tpu.dimension_semantics<parallel>, #tpu.dimension_semantics<arbitrary>], iteration_bounds = array<i64: 1, 1>, scalar_prefetch = 0 : i64, scratch_operands = 1 : i64, tpu.core_type = #tpu.core_type<tc>, window_params = [{transform_indices = @transform_0, window_bounds = array<i64: 16, 32>}, {pipeline_mode = #tpu.pipeline_mode<synchronous>, transform_indices = @transform_1, window_bounds = array<i64: 1, 32>}, {pipeline_mode = #tpu.pipeline_mode<synchronous>, transform_indices = @transform_2, window_bounds = array<i64: 1, 32>}, {transform_indices = @transform_3, window_bounds = array<i64: 32, 96>}, {transform_indices = @transform_4, window_bounds = array<i64: 1, 96>}, {transform_indices = @transform_5, window_bounds = array<i64: 16, 96>}]} {
    %c0_i32 = arith.constant 0 : i32
    %0 = arith.cmpi eq, %arg1, %c0_i32 : i32
    %1 = arith.extui %0 : i1 to i32
    %c0_i32_0 = arith.constant 0 : i32
    %2 = arith.cmpi ne, %1, %c0_i32_0 : i32
    scf.if %2 {
      %c0_8 = arith.constant 0 : index
      %c0_9 = arith.constant 0 : index
      %11 = vector.load %arg2[%c0_8, %c0_9] : memref<16x32xbf16, #tpu.memory_space<vmem>>, vector<16x32xbf16>
      %12 = arith.extf %11 : vector<16x32xbf16> to vector<16x32xf32>
      %cst_10 = arith.constant dense<0.000000e+00> : vector<16xf32>
      %13 = vector.multi_reduction <add>, %12, %cst_10 [1] : vector<16x32xf32> to vector<16xf32>
      %14 = vector.shape_cast %13 : vector<16xf32> to vector<16x1xf32>
      %cst_11 = arith.constant 3.200000e+01 : f32
      %15 = vector.broadcast %cst_11 : f32 to vector<16x1xf32>
      %16 = arith.divf %14, %15 : vector<16x1xf32>
      %17 = vector.broadcast %16 : vector<16x1xf32> to vector<16x32xf32>
      %18 = arith.subf %12, %17 : vector<16x32xf32>
      %19 = arith.mulf %18, %18 : vector<16x32xf32>
      %cst_12 = arith.constant dense<0.000000e+00> : vector<16xf32>
      %20 = vector.multi_reduction <add>, %19, %cst_12 [1] : vector<16x32xf32> to vector<16xf32>
      %21 = vector.shape_cast %20 : vector<16xf32> to vector<16x1xf32>
      %cst_13 = arith.constant 3.200000e+01 : f32
      %22 = vector.broadcast %cst_13 : f32 to vector<16x1xf32>
      %23 = arith.divf %21, %22 : vector<16x1xf32>
      %24 = vector.broadcast %16 : vector<16x1xf32> to vector<16x32xf32>
      %25 = arith.subf %12, %24 : vector<16x32xf32>
      %cst_14 = arith.constant 9.99999974E-6 : f32
      %26 = vector.broadcast %cst_14 : f32 to vector<16x1xf32>
      %27 = arith.addf %23, %26 : vector<16x1xf32>
      %28 = math.rsqrt %27 : vector<16x1xf32>
      %29 = vector.broadcast %28 : vector<16x1xf32> to vector<16x32xf32>
      %30 = arith.mulf %25, %29 : vector<16x32xf32>
      %c0_15 = arith.constant 0 : index
      %c0_16 = arith.constant 0 : index
      %31 = vector.load %arg3[%c0_15, %c0_16] : memref<1x32xf32, #tpu.memory_space<vmem>>, vector<1x32xf32>
      %32 = vector.broadcast %31 : vector<1x32xf32> to vector<16x32xf32>
      %33 = arith.mulf %30, %32 : vector<16x32xf32>
      %c0_17 = arith.constant 0 : index
      %c0_18 = arith.constant 0 : index
      %34 = vector.load %arg4[%c0_17, %c0_18] : memref<1x32xf32, #tpu.memory_space<vmem>>, vector<1x32xf32>
      %35 = vector.broadcast %34 : vector<1x32xf32> to vector<16x32xf32>
      %36 = arith.addf %33, %35 : vector<16x32xf32>
      %37 = arith.truncf %36 : vector<16x32xf32> to vector<16x32xbf16>
      %c0_19 = arith.constant 0 : index
      %c0_20 = arith.constant 0 : index
      %38 = vector.load %arg8[%c0_19, %c0_20] : memref<16x32xbf16, #tpu.memory_space<vmem>>, vector<16x32xbf16>
      tpu.vector_store %arg8[%c0_19, %c0_20], %37 {strides = array<i32>} : memref<16x32xbf16, #tpu.memory_space<vmem>>, vector<16x32xbf16>,
    } else {
    }
    %c0 = arith.constant 0 : index
    %c0_1 = arith.constant 0 : index
    %3 = vector.load %arg8[%c0, %c0_1] : memref<16x32xbf16, #tpu.memory_space<vmem>>, vector<16x32xbf16>
    %c0_2 = arith.constant 0 : index
    %c0_3 = arith.constant 0 : index
    %4 = vector.load %arg5[%c0_2, %c0_3] : memref<32x96xbf16, #tpu.memory_space<vmem>>, vector<32x96xbf16>
    %cst = arith.constant dense<0.000000e+00> : vector<16x96xf32>
    %5 = tpu.matmul %3, %4, %cst {dimension_numbers = #tpu.dot_dimension_numbers<[1], [0], [0], [1], [0, 0, 1, 1], [], []>} : vector<16x32xbf16>, vector<32x96xbf16>, vector<16x96xf32> -> vector<16x96xf32>
    %c0_4 = arith.constant 0 : index
    %c0_5 = arith.constant 0 : index
    %6 = vector.load %arg6[%c0_4, %c0_5] : memref<1x96xf32, #tpu.memory_space<vmem>>, vector<1x96xf32>
    %7 = vector.broadcast %6 : vector<1x96xf32> to vector<16x96xf32>
    %8 = arith.addf %5, %7 : vector<16x96xf32>
    %9 = arith.truncf %8 : vector<16x96xf32> to vector<16x96xbf16>
    %c0_6 = arith.constant 0 : index
    %c0_7 = arith.constant 0 : index
    %10 = vector.load %arg7[%c0_6, %c0_7] : memref<16x96xbf16, #tpu.memory_space<vmem>>, vector<16x96xbf16>
    tpu.vector_store %arg7[%c0_6, %c0_7], %9 {strides = array<i32>} : memref<16x96xbf16, #tpu.memory_space<vmem>>, vector<16x96xbf16>,
    return
  }
  func.func @transform_0(%arg0: i32, %arg1: i32) -> (i32, i32) {
    %c0_i32 = arith.constant 0 : i32
    %c0_i32_0 = arith.constant 0 : i32
    return %arg0, %c0_i32 : i32, i32
  }
  func.func @transform_1(%arg0: i32, %arg1: i32) -> (i32, i32) {
    %c0_i32 = arith.constant 0 : i32
    %c0_i32_0 = arith.constant 0 : i32
    %c0_i32_1 = arith.constant 0 : i32
    return %c0_i32, %c0_i32_0 : i32, i32
  }
  func.func @transform_2(%arg0: i32, %arg1: i32) -> (i32, i32) {
    %c0_i32 = arith.constant 0 : i32
    %c0_i32_0 = arith.constant 0 : i32
    %c0_i32_1 = arith.constant 0 : i32
    return %c0_i32, %c0_i32_0 : i32, i32
  }
  func.func @transform_3(%arg0: i32, %arg1: i32) -> (i32, i32) {
    %c0_i32 = arith.constant 0 : i32
    %c0_i32_0 = arith.constant 0 : i32
    return %c0_i32, %arg1 : i32, i32
  }
  func.func @transform_4(%arg0: i32, %arg1: i32) -> (i32, i32) {
    %c0_i32 = arith.constant 0 : i32
    %c0_i32_0 = arith.constant 0 : i32
    return %c0_i32, %arg1 : i32, i32
  }
  func.func @transform_5(%arg0: i32, %arg1: i32) -> (i32, i32) {
    %c0_i32 = arith.constant 0 : i32
    return %arg0, %arg1 : i32, i32
  }
}

module attributes {stable_mosaic.version = 11 : i64} {
  func.func @_ln_matmul_kernel(%arg0: i32, %arg1: i32, %arg2: memref<16x32xbf16, #tpu.memory_space<vmem>>, %arg3: memref<1x32xf32, #tpu.memory_space<vmem>>, %arg4: memref<1x32xf32, #tpu.memory_space<vmem>>, %arg5: memref<32x32xbf16, #tpu.memory_space<vmem>>, %arg6: memref<1x32xf32, #tpu.memory_space<vmem>>, %arg7: memref<16x32xbf16, #tpu.memory_space<vmem>>, %arg8: memref<16x32xbf16, #tpu.memory_space<vmem>>) attributes {dimension_semantics = [#tpu.dimension_semantics<parallel>, #tpu.dimension_semantics<arbitrary>], iteration_bounds = array<i64: 1, 1>, scalar_prefetch = 0 : i64, scratch_operands = 1 : i64, tpu.core_type = #tpu.core_type<tc>, window_params = [{transform_indices = @transform_0, window_bounds = array<i64: 16, 32>}, {pipeline_mode = #tpu.pipeline_mode<synchronous>, transform_indices = @transform_1, window_bounds = array<i64: 1, 32>}, {pipeline_mode = #tpu.pipeline_mode<synchronous>, transform_indices = @transform_2, window_bounds = array<i64: 1, 32>}, {transform_indices = @transform_3, window_bounds = array<i64: 32, 32>}, {transform_indices = @transform_4, window_bounds = array<i64: 1, 32>}, {transform_indices = @transform_5, window_bounds = array<i64: 16, 32>}]} {
    %c0_i32 = arith.constant 0 : i32
    %0 = arith.cmpi eq, %arg1, %c0_i32 : i32
    %1 = arith.extui %0 : i1 to i32
    %c0_i32_0 = arith.constant 0 : i32
    %2 = arith.cmpi ne, %1, %c0_i32_0 : i32
    scf.if %2 {
      %c0_8 = arith.constant 0 : index
      %c0_9 = arith.constant 0 : index
      %11 = vector.load %arg2[%c0_8, %c0_9] : memref<16x32xbf16, #tpu.memory_space<vmem>>, vector<16x32xbf16>
      %12 = arith.extf %11 : vector<16x32xbf16> to vector<16x32xf32>
      %cst_10 = arith.constant dense<0.000000e+00> : vector<16xf32>
      %13 = vector.multi_reduction <add>, %12, %cst_10 [1] : vector<16x32xf32> to vector<16xf32>
      %14 = vector.shape_cast %13 : vector<16xf32> to vector<16x1xf32>
      %cst_11 = arith.constant 3.200000e+01 : f32
      %15 = vector.broadcast %cst_11 : f32 to vector<16x1xf32>
      %16 = arith.divf %14, %15 : vector<16x1xf32>
      %17 = vector.broadcast %16 : vector<16x1xf32> to vector<16x32xf32>
      %18 = arith.subf %12, %17 : vector<16x32xf32>
      %19 = arith.mulf %18, %18 : vector<16x32xf32>
      %cst_12 = arith.constant dense<0.000000e+00> : vector<16xf32>
      %20 = vector.multi_reduction <add>, %19, %cst_12 [1] : vector<16x32xf32> to vector<16xf32>
      %21 = vector.shape_cast %20 : vector<16xf32> to vector<16x1xf32>
      %cst_13 = arith.constant 3.200000e+01 : f32
      %22 = vector.broadcast %cst_13 : f32 to vector<16x1xf32>
      %23 = arith.divf %21, %22 : vector<16x1xf32>
      %24 = vector.broadcast %16 : vector<16x1xf32> to vector<16x32xf32>
      %25 = arith.subf %12, %24 : vector<16x32xf32>
      %cst_14 = arith.constant 9.99999974E-6 : f32
      %26 = vector.broadcast %cst_14 : f32 to vector<16x1xf32>
      %27 = arith.addf %23, %26 : vector<16x1xf32>
      %28 = math.rsqrt %27 : vector<16x1xf32>
      %29 = vector.broadcast %28 : vector<16x1xf32> to vector<16x32xf32>
      %30 = arith.mulf %25, %29 : vector<16x32xf32>
      %c0_15 = arith.constant 0 : index
      %c0_16 = arith.constant 0 : index
      %31 = vector.load %arg3[%c0_15, %c0_16] : memref<1x32xf32, #tpu.memory_space<vmem>>, vector<1x32xf32>
      %32 = vector.broadcast %31 : vector<1x32xf32> to vector<16x32xf32>
      %33 = arith.mulf %30, %32 : vector<16x32xf32>
      %c0_17 = arith.constant 0 : index
      %c0_18 = arith.constant 0 : index
      %34 = vector.load %arg4[%c0_17, %c0_18] : memref<1x32xf32, #tpu.memory_space<vmem>>, vector<1x32xf32>
      %35 = vector.broadcast %34 : vector<1x32xf32> to vector<16x32xf32>
      %36 = arith.addf %33, %35 : vector<16x32xf32>
      %37 = arith.truncf %36 : vector<16x32xf32> to vector<16x32xbf16>
      %c0_19 = arith.constant 0 : index
      %c0_20 = arith.constant 0 : index
      %38 = vector.load %arg8[%c0_19, %c0_20] : memref<16x32xbf16, #tpu.memory_space<vmem>>, vector<16x32xbf16>
      tpu.vector_store %arg8[%c0_19, %c0_20], %37 {strides = array<i32>} : memref<16x32xbf16, #tpu.memory_space<vmem>>, vector<16x32xbf16>,
    } else {
    }
    %c0 = arith.constant 0 : index
    %c0_1 = arith.constant 0 : index
    %3 = vector.load %arg8[%c0, %c0_1] : memref<16x32xbf16, #tpu.memory_space<vmem>>, vector<16x32xbf16>
    %c0_2 = arith.constant 0 : index
    %c0_3 = arith.constant 0 : index
    %4 = vector.load %arg5[%c0_2, %c0_3] : memref<32x32xbf16, #tpu.memory_space<vmem>>, vector<32x32xbf16>
    %cst = arith.constant dense<0.000000e+00> : vector<16x32xf32>
    %5 = tpu.matmul %3, %4, %cst {dimension_numbers = #tpu.dot_dimension_numbers<[1], [0], [0], [1], [0, 0, 1, 1], [], []>} : vector<16x32xbf16>, vector<32x32xbf16>, vector<16x32xf32> -> vector<16x32xf32>
    %c0_4 = arith.constant 0 : index
    %c0_5 = arith.constant 0 : index
    %6 = vector.load %arg6[%c0_4, %c0_5] : memref<1x32xf32, #tpu.memory_space<vmem>>, vector<1x32xf32>
    %7 = vector.broadcast %6 : vector<1x32xf32> to vector<16x32xf32>
    %8 = arith.addf %5, %7 : vector<16x32xf32>
    %9 = arith.truncf %8 : vector<16x32xf32> to vector<16x32xbf16>
    %c0_6 = arith.constant 0 : index
    %c0_7 = arith.constant 0 : index
    %10 = vector.load %arg7[%c0_6, %c0_7] : memref<16x32xbf16, #tpu.memory_space<vmem>>, vector<16x32xbf16>
    tpu.vector_store %arg7[%c0_6, %c0_7], %9 {strides = array<i32>} : memref<16x32xbf16, #tpu.memory_space<vmem>>, vector<16x32xbf16>,
    return
  }
  func.func @transform_0(%arg0: i32, %arg1: i32) -> (i32, i32) {
    %c0_i32 = arith.constant 0 : i32
    %c0_i32_0 = arith.constant 0 : i32
    return %arg0, %c0_i32 : i32, i32
  }
  func.func @transform_1(%arg0: i32, %arg1: i32) -> (i32, i32) {
    %c0_i32 = arith.constant 0 : i32
    %c0_i32_0 = arith.constant 0 : i32
    %c0_i32_1 = arith.constant 0 : i32
    return %c0_i32, %c0_i32_0 : i32, i32
  }
  func.func @transform_2(%arg0: i32, %arg1: i32) -> (i32, i32) {
    %c0_i32 = arith.constant 0 : i32
    %c0_i32_0 = arith.constant 0 : i32
    %c0_i32_1 = arith.constant 0 : i32
    return %c0_i32, %c0_i32_0 : i32, i32
  }
  func.func @transform_3(%arg0: i32, %arg1: i32) -> (i32, i32) {
    %c0_i32 = arith.constant 0 : i32
    %c0_i32_0 = arith.constant 0 : i32
    return %c0_i32, %arg1 : i32, i32
  }
  func.func @transform_4(%arg0: i32, %arg1: i32) -> (i32, i32) {
    %c0_i32 = arith.constant 0 : i32
    %c0_i32_0 = arith.constant 0 : i32
    return %c0_i32, %arg1 : i32, i32
  }
  func.func @transform_5(%arg0: i32, %arg1: i32) -> (i32, i32) {
    %c0_i32 = arith.constant 0 : i32
    return %arg0, %arg1 : i32, i32
  }
}

module attributes {stable_mosaic.version = 11 : i64} {
  func.func @_self_attn_kernel(%arg0: i32, %arg1: memref<1x8x96xbf16, #tpu.memory_space<vmem>>, %arg2: memref<1x1x8xf32, #tpu.memory_space<vmem>>, %arg3: memref<1x8x32xbf16, #tpu.memory_space<vmem>>) attributes {dimension_semantics = [#tpu.dimension_semantics<parallel>], iteration_bounds = array<i64: 2>, scalar_prefetch = 0 : i64, scratch_operands = 0 : i64, tpu.core_type = #tpu.core_type<tc>, window_params = [{transform_indices = @transform_0, window_bounds = array<i64: 1, 8, 96>}, {transform_indices = @transform_1, window_bounds = array<i64: 1, 1, 8>}, {transform_indices = @transform_2, window_bounds = array<i64: 1, 8, 32>}]} {
    %c0 = arith.constant 0 : index
    %c0_0 = arith.constant 0 : index
    %c0_1 = arith.constant 0 : index
    %0 = vector.load %arg1[%c0, %c0_0, %c0_1] : memref<1x8x96xbf16, #tpu.memory_space<vmem>>, vector<1x8x96xbf16>
    %1 = vector.shape_cast %0 : vector<1x8x96xbf16> to vector<8x96xbf16>
    %c0_2 = arith.constant 0 : index
    %c0_3 = arith.constant 0 : index
    %c0_4 = arith.constant 0 : index
    %2 = vector.load %arg2[%c0_2, %c0_3, %c0_4] : memref<1x1x8xf32, #tpu.memory_space<vmem>>, vector<1x1x8xf32>
    %3 = vector.shape_cast %2 : vector<1x1x8xf32> to vector<1x8xf32>
    %cst = arith.constant 0.000000e+00 : f32
    %4 = vector.broadcast %cst : f32 to vector<1x8xf32>
    %5 = arith.cmpf one, %3, %4 : vector<1x8xf32>
    %6 = tpu.iota {dimensions = array<i32: 0>} : vector<8x8xi32>
    %7 = tpu.iota {dimensions = array<i32: 1>} : vector<8x8xi32>
    %8 = arith.cmpi sle, %7, %6 : vector<8x8xi32>
    %9 = vector.broadcast %5 : vector<1x8xi1> to vector<8x8xi1>
    %10 = arith.andi %9, %8 : vector<8x8xi1>
    %11 = vector.extract_strided_slice %1 {offsets = [0, 0], sizes = [8, 32], strides = [1, 1]} : vector<8x96xbf16> to vector<8x32xbf16>
    %12 = vector.extract_strided_slice %1 {offsets = [0, 32], sizes = [8, 32], strides = [1, 1]} : vector<8x96xbf16> to vector<8x32xbf16>
    %13 = vector.extract_strided_slice %1 {offsets = [0, 64], sizes = [8, 32], strides = [1, 1]} : vector<8x96xbf16> to vector<8x32xbf16>
    %14 = vector.extract_strided_slice %11 {offsets = [0, 0], sizes = [8, 16], strides = [1, 1]} : vector<8x32xbf16> to vector<8x16xbf16>
    %15 = vector.extract_strided_slice %12 {offsets = [0, 0], sizes = [8, 16], strides = [1, 1]} : vector<8x32xbf16> to vector<8x16xbf16>
    %16 = vector.extract_strided_slice %13 {offsets = [0, 0], sizes = [8, 16], strides = [1, 1]} : vector<8x32xbf16> to vector<8x16xbf16>
    %cst_5 = arith.constant dense<0.000000e+00> : vector<8x8xf32>
    %17 = tpu.matmul %14, %15, %cst_5 {dimension_numbers = #tpu.dot_dimension_numbers<[1], [1], [0], [0], [0, 0, 1, 0], [], []>} : vector<8x16xbf16>, vector<8x16xbf16>, vector<8x8xf32> -> vector<8x8xf32>
    %cst_6 = arith.constant -1.000000e+20 : f32
    %18 = vector.broadcast %cst_6 : f32 to vector<8x8xf32>
    %19 = arith.select %10, %17, %18 : vector<8x8xi1>, vector<8x8xf32>
    %cst_7 = arith.constant 2.500000e-01 : f32
    %20 = vector.broadcast %cst_7 : f32 to vector<8x8xf32>
    %21 = arith.mulf %19, %20 : vector<8x8xf32>
    %cst_8 = arith.constant dense<0xFF800000> : vector<8xf32>
    %22 = vector.multi_reduction <maximumf>, %21, %cst_8 [1] : vector<8x8xf32> to vector<8xf32>
    %23 = vector.shape_cast %22 : vector<8xf32> to vector<8x1xf32>
    %24 = vector.broadcast %23 : vector<8x1xf32> to vector<8x8xf32>
    %25 = arith.subf %21, %24 : vector<8x8xf32>
    %26 = math.exp %25 : vector<8x8xf32>
    %cst_9 = arith.constant dense<0.000000e+00> : vector<8xf32>
    %27 = vector.multi_reduction <add>, %26, %cst_9 [1] : vector<8x8xf32> to vector<8xf32>
    %28 = vector.shape_cast %27 : vector<8xf32> to vector<8x1xf32>
    %29 = tpu.reciprocal %28 {approx = true} : vector<8x1xf32> -> vector<8x1xf32>
    %30 = vector.broadcast %29 : vector<8x1xf32> to vector<8x8xf32>
    %31 = arith.mulf %26, %30 : vector<8x8xf32>
    %32 = arith.truncf %31 : vector<8x8xf32> to vector<8x8xbf16>
    %cst_10 = arith.constant dense<0.000000e+00> : vector<8x16xf32>
    %33 = tpu.matmul %32, %16, %cst_10 {dimension_numbers = #tpu.dot_dimension_numbers<[1], [0], [0], [1], [0, 0, 1, 1], [], []>} : vector<8x8xbf16>, vector<8x16xbf16>, vector<8x16xf32> -> vector<8x16xf32>
    %34 = vector.extract_strided_slice %11 {offsets = [0, 16], sizes = [8, 16], strides = [1, 1]} : vector<8x32xbf16> to vector<8x16xbf16>
    %35 = vector.extract_strided_slice %12 {offsets = [0, 16], sizes = [8, 16], strides = [1, 1]} : vector<8x32xbf16> to vector<8x16xbf16>
    %36 = vector.extract_strided_slice %13 {offsets = [0, 16], sizes = [8, 16], strides = [1, 1]} : vector<8x32xbf16> to vector<8x16xbf16>
    %cst_11 = arith.constant dense<0.000000e+00> : vector<8x8xf32>
    %37 = tpu.matmul %34, %35, %cst_11 {dimension_numbers = #tpu.dot_dimension_numbers<[1], [1], [0], [0], [0, 0, 1, 0], [], []>} : vector<8x16xbf16>, vector<8x16xbf16>, vector<8x8xf32> -> vector<8x8xf32>
    %cst_12 = arith.constant -1.000000e+20 : f32
    %38 = vector.broadcast %cst_12 : f32 to vector<8x8xf32>
    %39 = arith.select %10, %37, %38 : vector<8x8xi1>, vector<8x8xf32>
    %cst_13 = arith.constant 2.500000e-01 : f32
    %40 = vector.broadcast %cst_13 : f32 to vector<8x8xf32>
    %41 = arith.mulf %39, %40 : vector<8x8xf32>
    %cst_14 = arith.constant dense<0xFF800000> : vector<8xf32>
    %42 = vector.multi_reduction <maximumf>, %41, %cst_14 [1] : vector<8x8xf32> to vector<8xf32>
    %43 = vector.shape_cast %42 : vector<8xf32> to vector<8x1xf32>
    %44 = vector.broadcast %43 : vector<8x1xf32> to vector<8x8xf32>
    %45 = arith.subf %41, %44 : vector<8x8xf32>
    %46 = math.exp %45 : vector<8x8xf32>
    %cst_15 = arith.constant dense<0.000000e+00> : vector<8xf32>
    %47 = vector.multi_reduction <add>, %46, %cst_15 [1] : vector<8x8xf32> to vector<8xf32>
    %48 = vector.shape_cast %47 : vector<8xf32> to vector<8x1xf32>
    %49 = tpu.reciprocal %48 {approx = true} : vector<8x1xf32> -> vector<8x1xf32>
    %50 = vector.broadcast %49 : vector<8x1xf32> to vector<8x8xf32>
    %51 = arith.mulf %46, %50 : vector<8x8xf32>
    %52 = arith.truncf %51 : vector<8x8xf32> to vector<8x8xbf16>
    %cst_16 = arith.constant dense<0.000000e+00> : vector<8x16xf32>
    %53 = tpu.matmul %52, %36, %cst_16 {dimension_numbers = #tpu.dot_dimension_numbers<[1], [0], [0], [1], [0, 0, 1, 1], [], []>} : vector<8x8xbf16>, vector<8x16xbf16>, vector<8x16xf32> -> vector<8x16xf32>
    %54 = tpu.concatenate %33, %53 in 1 : vector<8x16xf32>, vector<8x16xf32> -> vector<8x32xf32>
    %55 = arith.truncf %54 : vector<8x32xf32> to vector<8x32xbf16>
    %c0_17 = arith.constant 0 : index
    %c0_18 = arith.constant 0 : index
    %c0_19 = arith.constant 0 : index
    %56 = vector.load %arg3[%c0_17, %c0_18, %c0_19] : memref<1x8x32xbf16, #tpu.memory_space<vmem>>, vector<1x8x32xbf16>
    %57 = vector.shape_cast %56 : vector<1x8x32xbf16> to vector<8x32xbf16>
    %58 = vector.shape_cast %55 : vector<8x32xbf16> to vector<1x8x32xbf16>
    tpu.vector_store %arg3[%c0_17, %c0_18, %c0_19], %58 {strides = array<i32>} : memref<1x8x32xbf16, #tpu.memory_space<vmem>>, vector<1x8x32xbf16>,
    return
  }
  func.func @transform_0(%arg0: i32) -> (i32, i32, i32) {
    %c0_i32 = arith.constant 0 : i32
    %c0_i32_0 = arith.constant 0 : i32
    %c0_i32_1 = arith.constant 0 : i32
    return %arg0, %c0_i32, %c0_i32_0 : i32, i32, i32
  }
  func.func @transform_1(%arg0: i32) -> (i32, i32, i32) {
    %c0_i32 = arith.constant 0 : i32
    %c0_i32_0 = arith.constant 0 : i32
    %c0_i32_1 = arith.constant 0 : i32
    return %arg0, %c0_i32, %c0_i32_0 : i32, i32, i32
  }
  func.func @transform_2(%arg0: i32) -> (i32, i32, i32) {
    %c0_i32 = arith.constant 0 : i32
    %c0_i32_0 = arith.constant 0 : i32
    %c0_i32_1 = arith.constant 0 : i32
    return %arg0, %c0_i32, %c0_i32_0 : i32, i32, i32
  }
}

module attributes {stable_mosaic.version = 11 : i64} {
  func.func @_self_attn_kernel(%arg0: i32, %arg1: memref<1x8x96xbf16, #tpu.memory_space<vmem>>, %arg2: memref<1x1x8xf32, #tpu.memory_space<vmem>>, %arg3: memref<1x8x32xbf16, #tpu.memory_space<vmem>>) attributes {dimension_semantics = [#tpu.dimension_semantics<parallel>], iteration_bounds = array<i64: 2>, scalar_prefetch = 0 : i64, scratch_operands = 0 : i64, tpu.core_type = #tpu.core_type<tc>, window_params = [{transform_indices = @transform_0, window_bounds = array<i64: 1, 8, 96>}, {transform_indices = @transform_1, window_bounds = array<i64: 1, 1, 8>}, {transform_indices = @transform_2, window_bounds = array<i64: 1, 8, 32>}]} {
    %c0 = arith.constant 0 : index
    %c0_0 = arith.constant 0 : index
    %c0_1 = arith.constant 0 : index
    %0 = vector.load %arg1[%c0, %c0_0, %c0_1] : memref<1x8x96xbf16, #tpu.memory_space<vmem>>, vector<1x8x96xbf16>
    %1 = vector.shape_cast %0 : vector<1x8x96xbf16> to vector<8x96xbf16>
    %c0_2 = arith.constant 0 : index
    %c0_3 = arith.constant 0 : index
    %c0_4 = arith.constant 0 : index
    %2 = vector.load %arg2[%c0_2, %c0_3, %c0_4] : memref<1x1x8xf32, #tpu.memory_space<vmem>>, vector<1x1x8xf32>
    %3 = vector.shape_cast %2 : vector<1x1x8xf32> to vector<1x8xf32>
    %cst = arith.constant 0.000000e+00 : f32
    %4 = vector.broadcast %cst : f32 to vector<1x8xf32>
    %5 = arith.cmpf one, %3, %4 : vector<1x8xf32>
    %6 = vector.extract_strided_slice %1 {offsets = [0, 0], sizes = [8, 32], strides = [1, 1]} : vector<8x96xbf16> to vector<8x32xbf16>
    %7 = vector.extract_strided_slice %1 {offsets = [0, 32], sizes = [8, 32], strides = [1, 1]} : vector<8x96xbf16> to vector<8x32xbf16>
    %8 = vector.extract_strided_slice %1 {offsets = [0, 64], sizes = [8, 32], strides = [1, 1]} : vector<8x96xbf16> to vector<8x32xbf16>
    %9 = vector.extract_strided_slice %6 {offsets = [0, 0], sizes = [8, 16], strides = [1, 1]} : vector<8x32xbf16> to vector<8x16xbf16>
    %10 = vector.extract_strided_slice %7 {offsets = [0, 0], sizes = [8, 16], strides = [1, 1]} : vector<8x32xbf16> to vector<8x16xbf16>
    %11 = vector.extract_strided_slice %8 {offsets = [0, 0], sizes = [8, 16], strides = [1, 1]} : vector<8x32xbf16> to vector<8x16xbf16>
    %cst_5 = arith.constant dense<0.000000e+00> : vector<8x8xf32>
    %12 = tpu.matmul %9, %10, %cst_5 {dimension_numbers = #tpu.dot_dimension_numbers<[1], [1], [0], [0], [0, 0, 1, 0], [], []>} : vector<8x16xbf16>, vector<8x16xbf16>, vector<8x8xf32> -> vector<8x8xf32>
    %cst_6 = arith.constant -1.000000e+20 : f32
    %13 = vector.shape_cast %5 : vector<1x8xi1> to vector<1x8xi1>
    %14 = vector.broadcast %13 : vector<1x8xi1> to vector<8x8xi1>
    %15 = vector.broadcast %cst_6 : f32 to vector<8x8xf32>
    %16 = arith.select %14, %12, %15 : vector<8x8xi1>, vector<8x8xf32>
    %cst_7 = arith.constant 2.500000e-01 : f32
    %17 = vector.broadcast %cst_7 : f32 to vector<8x8xf32>
    %18 = arith.mulf %16, %17 : vector<8x8xf32>
    %cst_8 = arith.constant dense<0xFF800000> : vector<8xf32>
    %19 = vector.multi_reduction <maximumf>, %18, %cst_8 [1] : vector<8x8xf32> to vector<8xf32>
    %20 = vector.shape_cast %19 : vector<8xf32> to vector<8x1xf32>
    %21 = vector.broadcast %20 : vector<8x1xf32> to vector<8x8xf32>
    %22 = arith.subf %18, %21 : vector<8x8xf32>
    %23 = math.exp %22 : vector<8x8xf32>
    %cst_9 = arith.constant dense<0.000000e+00> : vector<8xf32>
    %24 = vector.multi_reduction <add>, %23, %cst_9 [1] : vector<8x8xf32> to vector<8xf32>
    %25 = vector.shape_cast %24 : vector<8xf32> to vector<8x1xf32>
    %26 = tpu.reciprocal %25 {approx = true} : vector<8x1xf32> -> vector<8x1xf32>
    %27 = vector.broadcast %26 : vector<8x1xf32> to vector<8x8xf32>
    %28 = arith.mulf %23, %27 : vector<8x8xf32>
    %29 = arith.truncf %28 : vector<8x8xf32> to vector<8x8xbf16>
    %cst_10 = arith.constant dense<0.000000e+00> : vector<8x16xf32>
    %30 = tpu.matmul %29, %11, %cst_10 {dimension_numbers = #tpu.dot_dimension_numbers<[1], [0], [0], [1], [0, 0, 1, 1], [], []>} : vector<8x8xbf16>, vector<8x16xbf16>, vector<8x16xf32> -> vector<8x16xf32>
    %31 = vector.extract_strided_slice %6 {offsets = [0, 16], sizes = [8, 16], strides = [1, 1]} : vector<8x32xbf16> to vector<8x16xbf16>
    %32 = vector.extract_strided_slice %7 {offsets = [0, 16], sizes = [8, 16], strides = [1, 1]} : vector<8x32xbf16> to vector<8x16xbf16>
    %33 = vector.extract_strided_slice %8 {offsets = [0, 16], sizes = [8, 16], strides = [1, 1]} : vector<8x32xbf16> to vector<8x16xbf16>
    %cst_11 = arith.constant dense<0.000000e+00> : vector<8x8xf32>
    %34 = tpu.matmul %31, %32, %cst_11 {dimension_numbers = #tpu.dot_dimension_numbers<[1], [1], [0], [0], [0, 0, 1, 0], [], []>} : vector<8x16xbf16>, vector<8x16xbf16>, vector<8x8xf32> -> vector<8x8xf32>
    %cst_12 = arith.constant -1.000000e+20 : f32
    %35 = vector.shape_cast %5 : vector<1x8xi1> to vector<1x8xi1>
    %36 = vector.broadcast %35 : vector<1x8xi1> to vector<8x8xi1>
    %37 = vector.broadcast %cst_12 : f32 to vector<8x8xf32>
    %38 = arith.select %36, %34, %37 : vector<8x8xi1>, vector<8x8xf32>
    %cst_13 = arith.constant 2.500000e-01 : f32
    %39 = vector.broadcast %cst_13 : f32 to vector<8x8xf32>
    %40 = arith.mulf %38, %39 : vector<8x8xf32>
    %cst_14 = arith.constant dense<0xFF800000> : vector<8xf32>
    %41 = vector.multi_reduction <maximumf>, %40, %cst_14 [1] : vector<8x8xf32> to vector<8xf32>
    %42 = vector.shape_cast %41 : vector<8xf32> to vector<8x1xf32>
    %43 = vector.broadcast %42 : vector<8x1xf32> to vector<8x8xf32>
    %44 = arith.subf %40, %43 : vector<8x8xf32>
    %45 = math.exp %44 : vector<8x8xf32>
    %cst_15 = arith.constant dense<0.000000e+00> : vector<8xf32>
    %46 = vector.multi_reduction <add>, %45, %cst_15 [1] : vector<8x8xf32> to vector<8xf32>
    %47 = vector.shape_cast %46 : vector<8xf32> to vector<8x1xf32>
    %48 = tpu.reciprocal %47 {approx = true} : vector<8x1xf32> -> vector<8x1xf32>
    %49 = vector.broadcast %48 : vector<8x1xf32> to vector<8x8xf32>
    %50 = arith.mulf %45, %49 : vector<8x8xf32>
    %51 = arith.truncf %50 : vector<8x8xf32> to vector<8x8xbf16>
    %cst_16 = arith.constant dense<0.000000e+00> : vector<8x16xf32>
    %52 = tpu.matmul %51, %33, %cst_16 {dimension_numbers = #tpu.dot_dimension_numbers<[1], [0], [0], [1], [0, 0, 1, 1], [], []>} : vector<8x8xbf16>, vector<8x16xbf16>, vector<8x16xf32> -> vector<8x16xf32>
    %53 = tpu.concatenate %30, %52 in 1 : vector<8x16xf32>, vector<8x16xf32> -> vector<8x32xf32>
    %54 = arith.truncf %53 : vector<8x32xf32> to vector<8x32xbf16>
    %c0_17 = arith.constant 0 : index
    %c0_18 = arith.constant 0 : index
    %c0_19 = arith.constant 0 : index
    %55 = vector.load %arg3[%c0_17, %c0_18, %c0_19] : memref<1x8x32xbf16, #tpu.memory_space<vmem>>, vector<1x8x32xbf16>
    %56 = vector.shape_cast %55 : vector<1x8x32xbf16> to vector<8x32xbf16>
    %57 = vector.shape_cast %54 : vector<8x32xbf16> to vector<1x8x32xbf16>
    tpu.vector_store %arg3[%c0_17, %c0_18, %c0_19], %57 {strides = array<i32>} : memref<1x8x32xbf16, #tpu.memory_space<vmem>>, vector<1x8x32xbf16>,
    return
  }
  func.func @transform_0(%arg0: i32) -> (i32, i32, i32) {
    %c0_i32 = arith.constant 0 : i32
    %c0_i32_0 = arith.constant 0 : i32
    %c0_i32_1 = arith.constant 0 : i32
    return %arg0, %c0_i32, %c0_i32_0 : i32, i32, i32
  }
  func.func @transform_1(%arg0: i32) -> (i32, i32, i32) {
    %c0_i32 = arith.constant 0 : i32
    %c0_i32_0 = arith.constant 0 : i32
    %c0_i32_1 = arith.constant 0 : i32
    return %arg0, %c0_i32, %c0_i32_0 : i32, i32, i32
  }
  func.func @transform_2(%arg0: i32) -> (i32, i32, i32) {
    %c0_i32 = arith.constant 0 : i32
    %c0_i32_0 = arith.constant 0 : i32
    %c0_i32_1 = arith.constant 0 : i32
    return %arg0, %c0_i32, %c0_i32_0 : i32, i32, i32
  }
}

module attributes {stable_mosaic.version = 11 : i64} {
  func.func @_matmul_res_ln_kernel(%arg0: i32, %arg1: i32, %arg2: memref<16x64xbf16, #tpu.memory_space<vmem>>, %arg3: memref<64x32xbf16, #tpu.memory_space<vmem>>, %arg4: memref<1x32xf32, #tpu.memory_space<vmem>>, %arg5: memref<16x32xbf16, #tpu.memory_space<vmem>>, %arg6: memref<1x32xf32, #tpu.memory_space<vmem>>, %arg7: memref<1x32xf32, #tpu.memory_space<vmem>>, %arg8: memref<16x32xbf16, #tpu.memory_space<vmem>>, %arg9: memref<16x32xf32, #tpu.memory_space<vmem>>) attributes {dimension_semantics = [#tpu.dimension_semantics<parallel>, #tpu.dimension_semantics<arbitrary>], iteration_bounds = array<i64: 1, 1>, scalar_prefetch = 0 : i64, scratch_operands = 1 : i64, tpu.core_type = #tpu.core_type<tc>, window_params = [{transform_indices = @transform_0, window_bounds = array<i64: 16, 64>}, {transform_indices = @transform_1, window_bounds = array<i64: 64, 32>}, {pipeline_mode = #tpu.pipeline_mode<synchronous>, transform_indices = @transform_2, window_bounds = array<i64: 1, 32>}, {transform_indices = @transform_3, window_bounds = array<i64: 16, 32>}, {pipeline_mode = #tpu.pipeline_mode<synchronous>, transform_indices = @transform_4, window_bounds = array<i64: 1, 32>}, {pipeline_mode = #tpu.pipeline_mode<synchronous>, transform_indices = @transform_5, window_bounds = array<i64: 1, 32>}, {transform_indices = @transform_6, window_bounds = array<i64: 16, 32>}]} {
    %c0_i32 = arith.constant 0 : i32
    %0 = arith.cmpi eq, %arg1, %c0_i32 : i32
    %1 = arith.extui %0 : i1 to i32
    %c0_i32_0 = arith.constant 0 : i32
    %2 = arith.cmpi ne, %1, %c0_i32_0 : i32
    scf.if %2 {
      %cst_10 = arith.constant 0.000000e+00 : f32
      %12 = vector.broadcast %cst_10 : f32 to vector<16x32xf32>
      %c0_11 = arith.constant 0 : index
      %c0_12 = arith.constant 0 : index
      %13 = vector.load %arg9[%c0_11, %c0_12] : memref<16x32xf32, #tpu.memory_space<vmem>>, vector<16x32xf32>
      tpu.vector_store %arg9[%c0_11, %c0_12], %12 {strides = array<i32>} : memref<16x32xf32, #tpu.memory_space<vmem>>, vector<16x32xf32>,
    } else {
    }
    %c0 = arith.constant 0 : index
    %c0_1 = arith.constant 0 : index
    %3 = vector.load %arg9[%c0, %c0_1] : memref<16x32xf32, #tpu.memory_space<vmem>>, vector<16x32xf32>
    %c0_2 = arith.constant 0 : index
    %c0_3 = arith.constant 0 : index
    %4 = vector.load %arg2[%c0_2, %c0_3] : memref<16x64xbf16, #tpu.memory_space<vmem>>, vector<16x64xbf16>
    %c0_4 = arith.constant 0 : index
    %c0_5 = arith.constant 0 : index
    %5 = vector.load %arg3[%c0_4, %c0_5] : memref<64x32xbf16, #tpu.memory_space<vmem>>, vector<64x32xbf16>
    %cst = arith.constant dense<0.000000e+00> : vector<16x32xf32>
    %6 = tpu.matmul %4, %5, %cst {dimension_numbers = #tpu.dot_dimension_numbers<[1], [0], [0], [1], [0, 0, 1, 1], [], []>} : vector<16x64xbf16>, vector<64x32xbf16>, vector<16x32xf32> -> vector<16x32xf32>
    %7 = arith.addf %3, %6 : vector<16x32xf32>
    %c0_6 = arith.constant 0 : index
    %c0_7 = arith.constant 0 : index
    %8 = vector.load %arg9[%c0_6, %c0_7] : memref<16x32xf32, #tpu.memory_space<vmem>>, vector<16x32xf32>
    tpu.vector_store %arg9[%c0_6, %c0_7], %7 {strides = array<i32>} : memref<16x32xf32, #tpu.memory_space<vmem>>, vector<16x32xf32>,
    %c0_i32_8 = arith.constant 0 : i32
    %9 = arith.cmpi eq, %arg1, %c0_i32_8 : i32
    %10 = arith.extui %9 : i1 to i32
    %c0_i32_9 = arith.constant 0 : i32
    %11 = arith.cmpi ne, %10, %c0_i32_9 : i32
    scf.if %11 {
      %c0_10 = arith.constant 0 : index
      %c0_11 = arith.constant 0 : index
      %12 = vector.load %arg9[%c0_10, %c0_11] : memref<16x32xf32, #tpu.memory_space<vmem>>, vector<16x32xf32>
      %c0_12 = arith.constant 0 : index
      %c0_13 = arith.constant 0 : index
      %13 = vector.load %arg4[%c0_12, %c0_13] : memref<1x32xf32, #tpu.memory_space<vmem>>, vector<1x32xf32>
      %14 = vector.broadcast %13 : vector<1x32xf32> to vector<16x32xf32>
      %15 = arith.addf %12, %14 : vector<16x32xf32>
      %c0_14 = arith.constant 0 : index
      %c0_15 = arith.constant 0 : index
      %16 = vector.load %arg5[%c0_14, %c0_15] : memref<16x32xbf16, #tpu.memory_space<vmem>>, vector<16x32xbf16>
      %17 = arith.extf %16 : vector<16x32xbf16> to vector<16x32xf32>
      %18 = arith.addf %15, %17 : vector<16x32xf32>
      %cst_16 = arith.constant dense<0.000000e+00> : vector<16xf32>
      %19 = vector.multi_reduction <add>, %18, %cst_16 [1] : vector<16x32xf32> to vector<16xf32>
      %20 = vector.shape_cast %19 : vector<16xf32> to vector<16x1xf32>
      %cst_17 = arith.constant 3.200000e+01 : f32
      %21 = vector.broadcast %cst_17 : f32 to vector<16x1xf32>
      %22 = arith.divf %20, %21 : vector<16x1xf32>
      %23 = vector.broadcast %22 : vector<16x1xf32> to vector<16x32xf32>
      %24 = arith.subf %18, %23 : vector<16x32xf32>
      %25 = arith.mulf %24, %24 : vector<16x32xf32>
      %cst_18 = arith.constant dense<0.000000e+00> : vector<16xf32>
      %26 = vector.multi_reduction <add>, %25, %cst_18 [1] : vector<16x32xf32> to vector<16xf32>
      %27 = vector.shape_cast %26 : vector<16xf32> to vector<16x1xf32>
      %cst_19 = arith.constant 3.200000e+01 : f32
      %28 = vector.broadcast %cst_19 : f32 to vector<16x1xf32>
      %29 = arith.divf %27, %28 : vector<16x1xf32>
      %30 = vector.broadcast %22 : vector<16x1xf32> to vector<16x32xf32>
      %31 = arith.subf %18, %30 : vector<16x32xf32>
      %cst_20 = arith.constant 9.99999974E-6 : f32
      %32 = vector.broadcast %cst_20 : f32 to vector<16x1xf32>
      %33 = arith.addf %29, %32 : vector<16x1xf32>
      %34 = math.rsqrt %33 : vector<16x1xf32>
      %35 = vector.broadcast %34 : vector<16x1xf32> to vector<16x32xf32>
      %36 = arith.mulf %31, %35 : vector<16x32xf32>
      %c0_21 = arith.constant 0 : index
      %c0_22 = arith.constant 0 : index
      %37 = vector.load %arg6[%c0_21, %c0_22] : memref<1x32xf32, #tpu.memory_space<vmem>>, vector<1x32xf32>
      %38 = vector.broadcast %37 : vector<1x32xf32> to vector<16x32xf32>
      %39 = arith.mulf %36, %38 : vector<16x32xf32>
      %c0_23 = arith.constant 0 : index
      %c0_24 = arith.constant 0 : index
      %40 = vector.load %arg7[%c0_23, %c0_24] : memref<1x32xf32, #tpu.memory_space<vmem>>, vector<1x32xf32>
      %41 = vector.broadcast %40 : vector<1x32xf32> to vector<16x32xf32>
      %42 = arith.addf %39, %41 : vector<16x32xf32>
      %43 = arith.truncf %42 : vector<16x32xf32> to vector<16x32xbf16>
      %c0_25 = arith.constant 0 : index
      %c0_26 = arith.constant 0 : index
      %44 = vector.load %arg8[%c0_25, %c0_26] : memref<16x32xbf16, #tpu.memory_space<vmem>>, vector<16x32xbf16>
      tpu.vector_store %arg8[%c0_25, %c0_26], %43 {strides = array<i32>} : memref<16x32xbf16, #tpu.memory_space<vmem>>, vector<16x32xbf16>,
    } else {
    }
    return
  }
  func.func @transform_0(%arg0: i32, %arg1: i32) -> (i32, i32) {
    %c0_i32 = arith.constant 0 : i32
    return %arg0, %arg1 : i32, i32
  }
  func.func @transform_1(%arg0: i32, %arg1: i32) -> (i32, i32) {
    %c0_i32 = arith.constant 0 : i32
    %c0_i32_0 = arith.constant 0 : i32
    return %arg1, %c0_i32 : i32, i32
  }
  func.func @transform_2(%arg0: i32, %arg1: i32) -> (i32, i32) {
    %c0_i32 = arith.constant 0 : i32
    %c0_i32_0 = arith.constant 0 : i32
    %c0_i32_1 = arith.constant 0 : i32
    return %c0_i32, %c0_i32_0 : i32, i32
  }
  func.func @transform_3(%arg0: i32, %arg1: i32) -> (i32, i32) {
    %c0_i32 = arith.constant 0 : i32
    %c0_i32_0 = arith.constant 0 : i32
    return %arg0, %c0_i32 : i32, i32
  }
  func.func @transform_4(%arg0: i32, %arg1: i32) -> (i32, i32) {
    %c0_i32 = arith.constant 0 : i32
    %c0_i32_0 = arith.constant 0 : i32
    %c0_i32_1 = arith.constant 0 : i32
    return %c0_i32, %c0_i32_0 : i32, i32
  }
  func.func @transform_5(%arg0: i32, %arg1: i32) -> (i32, i32) {
    %c0_i32 = arith.constant 0 : i32
    %c0_i32_0 = arith.constant 0 : i32
    %c0_i32_1 = arith.constant 0 : i32
    return %c0_i32, %c0_i32_0 : i32, i32
  }
  func.func @transform_6(%arg0: i32, %arg1: i32) -> (i32, i32) {
    %c0_i32 = arith.constant 0 : i32
    %c0_i32_0 = arith.constant 0 : i32
    return %arg0, %c0_i32 : i32, i32
  }
}

module attributes {stable_mosaic.version = 11 : i64} {
  func.func @_ln_matmul_kernel(%arg0: i32, %arg1: i32, %arg2: memref<16x32xbf16, #tpu.memory_space<vmem>>, %arg3: memref<1x32xf32, #tpu.memory_space<vmem>>, %arg4: memref<1x32xf32, #tpu.memory_space<vmem>>, %arg5: memref<32x64xbf16, #tpu.memory_space<vmem>>, %arg6: memref<1x64xf32, #tpu.memory_space<vmem>>, %arg7: memref<16x64xbf16, #tpu.memory_space<vmem>>, %arg8: memref<16x32xbf16, #tpu.memory_space<vmem>>) attributes {dimension_semantics = [#tpu.dimension_semantics<parallel>, #tpu.dimension_semantics<arbitrary>], iteration_bounds = array<i64: 1, 1>, scalar_prefetch = 0 : i64, scratch_operands = 1 : i64, tpu.core_type = #tpu.core_type<tc>, window_params = [{transform_indices = @transform_0, window_bounds = array<i64: 16, 32>}, {pipeline_mode = #tpu.pipeline_mode<synchronous>, transform_indices = @transform_1, window_bounds = array<i64: 1, 32>}, {pipeline_mode = #tpu.pipeline_mode<synchronous>, transform_indices = @transform_2, window_bounds = array<i64: 1, 32>}, {transform_indices = @transform_3, window_bounds = array<i64: 32, 64>}, {transform_indices = @transform_4, window_bounds = array<i64: 1, 64>}, {transform_indices = @transform_5, window_bounds = array<i64: 16, 64>}]} {
    %c0_i32 = arith.constant 0 : i32
    %0 = arith.cmpi eq, %arg1, %c0_i32 : i32
    %1 = arith.extui %0 : i1 to i32
    %c0_i32_0 = arith.constant 0 : i32
    %2 = arith.cmpi ne, %1, %c0_i32_0 : i32
    scf.if %2 {
      %c0_8 = arith.constant 0 : index
      %c0_9 = arith.constant 0 : index
      %11 = vector.load %arg2[%c0_8, %c0_9] : memref<16x32xbf16, #tpu.memory_space<vmem>>, vector<16x32xbf16>
      %12 = arith.extf %11 : vector<16x32xbf16> to vector<16x32xf32>
      %cst_10 = arith.constant dense<0.000000e+00> : vector<16xf32>
      %13 = vector.multi_reduction <add>, %12, %cst_10 [1] : vector<16x32xf32> to vector<16xf32>
      %14 = vector.shape_cast %13 : vector<16xf32> to vector<16x1xf32>
      %cst_11 = arith.constant 3.200000e+01 : f32
      %15 = vector.broadcast %cst_11 : f32 to vector<16x1xf32>
      %16 = arith.divf %14, %15 : vector<16x1xf32>
      %17 = vector.broadcast %16 : vector<16x1xf32> to vector<16x32xf32>
      %18 = arith.subf %12, %17 : vector<16x32xf32>
      %19 = arith.mulf %18, %18 : vector<16x32xf32>
      %cst_12 = arith.constant dense<0.000000e+00> : vector<16xf32>
      %20 = vector.multi_reduction <add>, %19, %cst_12 [1] : vector<16x32xf32> to vector<16xf32>
      %21 = vector.shape_cast %20 : vector<16xf32> to vector<16x1xf32>
      %cst_13 = arith.constant 3.200000e+01 : f32
      %22 = vector.broadcast %cst_13 : f32 to vector<16x1xf32>
      %23 = arith.divf %21, %22 : vector<16x1xf32>
      %24 = vector.broadcast %16 : vector<16x1xf32> to vector<16x32xf32>
      %25 = arith.subf %12, %24 : vector<16x32xf32>
      %cst_14 = arith.constant 9.99999974E-6 : f32
      %26 = vector.broadcast %cst_14 : f32 to vector<16x1xf32>
      %27 = arith.addf %23, %26 : vector<16x1xf32>
      %28 = math.rsqrt %27 : vector<16x1xf32>
      %29 = vector.broadcast %28 : vector<16x1xf32> to vector<16x32xf32>
      %30 = arith.mulf %25, %29 : vector<16x32xf32>
      %c0_15 = arith.constant 0 : index
      %c0_16 = arith.constant 0 : index
      %31 = vector.load %arg3[%c0_15, %c0_16] : memref<1x32xf32, #tpu.memory_space<vmem>>, vector<1x32xf32>
      %32 = vector.broadcast %31 : vector<1x32xf32> to vector<16x32xf32>
      %33 = arith.mulf %30, %32 : vector<16x32xf32>
      %c0_17 = arith.constant 0 : index
      %c0_18 = arith.constant 0 : index
      %34 = vector.load %arg4[%c0_17, %c0_18] : memref<1x32xf32, #tpu.memory_space<vmem>>, vector<1x32xf32>
      %35 = vector.broadcast %34 : vector<1x32xf32> to vector<16x32xf32>
      %36 = arith.addf %33, %35 : vector<16x32xf32>
      %37 = arith.truncf %36 : vector<16x32xf32> to vector<16x32xbf16>
      %c0_19 = arith.constant 0 : index
      %c0_20 = arith.constant 0 : index
      %38 = vector.load %arg8[%c0_19, %c0_20] : memref<16x32xbf16, #tpu.memory_space<vmem>>, vector<16x32xbf16>
      tpu.vector_store %arg8[%c0_19, %c0_20], %37 {strides = array<i32>} : memref<16x32xbf16, #tpu.memory_space<vmem>>, vector<16x32xbf16>,
    } else {
    }
    %c0 = arith.constant 0 : index
    %c0_1 = arith.constant 0 : index
    %3 = vector.load %arg8[%c0, %c0_1] : memref<16x32xbf16, #tpu.memory_space<vmem>>, vector<16x32xbf16>
    %c0_2 = arith.constant 0 : index
    %c0_3 = arith.constant 0 : index
    %4 = vector.load %arg5[%c0_2, %c0_3] : memref<32x64xbf16, #tpu.memory_space<vmem>>, vector<32x64xbf16>
    %cst = arith.constant dense<0.000000e+00> : vector<16x64xf32>
    %5 = tpu.matmul %3, %4, %cst {dimension_numbers = #tpu.dot_dimension_numbers<[1], [0], [0], [1], [0, 0, 1, 1], [], []>} : vector<16x32xbf16>, vector<32x64xbf16>, vector<16x64xf32> -> vector<16x64xf32>
    %c0_4 = arith.constant 0 : index
    %c0_5 = arith.constant 0 : index
    %6 = vector.load %arg6[%c0_4, %c0_5] : memref<1x64xf32, #tpu.memory_space<vmem>>, vector<1x64xf32>
    %7 = vector.broadcast %6 : vector<1x64xf32> to vector<16x64xf32>
    %8 = arith.addf %5, %7 : vector<16x64xf32>
    %9 = arith.truncf %8 : vector<16x64xf32> to vector<16x64xbf16>
    %c0_6 = arith.constant 0 : index
    %c0_7 = arith.constant 0 : index
    %10 = vector.load %arg7[%c0_6, %c0_7] : memref<16x64xbf16, #tpu.memory_space<vmem>>, vector<16x64xbf16>
    tpu.vector_store %arg7[%c0_6, %c0_7], %9 {strides = array<i32>} : memref<16x64xbf16, #tpu.memory_space<vmem>>, vector<16x64xbf16>,
    return
  }
  func.func @transform_0(%arg0: i32, %arg1: i32) -> (i32, i32) {
    %c0_i32 = arith.constant 0 : i32
    %c0_i32_0 = arith.constant 0 : i32
    return %arg0, %c0_i32 : i32, i32
  }
  func.func @transform_1(%arg0: i32, %arg1: i32) -> (i32, i32) {
    %c0_i32 = arith.constant 0 : i32
    %c0_i32_0 = arith.constant 0 : i32
    %c0_i32_1 = arith.constant 0 : i32
    return %c0_i32, %c0_i32_0 : i32, i32
  }
  func.func @transform_2(%arg0: i32, %arg1: i32) -> (i32, i32) {
    %c0_i32 = arith.constant 0 : i32
    %c0_i32_0 = arith.constant 0 : i32
    %c0_i32_1 = arith.constant 0 : i32
    return %c0_i32, %c0_i32_0 : i32, i32
  }
  func.func @transform_3(%arg0: i32, %arg1: i32) -> (i32, i32) {
    %c0_i32 = arith.constant 0 : i32
    %c0_i32_0 = arith.constant 0 : i32
    return %c0_i32, %arg1 : i32, i32
  }
  func.func @transform_4(%arg0: i32, %arg1: i32) -> (i32, i32) {
    %c0_i32 = arith.constant 0 : i32
    %c0_i32_0 = arith.constant 0 : i32
    return %c0_i32, %arg1 : i32, i32
  }
  func.func @transform_5(%arg0: i32, %arg1: i32) -> (i32, i32) {
    %c0_i32 = arith.constant 0 : i32
    return %arg0, %arg1 : i32, i32
  }
}

module attributes {stable_mosaic.version = 11 : i64} {
  func.func @_ln_matmul_kernel(%arg0: i32, %arg1: i32, %arg2: memref<16x32xbf16, #tpu.memory_space<vmem>>, %arg3: memref<1x32xf32, #tpu.memory_space<vmem>>, %arg4: memref<1x32xf32, #tpu.memory_space<vmem>>, %arg5: memref<32x64xbf16, #tpu.memory_space<vmem>>, %arg6: memref<1x64xf32, #tpu.memory_space<vmem>>, %arg7: memref<16x64xbf16, #tpu.memory_space<vmem>>, %arg8: memref<16x32xbf16, #tpu.memory_space<vmem>>) attributes {dimension_semantics = [#tpu.dimension_semantics<parallel>, #tpu.dimension_semantics<arbitrary>], iteration_bounds = array<i64: 1, 1>, scalar_prefetch = 0 : i64, scratch_operands = 1 : i64, tpu.core_type = #tpu.core_type<tc>, window_params = [{transform_indices = @transform_0, window_bounds = array<i64: 16, 32>}, {pipeline_mode = #tpu.pipeline_mode<synchronous>, transform_indices = @transform_1, window_bounds = array<i64: 1, 32>}, {pipeline_mode = #tpu.pipeline_mode<synchronous>, transform_indices = @transform_2, window_bounds = array<i64: 1, 32>}, {transform_indices = @transform_3, window_bounds = array<i64: 32, 64>}, {transform_indices = @transform_4, window_bounds = array<i64: 1, 64>}, {transform_indices = @transform_5, window_bounds = array<i64: 16, 64>}]} {
    %c0_i32 = arith.constant 0 : i32
    %0 = arith.cmpi eq, %arg1, %c0_i32 : i32
    %1 = arith.extui %0 : i1 to i32
    %c0_i32_0 = arith.constant 0 : i32
    %2 = arith.cmpi ne, %1, %c0_i32_0 : i32
    scf.if %2 {
      %c0_12 = arith.constant 0 : index
      %c0_13 = arith.constant 0 : index
      %24 = vector.load %arg2[%c0_12, %c0_13] : memref<16x32xbf16, #tpu.memory_space<vmem>>, vector<16x32xbf16>
      %25 = arith.extf %24 : vector<16x32xbf16> to vector<16x32xf32>
      %cst_14 = arith.constant dense<0.000000e+00> : vector<16xf32>
      %26 = vector.multi_reduction <add>, %25, %cst_14 [1] : vector<16x32xf32> to vector<16xf32>
      %27 = vector.shape_cast %26 : vector<16xf32> to vector<16x1xf32>
      %cst_15 = arith.constant 3.200000e+01 : f32
      %28 = vector.broadcast %cst_15 : f32 to vector<16x1xf32>
      %29 = arith.divf %27, %28 : vector<16x1xf32>
      %30 = vector.broadcast %29 : vector<16x1xf32> to vector<16x32xf32>
      %31 = arith.subf %25, %30 : vector<16x32xf32>
      %32 = arith.mulf %31, %31 : vector<16x32xf32>
      %cst_16 = arith.constant dense<0.000000e+00> : vector<16xf32>
      %33 = vector.multi_reduction <add>, %32, %cst_16 [1] : vector<16x32xf32> to vector<16xf32>
      %34 = vector.shape_cast %33 : vector<16xf32> to vector<16x1xf32>
      %cst_17 = arith.constant 3.200000e+01 : f32
      %35 = vector.broadcast %cst_17 : f32 to vector<16x1xf32>
      %36 = arith.divf %34, %35 : vector<16x1xf32>
      %37 = vector.broadcast %29 : vector<16x1xf32> to vector<16x32xf32>
      %38 = arith.subf %25, %37 : vector<16x32xf32>
      %cst_18 = arith.constant 9.99999974E-6 : f32
      %39 = vector.broadcast %cst_18 : f32 to vector<16x1xf32>
      %40 = arith.addf %36, %39 : vector<16x1xf32>
      %41 = math.rsqrt %40 : vector<16x1xf32>
      %42 = vector.broadcast %41 : vector<16x1xf32> to vector<16x32xf32>
      %43 = arith.mulf %38, %42 : vector<16x32xf32>
      %c0_19 = arith.constant 0 : index
      %c0_20 = arith.constant 0 : index
      %44 = vector.load %arg3[%c0_19, %c0_20] : memref<1x32xf32, #tpu.memory_space<vmem>>, vector<1x32xf32>
      %45 = vector.broadcast %44 : vector<1x32xf32> to vector<16x32xf32>
      %46 = arith.mulf %43, %45 : vector<16x32xf32>
      %c0_21 = arith.constant 0 : index
      %c0_22 = arith.constant 0 : index
      %47 = vector.load %arg4[%c0_21, %c0_22] : memref<1x32xf32, #tpu.memory_space<vmem>>, vector<1x32xf32>
      %48 = vector.broadcast %47 : vector<1x32xf32> to vector<16x32xf32>
      %49 = arith.addf %46, %48 : vector<16x32xf32>
      %50 = arith.truncf %49 : vector<16x32xf32> to vector<16x32xbf16>
      %c0_23 = arith.constant 0 : index
      %c0_24 = arith.constant 0 : index
      %51 = vector.load %arg8[%c0_23, %c0_24] : memref<16x32xbf16, #tpu.memory_space<vmem>>, vector<16x32xbf16>
      tpu.vector_store %arg8[%c0_23, %c0_24], %50 {strides = array<i32>} : memref<16x32xbf16, #tpu.memory_space<vmem>>, vector<16x32xbf16>,
    } else {
    }
    %c0 = arith.constant 0 : index
    %c0_1 = arith.constant 0 : index
    %3 = vector.load %arg8[%c0, %c0_1] : memref<16x32xbf16, #tpu.memory_space<vmem>>, vector<16x32xbf16>
    %c0_2 = arith.constant 0 : index
    %c0_3 = arith.constant 0 : index
    %4 = vector.load %arg5[%c0_2, %c0_3] : memref<32x64xbf16, #tpu.memory_space<vmem>>, vector<32x64xbf16>
    %cst = arith.constant dense<0.000000e+00> : vector<16x64xf32>
    %5 = tpu.matmul %3, %4, %cst {dimension_numbers = #tpu.dot_dimension_numbers<[1], [0], [0], [1], [0, 0, 1, 1], [], []>} : vector<16x32xbf16>, vector<32x64xbf16>, vector<16x64xf32> -> vector<16x64xf32>
    %c0_4 = arith.constant 0 : index
    %c0_5 = arith.constant 0 : index
    %6 = vector.load %arg6[%c0_4, %c0_5] : memref<1x64xf32, #tpu.memory_space<vmem>>, vector<1x64xf32>
    %7 = vector.broadcast %6 : vector<1x64xf32> to vector<16x64xf32>
    %8 = arith.addf %5, %7 : vector<16x64xf32>
    %cst_6 = arith.constant 5.000000e-01 : f32
    %9 = vector.broadcast %cst_6 : f32 to vector<16x64xf32>
    %10 = arith.mulf %9, %8 : vector<16x64xf32>
    %cst_7 = arith.constant 4.471500e-02 : f32
    %11 = vector.broadcast %cst_7 : f32 to vector<16x64xf32>
    %12 = arith.mulf %11, %8 : vector<16x64xf32>
    %13 = arith.mulf %12, %8 : vector<16x64xf32>
    %14 = arith.mulf %13, %8 : vector<16x64xf32>
    %15 = arith.addf %8, %14 : vector<16x64xf32>
    %cst_8 = arith.constant 0.797884583 : f32
    %16 = vector.broadcast %cst_8 : f32 to vector<16x64xf32>
    %17 = arith.mulf %16, %15 : vector<16x64xf32>
    %18 = math.tanh %17 : vector<16x64xf32>
    %cst_9 = arith.constant 1.000000e+00 : f32
    %19 = vector.broadcast %cst_9 : f32 to vector<16x64xf32>
    %20 = arith.addf %19, %18 : vector<16x64xf32>
    %21 = arith.mulf %10, %20 : vector<16x64xf32>
    %22 = arith.truncf %21 : vector<16x64xf32> to vector<16x64xbf16>
    %c0_10 = arith.constant 0 : index
    %c0_11 = arith.constant 0 : index
    %23 = vector.load %arg7[%c0_10, %c0_11] : memref<16x64xbf16, #tpu.memory_space<vmem>>, vector<16x64xbf16>
    tpu.vector_store %arg7[%c0_10, %c0_11], %22 {strides = array<i32>} : memref<16x64xbf16, #tpu.memory_space<vmem>>, vector<16x64xbf16>,
    return
  }
  func.func @transform_0(%arg0: i32, %arg1: i32) -> (i32, i32) {
    %c0_i32 = arith.constant 0 : i32
    %c0_i32_0 = arith.constant 0 : i32
    return %arg0, %c0_i32 : i32, i32
  }
  func.func @transform_1(%arg0: i32, %arg1: i32) -> (i32, i32) {
    %c0_i32 = arith.constant 0 : i32
    %c0_i32_0 = arith.constant 0 : i32
    %c0_i32_1 = arith.constant 0 : i32
    return %c0_i32, %c0_i32_0 : i32, i32
  }
  func.func @transform_2(%arg0: i32, %arg1: i32) -> (i32, i32) {
    %c0_i32 = arith.constant 0 : i32
    %c0_i32_0 = arith.constant 0 : i32
    %c0_i32_1 = arith.constant 0 : i32
    return %c0_i32, %c0_i32_0 : i32, i32
  }
  func.func @transform_3(%arg0: i32, %arg1: i32) -> (i32, i32) {
    %c0_i32 = arith.constant 0 : i32
    %c0_i32_0 = arith.constant 0 : i32
    return %c0_i32, %arg1 : i32, i32
  }
  func.func @transform_4(%arg0: i32, %arg1: i32) -> (i32, i32) {
    %c0_i32 = arith.constant 0 : i32
    %c0_i32_0 = arith.constant 0 : i32
    return %c0_i32, %arg1 : i32, i32
  }
  func.func @transform_5(%arg0: i32, %arg1: i32) -> (i32, i32) {
    %c0_i32 = arith.constant 0 : i32
    return %arg0, %arg1 : i32, i32
  }
}

module attributes {stable_mosaic.version = 11 : i64} {
  func.func @_cross_attn_kernel(%arg0: i32, %arg1: memref<1x8x32xbf16, #tpu.memory_space<vmem>>, %arg2: memref<1x8x64xbf16, #tpu.memory_space<vmem>>, %arg3: memref<1x1x8xf32, #tpu.memory_space<vmem>>, %arg4: memref<1x8x32xbf16, #tpu.memory_space<vmem>>) attributes {dimension_semantics = [#tpu.dimension_semantics<parallel>], iteration_bounds = array<i64: 2>, scalar_prefetch = 0 : i64, scratch_operands = 0 : i64, tpu.core_type = #tpu.core_type<tc>, window_params = [{transform_indices = @transform_0, window_bounds = array<i64: 1, 8, 32>}, {transform_indices = @transform_1, window_bounds = array<i64: 1, 8, 64>}, {transform_indices = @transform_2, window_bounds = array<i64: 1, 1, 8>}, {transform_indices = @transform_3, window_bounds = array<i64: 1, 8, 32>}]} {
    %c0 = arith.constant 0 : index
    %c0_0 = arith.constant 0 : index
    %c0_1 = arith.constant 0 : index
    %0 = vector.load %arg2[%c0, %c0_0, %c0_1] : memref<1x8x64xbf16, #tpu.memory_space<vmem>>, vector<1x8x64xbf16>
    %1 = vector.shape_cast %0 : vector<1x8x64xbf16> to vector<8x64xbf16>
    %c0_2 = arith.constant 0 : index
    %c0_3 = arith.constant 0 : index
    %c0_4 = arith.constant 0 : index
    %2 = vector.load %arg3[%c0_2, %c0_3, %c0_4] : memref<1x1x8xf32, #tpu.memory_space<vmem>>, vector<1x1x8xf32>
    %3 = vector.shape_cast %2 : vector<1x1x8xf32> to vector<1x8xf32>
    %cst = arith.constant 0.000000e+00 : f32
    %4 = vector.broadcast %cst : f32 to vector<1x8xf32>
    %5 = arith.cmpf one, %3, %4 : vector<1x8xf32>
    %c0_5 = arith.constant 0 : index
    %c0_6 = arith.constant 0 : index
    %c0_7 = arith.constant 0 : index
    %6 = vector.load %arg1[%c0_5, %c0_6, %c0_7] : memref<1x8x32xbf16, #tpu.memory_space<vmem>>, vector<1x8x32xbf16>
    %7 = vector.shape_cast %6 : vector<1x8x32xbf16> to vector<8x32xbf16>
    %8 = vector.extract_strided_slice %1 {offsets = [0, 0], sizes = [8, 32], strides = [1, 1]} : vector<8x64xbf16> to vector<8x32xbf16>
    %9 = vector.extract_strided_slice %1 {offsets = [0, 32], sizes = [8, 32], strides = [1, 1]} : vector<8x64xbf16> to vector<8x32xbf16>
    %10 = vector.extract_strided_slice %7 {offsets = [0, 0], sizes = [8, 16], strides = [1, 1]} : vector<8x32xbf16> to vector<8x16xbf16>
    %11 = vector.extract_strided_slice %8 {offsets = [0, 0], sizes = [8, 16], strides = [1, 1]} : vector<8x32xbf16> to vector<8x16xbf16>
    %12 = vector.extract_strided_slice %9 {offsets = [0, 0], sizes = [8, 16], strides = [1, 1]} : vector<8x32xbf16> to vector<8x16xbf16>
    %cst_8 = arith.constant dense<0.000000e+00> : vector<8x8xf32>
    %13 = tpu.matmul %10, %11, %cst_8 {dimension_numbers = #tpu.dot_dimension_numbers<[1], [1], [0], [0], [0, 0, 1, 0], [], []>} : vector<8x16xbf16>, vector<8x16xbf16>, vector<8x8xf32> -> vector<8x8xf32>
    %cst_9 = arith.constant -1.000000e+20 : f32
    %14 = vector.shape_cast %5 : vector<1x8xi1> to vector<1x8xi1>
    %15 = vector.broadcast %14 : vector<1x8xi1> to vector<8x8xi1>
    %16 = vector.broadcast %cst_9 : f32 to vector<8x8xf32>
    %17 = arith.select %15, %13, %16 : vector<8x8xi1>, vector<8x8xf32>
    %cst_10 = arith.constant 2.500000e-01 : f32
    %18 = vector.broadcast %cst_10 : f32 to vector<8x8xf32>
    %19 = arith.mulf %17, %18 : vector<8x8xf32>
    %cst_11 = arith.constant dense<0xFF800000> : vector<8xf32>
    %20 = vector.multi_reduction <maximumf>, %19, %cst_11 [1] : vector<8x8xf32> to vector<8xf32>
    %21 = vector.shape_cast %20 : vector<8xf32> to vector<8x1xf32>
    %22 = vector.broadcast %21 : vector<8x1xf32> to vector<8x8xf32>
    %23 = arith.subf %19, %22 : vector<8x8xf32>
    %24 = math.exp %23 : vector<8x8xf32>
    %cst_12 = arith.constant dense<0.000000e+00> : vector<8xf32>
    %25 = vector.multi_reduction <add>, %24, %cst_12 [1] : vector<8x8xf32> to vector<8xf32>
    %26 = vector.shape_cast %25 : vector<8xf32> to vector<8x1xf32>
    %27 = tpu.reciprocal %26 {approx = true} : vector<8x1xf32> -> vector<8x1xf32>
    %28 = vector.broadcast %27 : vector<8x1xf32> to vector<8x8xf32>
    %29 = arith.mulf %24, %28 : vector<8x8xf32>
    %30 = arith.truncf %29 : vector<8x8xf32> to vector<8x8xbf16>
    %cst_13 = arith.constant dense<0.000000e+00> : vector<8x16xf32>
    %31 = tpu.matmul %30, %12, %cst_13 {dimension_numbers = #tpu.dot_dimension_numbers<[1], [0], [0], [1], [0, 0, 1, 1], [], []>} : vector<8x8xbf16>, vector<8x16xbf16>, vector<8x16xf32> -> vector<8x16xf32>
    %32 = vector.extract_strided_slice %7 {offsets = [0, 16], sizes = [8, 16], strides = [1, 1]} : vector<8x32xbf16> to vector<8x16xbf16>
    %33 = vector.extract_strided_slice %8 {offsets = [0, 16], sizes = [8, 16], strides = [1, 1]} : vector<8x32xbf16> to vector<8x16xbf16>
    %34 = vector.extract_strided_slice %9 {offsets = [0, 16], sizes = [8, 16], strides = [1, 1]} : vector<8x32xbf16> to vector<8x16xbf16>
    %cst_14 = arith.constant dense<0.000000e+00> : vector<8x8xf32>
    %35 = tpu.matmul %32, %33, %cst_14 {dimension_numbers = #tpu.dot_dimension_numbers<[1], [1], [0], [0], [0, 0, 1, 0], [], []>} : vector<8x16xbf16>, vector<8x16xbf16>, vector<8x8xf32> -> vector<8x8xf32>
    %cst_15 = arith.constant -1.000000e+20 : f32
    %36 = vector.shape_cast %5 : vector<1x8xi1> to vector<1x8xi1>
    %37 = vector.broadcast %36 : vector<1x8xi1> to vector<8x8xi1>
    %38 = vector.broadcast %cst_15 : f32 to vector<8x8xf32>
    %39 = arith.select %37, %35, %38 : vector<8x8xi1>, vector<8x8xf32>
    %cst_16 = arith.constant 2.500000e-01 : f32
    %40 = vector.broadcast %cst_16 : f32 to vector<8x8xf32>
    %41 = arith.mulf %39, %40 : vector<8x8xf32>
    %cst_17 = arith.constant dense<0xFF800000> : vector<8xf32>
    %42 = vector.multi_reduction <maximumf>, %41, %cst_17 [1] : vector<8x8xf32> to vector<8xf32>
    %43 = vector.shape_cast %42 : vector<8xf32> to vector<8x1xf32>
    %44 = vector.broadcast %43 : vector<8x1xf32> to vector<8x8xf32>
    %45 = arith.subf %41, %44 : vector<8x8xf32>
    %46 = math.exp %45 : vector<8x8xf32>
    %cst_18 = arith.constant dense<0.000000e+00> : vector<8xf32>
    %47 = vector.multi_reduction <add>, %46, %cst_18 [1] : vector<8x8xf32> to vector<8xf32>
    %48 = vector.shape_cast %47 : vector<8xf32> to vector<8x1xf32>
    %49 = tpu.reciprocal %48 {approx = true} : vector<8x1xf32> -> vector<8x1xf32>
    %50 = vector.broadcast %49 : vector<8x1xf32> to vector<8x8xf32>
    %51 = arith.mulf %46, %50 : vector<8x8xf32>
    %52 = arith.truncf %51 : vector<8x8xf32> to vector<8x8xbf16>
    %cst_19 = arith.constant dense<0.000000e+00> : vector<8x16xf32>
    %53 = tpu.matmul %52, %34, %cst_19 {dimension_numbers = #tpu.dot_dimension_numbers<[1], [0], [0], [1], [0, 0, 1, 1], [], []>} : vector<8x8xbf16>, vector<8x16xbf16>, vector<8x16xf32> -> vector<8x16xf32>
    %54 = tpu.concatenate %31, %53 in 1 : vector<8x16xf32>, vector<8x16xf32> -> vector<8x32xf32>
    %55 = arith.truncf %54 : vector<8x32xf32> to vector<8x32xbf16>
    %c0_20 = arith.constant 0 : index
    %c0_21 = arith.constant 0 : index
    %c0_22 = arith.constant 0 : index
    %56 = vector.load %arg4[%c0_20, %c0_21, %c0_22] : memref<1x8x32xbf16, #tpu.memory_space<vmem>>, vector<1x8x32xbf16>
    %57 = vector.shape_cast %56 : vector<1x8x32xbf16> to vector<8x32xbf16>
    %58 = vector.shape_cast %55 : vector<8x32xbf16> to vector<1x8x32xbf16>
    tpu.vector_store %arg4[%c0_20, %c0_21, %c0_22], %58 {strides = array<i32>} : memref<1x8x32xbf16, #tpu.memory_space<vmem>>, vector<1x8x32xbf16>,
    return
  }
  func.func @transform_0(%arg0: i32) -> (i32, i32, i32) {
    %c0_i32 = arith.constant 0 : i32
    %c0_i32_0 = arith.constant 0 : i32
    %c0_i32_1 = arith.constant 0 : i32
    return %arg0, %c0_i32, %c0_i32_0 : i32, i32, i32
  }
  func.func @transform_1(%arg0: i32) -> (i32, i32, i32) {
    %c0_i32 = arith.constant 0 : i32
    %c0_i32_0 = arith.constant 0 : i32
    %c0_i32_1 = arith.constant 0 : i32
    return %arg0, %c0_i32, %c0_i32_0 : i32, i32, i32
  }
  func.func @transform_2(%arg0: i32) -> (i32, i32, i32) {
    %c0_i32 = arith.constant 0 : i32
    %c0_i32_0 = arith.constant 0 : i32
    %c0_i32_1 = arith.constant 0 : i32
    return %arg0, %c0_i32, %c0_i32_0 : i32, i32, i32
  }
  func.func @transform_3(%arg0: i32) -> (i32, i32, i32) {
    %c0_i32 = arith.constant 0 : i32
    %c0_i32_0 = arith.constant 0 : i32
    %c0_i32_1 = arith.constant 0 : i32
    return %arg0, %c0_i32, %c0_i32_0 : i32, i32, i32
  }
}

module attributes {stable_mosaic.version = 11 : i64} {
  func.func @_matmul_kernel(%arg0: i32, %arg1: i32, %arg2: i32, %arg3: memref<16x32xbf16, #tpu.memory_space<vmem>>, %arg4: memref<32x60xbf16, #tpu.memory_space<vmem>>, %arg5: memref<1x60xf32, #tpu.memory_space<vmem>>, %arg6: memref<16x60xf32, #tpu.memory_space<vmem>>, %arg7: memref<16x60xf32, #tpu.memory_space<vmem>>) attributes {dimension_semantics = [#tpu.dimension_semantics<parallel>, #tpu.dimension_semantics<parallel>, #tpu.dimension_semantics<arbitrary>], iteration_bounds = array<i64: 1, 1, 1>, scalar_prefetch = 0 : i64, scratch_operands = 1 : i64, tpu.core_type = #tpu.core_type<tc>, window_params = [{transform_indices = @transform_0, window_bounds = array<i64: 16, 32>}, {transform_indices = @transform_1, window_bounds = array<i64: 32, 60>}, {transform_indices = @transform_2, window_bounds = array<i64: 1, 60>}, {transform_indices = @transform_3, window_bounds = array<i64: 16, 60>}]} {
    %c0_i32 = arith.constant 0 : i32
    %0 = arith.cmpi eq, %arg2, %c0_i32 : i32
    %1 = arith.extui %0 : i1 to i32
    %c0_i32_0 = arith.constant 0 : i32
    %2 = arith.cmpi ne, %1, %c0_i32_0 : i32
    scf.if %2 {
      %cst_10 = arith.constant 0.000000e+00 : f32
      %12 = vector.broadcast %cst_10 : f32 to vector<16x60xf32>
      %c0_11 = arith.constant 0 : index
      %c0_12 = arith.constant 0 : index
      %13 = vector.load %arg7[%c0_11, %c0_12] : memref<16x60xf32, #tpu.memory_space<vmem>>, vector<16x60xf32>
      tpu.vector_store %arg7[%c0_11, %c0_12], %12 {strides = array<i32>} : memref<16x60xf32, #tpu.memory_space<vmem>>, vector<16x60xf32>,
    } else {
    }
    %c0 = arith.constant 0 : index
    %c0_1 = arith.constant 0 : index
    %3 = vector.load %arg7[%c0, %c0_1] : memref<16x60xf32, #tpu.memory_space<vmem>>, vector<16x60xf32>
    %c0_2 = arith.constant 0 : index
    %c0_3 = arith.constant 0 : index
    %4 = vector.load %arg3[%c0_2, %c0_3] : memref<16x32xbf16, #tpu.memory_space<vmem>>, vector<16x32xbf16>
    %c0_4 = arith.constant 0 : index
    %c0_5 = arith.constant 0 : index
    %5 = vector.load %arg4[%c0_4, %c0_5] : memref<32x60xbf16, #tpu.memory_space<vmem>>, vector<32x60xbf16>
    %cst = arith.constant dense<0.000000e+00> : vector<16x60xf32>
    %6 = tpu.matmul %4, %5, %cst {dimension_numbers = #tpu.dot_dimension_numbers<[1], [0], [0], [1], [0, 0, 1, 1], [], []>} : vector<16x32xbf16>, vector<32x60xbf16>, vector<16x60xf32> -> vector<16x60xf32>
    %7 = arith.addf %3, %6 : vector<16x60xf32>
    %c0_6 = arith.constant 0 : index
    %c0_7 = arith.constant 0 : index
    %8 = vector.load %arg7[%c0_6, %c0_7] : memref<16x60xf32, #tpu.memory_space<vmem>>, vector<16x60xf32>
    tpu.vector_store %arg7[%c0_6, %c0_7], %7 {strides = array<i32>} : memref<16x60xf32, #tpu.memory_space<vmem>>, vector<16x60xf32>,
    %c0_i32_8 = arith.constant 0 : i32
    %9 = arith.cmpi eq, %arg2, %c0_i32_8 : i32
    %10 = arith.extui %9 : i1 to i32
    %c0_i32_9 = arith.constant 0 : i32
    %11 = arith.cmpi ne, %10, %c0_i32_9 : i32
    scf.if %11 {
      %c0_10 = arith.constant 0 : index
      %c0_11 = arith.constant 0 : index
      %12 = vector.load %arg7[%c0_10, %c0_11] : memref<16x60xf32, #tpu.memory_space<vmem>>, vector<16x60xf32>
      %c0_12 = arith.constant 0 : index
      %c0_13 = arith.constant 0 : index
      %13 = vector.load %arg5[%c0_12, %c0_13] : memref<1x60xf32, #tpu.memory_space<vmem>>, vector<1x60xf32>
      %14 = vector.broadcast %13 : vector<1x60xf32> to vector<16x60xf32>
      %15 = arith.addf %12, %14 : vector<16x60xf32>
      %c0_14 = arith.constant 0 : index
      %c0_15 = arith.constant 0 : index
      %16 = vector.load %arg6[%c0_14, %c0_15] : memref<16x60xf32, #tpu.memory_space<vmem>>, vector<16x60xf32>
      tpu.vector_store %arg6[%c0_14, %c0_15], %15 {strides = array<i32>} : memref<16x60xf32, #tpu.memory_space<vmem>>, vector<16x60xf32>,
    } else {
    }
    return
  }
  func.func @transform_0(%arg0: i32, %arg1: i32, %arg2: i32) -> (i32, i32) {
    %c0_i32 = arith.constant 0 : i32
    return %arg0, %arg2 : i32, i32
  }
  func.func @transform_1(%arg0: i32, %arg1: i32, %arg2: i32) -> (i32, i32) {
    %c0_i32 = arith.constant 0 : i32
    return %arg2, %arg1 : i32, i32
  }
  func.func @transform_2(%arg0: i32, %arg1: i32, %arg2: i32) -> (i32, i32) {
    %c0_i32 = arith.constant 0 : i32
    %c0_i32_0 = arith.constant 0 : i32
    return %c0_i32, %arg1 : i32, i32
  }
  func.func @transform_3(%arg0: i32, %arg1: i32, %arg2: i32) -> (i32, i32) {
    %c0_i32 = arith.constant 0 : i32
    return %arg0, %arg1 : i32, i32
  }
}

</mosaic_0001>

<llo_original>
// kernel: transformer_forward.40
$region0: #{transformer_forward.40}
  #allocation0 [shape = 'u32[]', space=smem, size = 0x4, offset = 0x4, fixed_abs, tag = 'smem constant byte address 0x4 - core index']
  #allocation1 [shape = 'u32[144,128]{1,0:T(1,128)}', space=vmem, size = 0x12000, scoped, tag = 'internal scratch']
  %s0 = inlined_call_operand.vmem [shape: bf16[2,8,96], index: 0, kind: input, shape index: {}]
  %s1 = inlined_call_operand.vmem [shape: f32[2,1,8], index: 1, kind: input, shape index: {}]
  %s2 = inlined_call_operand.vmem [shape: bf16[2,8,32], index: 2, kind: output, shape index: {}]
  %s3 = sld [smem:[#allocation0]]
  $region41: #{transformer_forward.40} parent=0
    _
  %s5 = ssub.s32 1, %s3
  %s6 = scalar_select 0, %s5, %s3
  loop: start=0, step=1, limit=4
  $region2: #{transformer_forward.40} parent=0 // loop_pre_header
    _
  $region3: #{transformer_forward.40} parent=0 // loop_header
    %s8 = sphi 0, %s12
    %p9 = scmp.ge.s32.totalorder %s8, 4
    %s18 = sphi 0, %s20
    %s21 = sphi 0, %s18
    %s22 = sphi 0, %s21
    %s38 = sphi 0, %s22
    %s44 = sphi 0, %s46
    %s47 = sphi 0, %s44
    %s48 = sphi 0, %s47
    %s64 = sphi 0, %s48
    %s70 = sphi 0, %s72
    %s73 = sphi 0, %s70
    %s74 = sphi 0, %s73
    %s90 = sphi 0, %s74
  $region4: #{transformer_forward.40} parent=0 // loop_header_branch
    %11 = sbr.rel (%p9) target = $region8
  $region5: #{transformer_forward.40} parent=0 // loop_body
    %s13 = ssub.s32 %s8, 1
    %s14 = ssub.s32 %s8, 2
    %s15 = sadd.s32 %s8, 1
    %s16 = ssub.s32 %s8, %s15
    %p17 = scmp.eq.s32.totalorder %s16, 0
    %s19 = sadd.s32 %s18, 1
    %s20 = scalar_select %p17, %s18, %s19
    %p23 = pneg %p17
    %p24 = scmp.eq.s32.totalorder %s8, 1
    %p25 = por %p23, %p24
    %p26 = scmp.ne.s32.totalorder %s18, %s21
    %p27 = scmp.eq.s32.totalorder %s8, 0
    %p28 = por %p26, %p27
    %p29 = scmp.ne.s32.totalorder %s18, %s21
    %p30 = scmp.eq.s32.totalorder %s13, 1
    %p31 = por %p29, %p30
    %p32 = scmp.ne.s32.totalorder %s21, %s22
    %p33 = scmp.eq.s32.totalorder %s13, 0
    %p34 = por %p32, %p33
    %p35 = scmp.ne.s32.totalorder %s21, %s22
    %p36 = scmp.eq.s32.totalorder %s14, 1
    %p37 = por %p35, %p36
    %p39 = scmp.ne.s32.totalorder %s22, %s38
    %p40 = scmp.eq.s32.totalorder %s14, 0
    %p41 = por %p39, %p40
    %s42 = ssub.s32 %s8, %s15
    %p43 = scmp.eq.s32.totalorder %s42, 0
    %s45 = sadd.s32 %s44, 1
    %s46 = scalar_select %p43, %s44, %s45
    %p49 = pneg %p43
    %p50 = scmp.eq.s32.totalorder %s8, 1
    %p51 = por %p49, %p50
    %p52 = scmp.ne.s32.totalorder %s44, %s47
    %p53 = scmp.eq.s32.totalorder %s8, 0
    %p54 = por %p52, %p53
    %p55 = scmp.ne.s32.totalorder %s44, %s47
    %p56 = scmp.eq.s32.totalorder %s13, 1
    %p57 = por %p55, %p56
    %p58 = scmp.ne.s32.totalorder %s47, %s48
    %p59 = scmp.eq.s32.totalorder %s13, 0
    %p60 = por %p58, %p59
    %p61 = scmp.ne.s32.totalorder %s47, %s48
    %p62 = scmp.eq.s32.totalorder %s14, 1
    %p63 = por %p61, %p62
    %p65 = scmp.ne.s32.totalorder %s48, %s64
    %p66 = scmp.eq.s32.totalorder %s14, 0
    %p67 = por %p65, %p66
    %s68 = ssub.s32 %s8, %s15
    %p69 = scmp.eq.s32.totalorder %s68, 0
    %s71 = sadd.s32 %s70, 1
    %s72 = scalar_select %p69, %s70, %s71
    %p75 = pneg %p69
    %p76 = scmp.eq.s32.totalorder %s8, 1
    %p77 = por %p75, %p76
    %p78 = scmp.ne.s32.totalorder %s70, %s73
    %p79 = scmp.eq.s32.totalorder %s8, 0
    %p80 = por %p78, %p79
    %p81 = scmp.ne.s32.totalorder %s70, %s73
    %p82 = scmp.eq.s32.totalorder %s13, 1
    %p83 = por %p81, %p82
    %p84 = scmp.ne.s32.totalorder %s73, %s74
    %p85 = scmp.eq.s32.totalorder %s13, 0
    %p86 = por %p84, %p85
    %p87 = scmp.ne.s32.totalorder %s73, %s74
    %p88 = scmp.eq.s32.totalorder %s14, 1
    %p89 = por %p87, %p88
    %p91 = scmp.ne.s32.totalorder %s74, %s90
    %p92 = scmp.eq.s32.totalorder %s14, 0
    %p93 = por %p91, %p92
    %p94 = scmp.le.s32.totalorder 1, %s8
    %p95 = scmp.lt.s32.totalorder %s8, 3
    %p96 = pnand %p94, %p95
    %p97 = pneg %p96
    // Predicated region
    $region9: #{transformer_forward.40} parent=5 // pred_check
      _
    $region10: #{transformer_forward.40} parent=5 // pred_check_branch
      %99 = sbr.rel (%p96) target = $region12
    $region11: #{transformer_forward.40} parent=5 // pred_region
      %s100 = ssub.s32 %s8, 1
    $region12: #{transformer_forward.40} parent=5 // pred_fallthru
      _
    %p101 = scmp.lt.s32.totalorder %s8, 2
    // Predicated region
    $region13: #{transformer_forward.40} parent=5 // pred_check
      %p102 = pneg %p101
    $region14: #{transformer_forward.40} parent=5 // pred_check_branch
      %104 = sbr.rel (%p102) target = $region16
    $region15: #{transformer_forward.40} parent=5 // pred_region
      // Predicated region
      $region17: #{transformer_forward.40} parent=15 // pred_check
        %p105 = pneg %p28
      $region18: #{transformer_forward.40} parent=15 // pred_check_branch
        %107 = sbr.rel (%p105) target = $region20
      $region19: #{transformer_forward.40} parent=15 // pred_region
        %p108 = scmp.lt.s32.totalorder %s8, 1
        %s109 = scalar_select %p108, %s8, 1
        %s110 = smul.addr %s109, 4
        %s111 = scalar_lea.vmem %s0, %s110
      $region20: #{transformer_forward.40} parent=15 // pred_fallthru
        _
      // Predicated region
      $region21: #{transformer_forward.40} parent=15 // pred_check
        %p112 = pneg %p54
      $region22: #{transformer_forward.40} parent=15 // pred_check_branch
        %114 = sbr.rel (%p112) target = $region24
      $region23: #{transformer_forward.40} parent=15 // pred_region
        %p115 = scmp.lt.s32.totalorder %s8, 1
        %s116 = scalar_select %p115, %s8, 1
        %s117 = scalar_lea.vmem %s1, %s116
      $region24: #{transformer_forward.40} parent=15 // pred_fallthru
        _
    $region16: #{transformer_forward.40} parent=5 // pred_fallthru
      _
    %p118 = scmp.le.s32.totalorder 1, %s8
    %p119 = scmp.lt.s32.totalorder %s8, 3
    %p120 = pnand %p118, %p119
    %p121 = pneg %p120
    // Predicated region
    $region25: #{transformer_forward.40} parent=5 // pred_check
      _
    $region26: #{transformer_forward.40} parent=5 // pred_check_branch
      %123 = sbr.rel (%p120) target = $region28
    $region27: #{transformer_forward.40} parent=5 // pred_region
      %s124 = ssub.s32 %s8, 1
      %p125 = scmp.lt.s32.totalorder %s13, 1
      %s126 = scalar_select %p125, %s13, 1
      %s127 = smul.addr %s126, 4
      %s128 = scalar_lea.vmem %s0, %s127
      %p129 = pneg %p34
      %p130 = pneg %p31
      %p131 = scmp.lt.s32.totalorder %s13, 1
      %s132 = scalar_select %p131, %s13, 1
      %s133 = scalar_lea.vmem %s1, %s132
      %p134 = pneg %p60
      %p135 = pneg %p57
      %p136 = pneg %p86
      %p137 = pneg %p83
      %p138 = scmp.lt.s32.totalorder %s13, 1
      %s139 = scalar_select %p138, %s13, 1
      %s140 = smul.addr %s139, 4
      %s141 = scalar_lea.vmem %s2, %s140
      %p142 = scmp.lt.s32.totalorder %s13, 1
      %s143 = scalar_select %p142, %s13, 1
      %s144 = smul.addr %s143, 4
      %s145 = scalar_lea.vmem %s0, %s144
      %p146 = scmp.lt.s32.totalorder %s13, 1
      %s147 = scalar_select %p146, %s13, 1
      %s148 = scalar_lea.vmem %s1, %s147
      %p149 = scmp.lt.s32.totalorder %s13, 1
      %s150 = scalar_select %p149, %s13, 1
      %s151 = smul.addr %s150, 4
      %s152 = scalar_lea.vmem %s2, %s151
      %v154 = vld [vmem:[%s145] sm:$0xf]
      %v155 = vld [vmem:[%s148] sm:$0x1]
      %vm156 = vcmp.ne.f32.partialorder %v155, 0.0
      %v157 = vlaneseq
      %v158 = vshrl.u32 %v157, 7
      %v159 = vlaneseq
      %v160 = vand.u32 %v159, 127
      %vm161 = vcmp.le.s32.totalorder %v160, %v158
      %v162 = vsel %vm156, 1, 0
      %v163 = vlaneseq
      %v164 = vshrl.u32 %v163, 7
      %v165 = vsub.s32 0, %v164
      %v166 = vrot.slane %v162, %v165
      %vm167 = vcmp.eq.s32.totalorder %v166, 1
      %vm168 = vmand %vm167, %vm161
      %v170 = vunpack.c.l.b16 %v154
      %v171 = vpack.c.b16 %v170, %v170
      %172 = vrot.lane.b32.xlu0 %v171, 96
      %v173 = vpop.permute.xlu0 %172
      %vm174 = vcmask 130048
      %v176 = vsel %vm174, %v154, 0
      %v179 = vsel %vm174, %v173, 0
      %181 = vmatprep.subr.bf16.mxu0 0
      %182 = vmatpush1.bf16.xpose.msra.mxu0 %v179
      %183 = vmatprep.subr.bf16.mxu0 0
      %184 = vmatpush1.bf16.xpose.msra.mxu0 0
      %185 = vmatprep.subr.bf16.mxu0 0
      %186 = vmatpush1.bf16.xpose.msra.mxu0 0
      %187 = vmatprep.subr.bf16.mxu0 0
      %188 = vmatpush1.bf16.xpose.msra.mxu0 0
      %189 = vmatprep.subr.bf16.mxu0 0
      %190 = vmatpush1.bf16.xpose.msra.mxu0 0
      %191 = vmatprep.subr.bf16.mxu0 0
      %192 = vmatpush1.bf16.xpose.msra.mxu0 0
      %193 = vmatprep.subr.bf16.mxu0 0
      %194 = vmatpush1.bf16.xpose.msra.mxu0 0
      %195 = vmatprep.subr.bf16.mxu0 0
      %196 = vmatpush1.bf16.xpose.msra.mxu0 0
      %197 = vmatprep.subr.bf16.mxu0 0
      %198 = vmatpush1.bf16.xpose.msra.mxu0 0
      %199 = vmatprep.subr.bf16.mxu0 0
      %200 = vmatpush1.bf16.xpose.msra.mxu0 0
      %201 = vmatprep.subr.bf16.mxu0 0
      %202 = vmatpush1.bf16.xpose.msra.mxu0 0
      %203 = vmatprep.subr.bf16.mxu0 0
      %204 = vmatpush1.bf16.xpose.msra.mxu0 0
      %205 = vmatprep.subr.bf16.mxu0 0
      %206 = vmatpush1.bf16.xpose.msra.mxu0 0
      %207 = vmatprep.subr.bf16.mxu0 0
      %208 = vmatpush1.bf16.xpose.msra.mxu0 0
      %209 = vmatprep.subr.bf16.mxu0 0
      %210 = vmatpush1.bf16.xpose.msra.mxu0 0
      %211 = vmatprep.subr.bf16.mxu0 0
      %212 = vmatpush1.bf16.xpose.msra.mxu0 0
      %213 = vmatprep.mubr.bf16.mxu0 0
      %214 = vmatmul.mubr.bf16.gmra.mrb[0].mxu0 %v176
      %v215 = vpop.f32.mrb[0].mxu0
      %v216 = vadd.f32 0.0, %v215
      %v217 = vpop.f32.mrb[0].mxu0
      %v218 = vpop.f32.mrb[0].mxu0
      %v219 = vpop.f32.mrb[0].mxu0
      %220 = vdwg.mxu0
      %v221 = vsel %vm168, %v216, -1e+20
      %v222 = vmul.f32 %v221, 0.25
      %vm223 = vcmask 64512
      %v224 = vsel %vm223, %v222, -inf
      %225 = vmax.xlane.f32.xlu0 %v224
      %v226 = vpop.xlane.xlu0 %225
      %v227 = vsub.f32 %v222, %v226
      %v228 = vmul.f32 %v227, 1.442695
      %v229 = vpow.pop %v228
      %v230 = vsel %vm223, %v229, 0.0
      %231 = vadd.xlane.f32.xlu0 %v230
      %v232 = vpop.xlane.xlu0 %231
      %v233 = vrcp.pop %v232
      %v234 = vmul.f32 %v229, %v233
      %v235 = vpack.c.bf16 %v234, %v234
      %236 = vrot.lane.b32.xlu0 %v171, 64
      %v237 = vpop.permute.xlu0 %236
      %v239 = vsel %vm223, %v235, 0
      %vm241 = vcmask 1043456
      %v243 = vsel %vm241, %v237, 0
      %245 = vmatprep.subr.bf16.mxu0 0
      %246 = vmatpush1.bf16.msra.mxu0 %v243
      %247 = vmatprep.subr.bf16.mxu0 0
      %248 = vmatpush1.bf16.msra.mxu0 0
      %249 = vmatprep.subr.bf16.mxu0 0
      %250 = vmatpush1.bf16.msra.mxu0 0
      %251 = vmatprep.subr.bf16.mxu0 0
      %252 = vmatpush1.bf16.msra.mxu0 0
      %253 = vmatprep.subr.bf16.mxu0 0
      %254 = vmatpush1.bf16.msra.mxu0 0
      %255 = vmatprep.subr.bf16.mxu0 0
      %256 = vmatpush1.bf16.msra.mxu0 0
      %257 = vmatprep.subr.bf16.mxu0 0
      %258 = vmatpush1.bf16.msra.mxu0 0
      %259 = vmatprep.subr.bf16.mxu0 0
      %260 = vmatpush1.bf16.msra.mxu0 0
      %261 = vmatprep.subr.bf16.mxu0 0
      %262 = vmatpush1.bf16.msra.mxu0 0
      %263 = vmatprep.subr.bf16.mxu0 0
      %264 = vmatpush1.bf16.msra.mxu0 0
      %265 = vmatprep.subr.bf16.mxu0 0
      %266 = vmatpush1.bf16.msra.mxu0 0
      %267 = vmatprep.subr.bf16.mxu0 0
      %268 = vmatpush1.bf16.msra.mxu0 0
      %269 = vmatprep.subr.bf16.mxu0 0
      %270 = vmatpush1.bf16.msra.mxu0 0
      %271 = vmatprep.subr.bf16.mxu0 0
      %272 = vmatpush1.bf16.msra.mxu0 0
      %273 = vmatprep.subr.bf16.mxu0 0
      %274 = vmatpush1.bf16.msra.mxu0 0
      %275 = vmatprep.subr.bf16.mxu0 0
      %276 = vmatpush1.bf16.msra.mxu0 0
      %277 = vmatprep.mubr.bf16.mxu0 0
      %278 = vmatmul.mubr.bf16.gmra.mrb[0].mxu0 %v239
      %v279 = vpop.f32.mrb[0].mxu0
      %v280 = vadd.f32 0.0, %v279
      %v281 = vpop.f32.mrb[0].mxu0
      %v282 = vpop.f32.mrb[0].mxu0
      %v283 = vpop.f32.mrb[0].mxu0
      %284 = vdwg.mxu0
      %285 = vrot.lane.b32.xlu0 %v171, 112
      %v286 = vpop.permute.xlu0 %285
      %287 = vrot.lane.b32.xlu0 %v171, 80
      %v288 = vpop.permute.xlu0 %287
      %v290 = vsel %vm174, %v286, 0
      %v293 = vsel %vm174, %v288, 0
      %295 = vmatprep.subr.bf16.mxu0 0
      %296 = vmatpush1.bf16.xpose.msra.mxu0 %v293
      %297 = vmatprep.subr.bf16.mxu0 0
      %298 = vmatpush1.bf16.xpose.msra.mxu0 0
      %299 = vmatprep.subr.bf16.mxu0 0
      %300 = vmatpush1.bf16.xpose.msra.mxu0 0
      %301 = vmatprep.subr.bf16.mxu0 0
      %302 = vmatpush1.bf16.xpose.msra.mxu0 0
      %303 = vmatprep.subr.bf16.mxu0 0
      %304 = vmatpush1.bf16.xpose.msra.mxu0 0
      %305 = vmatprep.subr.bf16.mxu0 0
      %306 = vmatpush1.bf16.xpose.msra.mxu0 0
      %307 = vmatprep.subr.bf16.mxu0 0
      %308 = vmatpush1.bf16.xpose.msra.mxu0 0
      %309 = vmatprep.subr.bf16.mxu0 0
      %310 = vmatpush1.bf16.xpose.msra.mxu0 0
      %311 = vmatprep.subr.bf16.mxu0 0
      %312 = vmatpush1.bf16.xpose.msra.mxu0 0
      %313 = vmatprep.subr.bf16.mxu0 0
      %314 = vmatpush1.bf16.xpose.msra.mxu0 0
      %315 = vmatprep.subr.bf16.mxu0 0
      %316 = vmatpush1.bf16.xpose.msra.mxu0 0
      %317 = vmatprep.subr.bf16.mxu0 0
      %318 = vmatpush1.bf16.xpose.msra.mxu0 0
      %319 = vmatprep.subr.bf16.mxu0 0
      %320 = vmatpush1.bf16.xpose.msra.mxu0 0
      %321 = vmatprep.subr.bf16.mxu0 0
      %322 = vmatpush1.bf16.xpose.msra.mxu0 0
      %323 = vmatprep.subr.bf16.mxu0 0
      %324 = vmatpush1.bf16.xpose.msra.mxu0 0
      %325 = vmatprep.subr.bf16.mxu0 0
      %326 = vmatpush1.bf16.xpose.msra.mxu0 0
      %327 = vmatprep.mubr.bf16.mxu0 0
      %328 = vmatmul.mubr.bf16.gmra.mrb[0].mxu0 %v290
      %v329 = vpop.f32.mrb[0].mxu0
      %v330 = vadd.f32 0.0, %v329
      %v331 = vpop.f32.mrb[0].mxu0
      %v332 = vpop.f32.mrb[0].mxu0
      %v333 = vpop.f32.mrb[0].mxu0
      %334 = vdwg.mxu0
      %v335 = vsel %vm168, %v330, -1e+20
      %v336 = vmul.f32 %v335, 0.25
      %v337 = vsel %vm223, %v336, -inf
      %338 = vmax.xlane.f32.xlu0 %v337
      %v339 = vpop.xlane.xlu0 %338
      %v340 = vsub.f32 %v336, %v339
      %v341 = vmul.f32 %v340, 1.442695
      %v342 = vpow.pop %v341
      %v343 = vsel %vm223, %v342, 0.0
      %344 = vadd.xlane.f32.xlu0 %v343
      %v345 = vpop.xlane.xlu0 %344
      %v346 = vrcp.pop %v345
      %v347 = vmul.f32 %v342, %v346
      %v348 = vpack.c.bf16 %v347, %v347
      %349 = vrot.lane.b32.xlu0 %v171, 48
      %v350 = vpop.permute.xlu0 %349
      %v352 = vsel %vm223, %v348, 0
      %v355 = vsel %vm241, %v350, 0
      %357 = vmatprep.subr.bf16.mxu0 0
      %358 = vmatpush1.bf16.msra.mxu0 %v355
      %359 = vmatprep.subr.bf16.mxu0 0
      %360 = vmatpush1.bf16.msra.mxu0 0
      %361 = vmatprep.subr.bf16.mxu0 0
      %362 = vmatpush1.bf16.msra.mxu0 0
      %363 = vmatprep.subr.bf16.mxu0 0
      %364 = vmatpush1.bf16.msra.mxu0 0
      %365 = vmatprep.subr.bf16.mxu0 0
      %366 = vmatpush1.bf16.msra.mxu0 0
      %367 = vmatprep.subr.bf16.mxu0 0
      %368 = vmatpush1.bf16.msra.mxu0 0
      %369 = vmatprep.subr.bf16.mxu0 0
      %370 = vmatpush1.bf16.msra.mxu0 0
      %371 = vmatprep.subr.bf16.mxu0 0
      %372 = vmatpush1.bf16.msra.mxu0 0
      %373 = vmatprep.subr.bf16.mxu0 0
      %374 = vmatpush1.bf16.msra.mxu0 0
      %375 = vmatprep.subr.bf16.mxu0 0
      %376 = vmatpush1.bf16.msra.mxu0 0
      %377 = vmatprep.subr.bf16.mxu0 0
      %378 = vmatpush1.bf16.msra.mxu0 0
      %379 = vmatprep.subr.bf16.mxu0 0
      %380 = vmatpush1.bf16.msra.mxu0 0
      %381 = vmatprep.subr.bf16.mxu0 0
      %382 = vmatpush1.bf16.msra.mxu0 0
      %383 = vmatprep.subr.bf16.mxu0 0
      %384 = vmatpush1.bf16.msra.mxu0 0
      %385 = vmatprep.subr.bf16.mxu0 0
      %386 = vmatpush1.bf16.msra.mxu0 0
      %387 = vmatprep.subr.bf16.mxu0 0
      %388 = vmatpush1.bf16.msra.mxu0 0
      %389 = vmatprep.mubr.bf16.mxu0 0
      %390 = vmatmul.mubr.bf16.gmra.mrb[0].mxu0 %v352
      %v391 = vpop.f32.mrb[0].mxu0
      %v392 = vadd.f32 0.0, %v391
      %v393 = vpop.f32.mrb[0].mxu0
      %v394 = vpop.f32.mrb[0].mxu0
      %v395 = vpop.f32.mrb[0].mxu0
      %396 = vdwg.mxu0
      %398 = vrot.lane.b32.xlu0 %v392, 16
      %v399 = vpop.permute.xlu0 %398
      %v401 = vsel %vm174, %v280, %v399
      %v402 = vpack.c.bf16 %v401, %v401
      %vm403 = vcmask 257024
      %404 = vst.msk [vmem:[%s152] sm:$0xf] %vm403, %v402
      %p405 = scmp.lt.s32.totalorder %s13, 1
      %s406 = scalar_select %p405, %s13, 1
      %s407 = smul.addr %s406, 4
      %s408 = scalar_lea.vmem %s2, %s407
      // Predicated region
      $region29: #{transformer_forward.40} parent=27 // pred_check
        %p409 = pneg %p83
      $region30: #{transformer_forward.40} parent=27 // pred_check_branch
        %411 = sbr.rel (%p409) target = $region32
      $region31: #{transformer_forward.40} parent=27 // pred_region
        _
      $region32: #{transformer_forward.40} parent=27 // pred_fallthru
        _
    $region28: #{transformer_forward.40} parent=5 // pred_fallthru
      _
    %p412 = scmp.le.s32.totalorder 2, %s8
    // Predicated region
    $region33: #{transformer_forward.40} parent=5 // pred_check
      %p413 = pneg %p412
    $region34: #{transformer_forward.40} parent=5 // pred_check_branch
      %415 = sbr.rel (%p413) target = $region36
    $region35: #{transformer_forward.40} parent=5 // pred_region
      %s416 = ssub.s32 %s8, 2
      // Predicated region
      $region37: #{transformer_forward.40} parent=35 // pred_check
        %p417 = pneg %p89
      $region38: #{transformer_forward.40} parent=35 // pred_check_branch
        %419 = sbr.rel (%p417) target = $region40
      $region39: #{transformer_forward.40} parent=35 // pred_region
        %p420 = scmp.lt.s32.totalorder %s14, 1
        %s421 = scalar_select %p420, %s14, 1
        %s422 = smul.addr %s421, 4
        %s423 = scalar_lea.vmem %s2, %s422
      $region40: #{transformer_forward.40} parent=35 // pred_fallthru
        _
    $region36: #{transformer_forward.40} parent=5 // pred_fallthru
      _
  $region6: #{transformer_forward.40} parent=0 // loop_footer
    %s12 = sadd.s32 1, %s8
  $region7: #{transformer_forward.40} parent=0 // loop_footer_branch
    %7 = sbr.rel target = $region3
  $region8: #{transformer_forward.40} parent=0 // loop_exit
    _

// kernel: transformer_forward.41
$region0: #{transformer_forward.41}
  #allocation0 [shape = 'u32[]', space=smem, size = 0x4, offset = 0x4, fixed_abs, tag = 'smem constant byte address 0x4 - core index']
  #allocation1 [shape = 'u32[144,128]{1,0:T(1,128)}', space=vmem, size = 0x12000, scoped, tag = 'internal scratch']
  #allocation2 [shape = 'f32[16,32]{1,0:T(8,128)}', space=vmem, size = 0x2000, scoped, tag = 'scratch operand']
  %s0 = inlined_call_operand.vmem [shape: bf16[16,32], index: 0, kind: input, shape index: {}]
  %s1 = inlined_call_operand.vmem [shape: bf16[32,32], index: 1, kind: input, shape index: {}]
  %s2 = inlined_call_operand.vmem [shape: f32[1,32], index: 2, kind: input, shape index: {}]
  %s3 = inlined_call_operand.vmem [shape: bf16[16,32], index: 3, kind: input, shape index: {}]
  %s4 = inlined_call_operand.vmem [shape: f32[1,32], index: 4, kind: input, shape index: {}]
  %s5 = inlined_call_operand.vmem [shape: f32[1,32], index: 5, kind: input, shape index: {}]
  %s6 = inlined_call_operand.vmem [shape: bf16[16,32], index: 6, kind: output, shape index: {}]
  %s7 = sld [smem:[#allocation0]]
  $region42: #{transformer_forward.41} parent=0
    _
  %s9 = ssub.s32 1, %s7
  %s10 = scalar_select 0, %s9, %s7
  // Predicated region
  $region2: #{transformer_forward.41} parent=0 // pred_check
    _
  $region3: #{transformer_forward.41} parent=0 // pred_check_branch
    %12 = sbr.rel (0) target = $region5
  $region4: #{transformer_forward.41} parent=0 // pred_region
    _
  $region5: #{transformer_forward.41} parent=0 // pred_fallthru
    _
  // Predicated region
  $region6: #{transformer_forward.41} parent=0 // pred_check
    _
  $region7: #{transformer_forward.41} parent=0 // pred_check_branch
    %14 = sbr.rel (0) target = $region9
  $region8: #{transformer_forward.41} parent=0 // pred_region
    _
  $region9: #{transformer_forward.41} parent=0 // pred_fallthru
    _
  // Predicated region
  $region10: #{transformer_forward.41} parent=0 // pred_check
    _
  $region11: #{transformer_forward.41} parent=0 // pred_check_branch
    %16 = sbr.rel (0) target = $region13
  $region12: #{transformer_forward.41} parent=0 // pred_region
    _
  $region13: #{transformer_forward.41} parent=0 // pred_fallthru
    _
  // Predicated region
  $region14: #{transformer_forward.41} parent=0 // pred_check
    _
  $region15: #{transformer_forward.41} parent=0 // pred_check_branch
    %18 = sbr.rel (0) target = $region17
  $region16: #{transformer_forward.41} parent=0 // pred_region
    _
  $region17: #{transformer_forward.41} parent=0 // pred_fallthru
    _
  // Predicated region
  $region18: #{transformer_forward.41} parent=0 // pred_check
    _
  $region19: #{transformer_forward.41} parent=0 // pred_check_branch
    %20 = sbr.rel (0) target = $region21
  $region20: #{transformer_forward.41} parent=0 // pred_region
    _
  $region21: #{transformer_forward.41} parent=0 // pred_fallthru
    _
  // Predicated region
  $region22: #{transformer_forward.41} parent=0 // pred_check
    _
  $region23: #{transformer_forward.41} parent=0 // pred_check_branch
    %22 = sbr.rel (0) target = $region25
  $region24: #{transformer_forward.41} parent=0 // pred_region
    _
  $region25: #{transformer_forward.41} parent=0 // pred_fallthru
    _
  %p24 = scmp.eq.s32.totalorder 0, 0
  // Predicated region
  $region26: #{transformer_forward.41} parent=0 // pred_check
    %p25 = pneg %p24
  $region27: #{transformer_forward.41} parent=0 // pred_check_branch
    %27 = sbr.rel (%p25) target = $region29
  $region28: #{transformer_forward.41} parent=0 // pred_region
    %vm28 = vcmask 261120
    %29 = vst.msk [vmem:[#allocation2] sm:$0xff] %vm28, 0.0
    %30 = vst.msk [vmem:[#allocation2 + $0x8] sm:$0xff] %vm28, 0.0
  $region29: #{transformer_forward.41} parent=0 // pred_fallthru
    _
  %v31 = vld [vmem:[#allocation2] sm:$0xff]
  %v32 = vld [vmem:[#allocation2 + $0x8] sm:$0xff]
  %v33 = vld [vmem:[%s0] sm:$0xf]
  %v34 = vld [vmem:[%s0 + $0x4] sm:$0xf]
  %v35 = vld [vmem:[%s1] sm:$0xf]
  %v36 = vld [vmem:[%s1 + $0x4] sm:$0xf]
  %v37 = vld [vmem:[%s1 + $0x8] sm:$0xf]
  %v38 = vld [vmem:[%s1 + $0xc] sm:$0xf]
  %v41 = vunpack.c.l.b16 %v33
  %v42 = vunpack.c.l.b16 %v34
  %v43 = vpack.c.b16 %v42, %v41
  %v48 = vunpack.c.l.b16 %v35
  %v49 = vunpack.c.l.b16 %v36
  %v50 = vunpack.c.l.b16 %v37
  %v51 = vunpack.c.l.b16 %v38
  %v52 = vpack.c.b16 %v49, %v48
  %v53 = vpack.c.b16 %v51, %v50
  %vm56 = vcmask 261120
  %v58 = vsel %vm56, %v43, 0
  %60 = vmatprep.subr.bf16.mxu0 0
  %61 = vmatpush1.bf16.msra.mxu0 %v52
  %62 = vmatprep.subr.bf16.mxu0 0
  %63 = vmatpush1.bf16.msra.mxu0 %v53
  %64 = vmatprep.subr.bf16.mxu0 0
  %65 = vmatpush1.bf16.msra.mxu0 0
  %66 = vmatprep.subr.bf16.mxu0 0
  %67 = vmatpush1.bf16.msra.mxu0 0
  %68 = vmatprep.subr.bf16.mxu0 0
  %69 = vmatpush1.bf16.msra.mxu0 0
  %70 = vmatprep.subr.bf16.mxu0 0
  %71 = vmatpush1.bf16.msra.mxu0 0
  %72 = vmatprep.subr.bf16.mxu0 0
  %73 = vmatpush1.bf16.msra.mxu0 0
  %74 = vmatprep.subr.bf16.mxu0 0
  %75 = vmatpush1.bf16.msra.mxu0 0
  %76 = vmatprep.subr.bf16.mxu0 0
  %77 = vmatpush1.bf16.msra.mxu0 0
  %78 = vmatprep.subr.bf16.mxu0 0
  %79 = vmatpush1.bf16.msra.mxu0 0
  %80 = vmatprep.subr.bf16.mxu0 0
  %81 = vmatpush1.bf16.msra.mxu0 0
  %82 = vmatprep.subr.bf16.mxu0 0
  %83 = vmatpush1.bf16.msra.mxu0 0
  %84 = vmatprep.subr.bf16.mxu0 0
  %85 = vmatpush1.bf16.msra.mxu0 0
  %86 = vmatprep.subr.bf16.mxu0 0
  %87 = vmatpush1.bf16.msra.mxu0 0
  %88 = vmatprep.subr.bf16.mxu0 0
  %89 = vmatpush1.bf16.msra.mxu0 0
  %90 = vmatprep.subr.bf16.mxu0 0
  %91 = vmatpush1.bf16.msra.mxu0 0
  %92 = vmatprep.mubr.bf16.mxu0 0
  %93 = vmatmul.mubr.bf16.gmra.mrb[0].mxu0 %v58
  %v94 = vpop.f32.mrb[0].mxu0
  %v95 = vadd.f32 0.0, %v94
  %v96 = vpop.f32.mrb[0].mxu0
  %v97 = vpop.f32.mrb[0].mxu0
  %v98 = vadd.f32 0.0, %v97
  %v99 = vpop.f32.mrb[0].mxu0
  %100 = vdwg.mxu0
  %v101 = vadd.f32 %v31, %v95
  %v102 = vadd.f32 %v32, %v98
  %103 = vst.msk [vmem:[#allocation2] sm:$0xff] %vm56, %v101
  %104 = vst.msk [vmem:[#allocation2 + $0x8] sm:$0xff] %vm56, %v102
  // Predicated region
  $region30: #{transformer_forward.41} parent=0 // pred_check
    %p105 = pneg %p24
  $region31: #{transformer_forward.41} parent=0 // pred_check_branch
    %107 = sbr.rel (%p105) target = $region33
  $region32: #{transformer_forward.41} parent=0 // pred_region
    %v108 = vld [vmem:[#allocation2] sm:$0xff]
    %v109 = vld [vmem:[#allocation2 + $0x8] sm:$0xff]
    %v110 = vld [vmem:[%s2] sm:$0x1]
    %v112 = vlaneseq
    %v113 = vshrl.u32 %v112, 7
    %v114 = vsub.s32 0, %v113
    %v115 = vrot.slane %v110, %v114
    %v117 = vadd.f32 %v108, %v115
    %v118 = vadd.f32 %v109, %v115
    %v119 = vld [vmem:[%s3] sm:$0xf]
    %v120 = vld [vmem:[%s3 + $0x4] sm:$0xf]
    %v121 = vunpack.c.l.bf16 %v119
    %v122 = vunpack.c.l.bf16 %v120
    %v123 = vadd.f32 %v117, %v121
    %v124 = vadd.f32 %v118, %v122
    %v125 = vsel %vm56, %v123, 0.0
    %126 = vadd.xlane.f32.xlu0 %v125
    %v127 = vpop.xlane.xlu0 %126
    %v128 = vsel %vm56, %v124, 0.0
    %129 = vadd.xlane.f32.xlu0 %v128
    %v130 = vpop.xlane.xlu0 %129
    %v131 = vrcp.pop 32.0
    %v132 = vmul.f32 %v127, %v131
    %v133 = vmul.f32 %v130, %v131
    %v134 = vsub.f32 %v123, %v132
    %v135 = vsub.f32 %v124, %v133
    %v136 = vmul.f32 %v134, %v134
    %v137 = vmul.f32 %v135, %v135
    %v138 = vsel %vm56, %v136, 0.0
    %139 = vadd.xlane.f32.xlu0 %v138
    %v140 = vpop.xlane.xlu0 %139
    %v141 = vsel %vm56, %v137, 0.0
    %142 = vadd.xlane.f32.xlu0 %v141
    %v143 = vpop.xlane.xlu0 %142
    %v144 = vmul.f32 %v140, %v131
    %v145 = vmul.f32 %v143, %v131
    %v146 = vadd.f32 %v144, 1e-05
    %v147 = vadd.f32 %v145, 1e-05
    %v148 = vrsqrt.pop %v146
    %v149 = vrsqrt.pop %v147
    %v150 = vmul.f32 %v134, %v148
    %v151 = vmul.f32 %v135, %v149
    %v152 = vld [vmem:[%s4] sm:$0x1]
    %v154 = vlaneseq
    %v155 = vshrl.u32 %v154, 7
    %v156 = vsub.s32 0, %v155
    %v157 = vrot.slane %v152, %v156
    %v159 = vmul.f32 %v150, %v157
    %v160 = vmul.f32 %v151, %v157
    %v161 = vld [vmem:[%s5] sm:$0x1]
    %v163 = vlaneseq
    %v164 = vshrl.u32 %v163, 7
    %v165 = vsub.s32 0, %v164
    %v166 = vrot.slane %v161, %v165
    %v168 = vadd.f32 %v159, %v166
    %v169 = vadd.f32 %v160, %v166
    %v170 = vpack.c.bf16 %v169, %v168
    %v172 = vunpack.c.l.b16 %v170
    %v173 = vunpack.c.h.b16 %v170
    %v174 = vpack.c.b16 %v172, %v172
    %v175 = vpack.c.b16 %v173, %v173
    %vm178 = vcmask 257024
    %179 = vst.msk [vmem:[%s6] sm:$0xf] %vm178, %v174
    %180 = vst.msk [vmem:[%s6 + $0x4] sm:$0xf] %vm178, %v175
  $region33: #{transformer_forward.41} parent=0 // pred_fallthru
    _
  // Predicated region
  $region34: #{transformer_forward.41} parent=0 // pred_check
    _
  $region35: #{transformer_forward.41} parent=0 // pred_check_branch
    %182 = sbr.rel (0) target = $region37
  $region36: #{transformer_forward.41} parent=0 // pred_region
    _
  $region37: #{transformer_forward.41} parent=0 // pred_fallthru
    _
  // Predicated region
  $region38: #{transformer_forward.41} parent=0 // pred_check
    _
  $region39: #{transformer_forward.41} parent=0 // pred_check_branch
    %184 = sbr.rel (0) target = $region41
  $region40: #{transformer_forward.41} parent=0 // pred_region
    _
  $region41: #{transformer_forward.41} parent=0 // pred_fallthru
    _

// kernel: transformer_forward.39
$region0: #{transformer_forward.39}
  #allocation0 [shape = 'u32[]', space=smem, size = 0x4, offset = 0x4, fixed_abs, tag = 'smem constant byte address 0x4 - core index']
  #allocation1 [shape = 'u32[144,128]{1,0:T(1,128)}', space=vmem, size = 0x12000, scoped, tag = 'internal scratch']
  #allocation2 [shape = 'bf16[16,32]{1,0:T(16,128)(2,1)}', space=vmem, size = 0x1000, scoped, tag = 'scratch operand']
  %s0 = inlined_call_operand.vmem [shape: bf16[16,32], index: 0, kind: input, shape index: {}]
  %s1 = inlined_call_operand.vmem [shape: f32[1,32], index: 1, kind: input, shape index: {}]
  %s2 = inlined_call_operand.vmem [shape: f32[1,32], index: 2, kind: input, shape index: {}]
  %s3 = inlined_call_operand.vmem [shape: bf16[32,96], index: 3, kind: input, shape index: {}]
  %s4 = inlined_call_operand.vmem [shape: f32[1,96], index: 4, kind: input, shape index: {}]
  %s5 = inlined_call_operand.vmem [shape: bf16[16,96], index: 5, kind: output, shape index: {}]
  %s6 = sld [smem:[#allocation0]]
  $region34: #{transformer_forward.39} parent=0
    _
  %s8 = ssub.s32 1, %s6
  %s9 = scalar_select 0, %s8, %s6
  // Predicated region
  $region2: #{transformer_forward.39} parent=0 // pred_check
    _
  $region3: #{transformer_forward.39} parent=0 // pred_check_branch
    %11 = sbr.rel (0) target = $region5
  $region4: #{transformer_forward.39} parent=0 // pred_region
    _
  $region5: #{transformer_forward.39} parent=0 // pred_fallthru
    _
  // Predicated region
  $region6: #{transformer_forward.39} parent=0 // pred_check
    _
  $region7: #{transformer_forward.39} parent=0 // pred_check_branch
    %13 = sbr.rel (0) target = $region9
  $region8: #{transformer_forward.39} parent=0 // pred_region
    _
  $region9: #{transformer_forward.39} parent=0 // pred_fallthru
    _
  // Predicated region
  $region10: #{transformer_forward.39} parent=0 // pred_check
    _
  $region11: #{transformer_forward.39} parent=0 // pred_check_branch
    %15 = sbr.rel (0) target = $region13
  $region12: #{transformer_forward.39} parent=0 // pred_region
    _
  $region13: #{transformer_forward.39} parent=0 // pred_fallthru
    _
  // Predicated region
  $region14: #{transformer_forward.39} parent=0 // pred_check
    _
  $region15: #{transformer_forward.39} parent=0 // pred_check_branch
    %17 = sbr.rel (0) target = $region17
  $region16: #{transformer_forward.39} parent=0 // pred_region
    _
  $region17: #{transformer_forward.39} parent=0 // pred_fallthru
    _
  // Predicated region
  $region18: #{transformer_forward.39} parent=0 // pred_check
    _
  $region19: #{transformer_forward.39} parent=0 // pred_check_branch
    %19 = sbr.rel (0) target = $region21
  $region20: #{transformer_forward.39} parent=0 // pred_region
    _
  $region21: #{transformer_forward.39} parent=0 // pred_fallthru
    _
  %p21 = scmp.eq.s32.totalorder 0, 0
  // Predicated region
  $region22: #{transformer_forward.39} parent=0 // pred_check
    %p22 = pneg %p21
  $region23: #{transformer_forward.39} parent=0 // pred_check_branch
    %24 = sbr.rel (%p22) target = $region25
  $region24: #{transformer_forward.39} parent=0 // pred_region
    %v25 = vld [vmem:[%s0] sm:$0xf]
    %v26 = vld [vmem:[%s0 + $0x4] sm:$0xf]
    %v27 = vunpack.c.l.bf16 %v25
    %v28 = vunpack.c.l.bf16 %v26
    %vm29 = vcmask 261120
    %v30 = vsel %vm29, %v27, 0.0
    %31 = vadd.xlane.f32.xlu0 %v30
    %v32 = vpop.xlane.xlu0 %31
    %v33 = vsel %vm29, %v28, 0.0
    %34 = vadd.xlane.f32.xlu0 %v33
    %v35 = vpop.xlane.xlu0 %34
    %v36 = vrcp.pop 32.0
    %v37 = vmul.f32 %v32, %v36
    %v38 = vmul.f32 %v35, %v36
    %v39 = vsub.f32 %v27, %v37
    %v40 = vsub.f32 %v28, %v38
    %v41 = vmul.f32 %v39, %v39
    %v42 = vmul.f32 %v40, %v40
    %v43 = vsel %vm29, %v41, 0.0
    %44 = vadd.xlane.f32.xlu0 %v43
    %v45 = vpop.xlane.xlu0 %44
    %v46 = vsel %vm29, %v42, 0.0
    %47 = vadd.xlane.f32.xlu0 %v46
    %v48 = vpop.xlane.xlu0 %47
    %v49 = vmul.f32 %v45, %v36
    %v50 = vmul.f32 %v48, %v36
    %v51 = vadd.f32 %v49, 1e-05
    %v52 = vadd.f32 %v50, 1e-05
    %v53 = vrsqrt.pop %v51
    %v54 = vrsqrt.pop %v52
    %v55 = vmul.f32 %v39, %v53
    %v56 = vmul.f32 %v40, %v54
    %v57 = vld [vmem:[%s1] sm:$0x1]
    %v59 = vlaneseq
    %v60 = vshrl.u32 %v59, 7
    %v61 = vsub.s32 0, %v60
    %v62 = vrot.slane %v57, %v61
    %v64 = vmul.f32 %v55, %v62
    %v65 = vmul.f32 %v56, %v62
    %v66 = vld [vmem:[%s2] sm:$0x1]
    %v68 = vlaneseq
    %v69 = vshrl.u32 %v68, 7
    %v70 = vsub.s32 0, %v69
    %v71 = vrot.slane %v66, %v70
    %v73 = vadd.f32 %v64, %v71
    %v74 = vadd.f32 %v65, %v71
    %v75 = vpack.c.bf16 %v74, %v73
    %76 = vst.msk [vmem:[#allocation2] sm:$0xff] %vm29, %v75
  $region25: #{transformer_forward.39} parent=0 // pred_fallthru
    _
  %v77 = vld [vmem:[#allocation2] sm:$0xff]
  %v78 = vld [vmem:[%s3] sm:$0xf]
  %v79 = vld [vmem:[%s3 + $0x4] sm:$0xf]
  %v80 = vld [vmem:[%s3 + $0x8] sm:$0xf]
  %v81 = vld [vmem:[%s3 + $0xc] sm:$0xf]
  %v82 = vld [vmem:[%s4] sm:$0x1]
  %v84 = vlaneseq
  %v85 = vshrl.u32 %v84, 7
  %v86 = vsub.s32 0, %v85
  %v87 = vrot.slane %v82, %v86
  %v93 = vunpack.c.l.b16 %v78
  %v94 = vunpack.c.l.b16 %v79
  %v95 = vunpack.c.l.b16 %v80
  %v96 = vunpack.c.l.b16 %v81
  %v97 = vpack.c.b16 %v94, %v93
  %v98 = vpack.c.b16 %v96, %v95
  %vm101 = vcmask 261120
  %v103 = vsel %vm101, %v77, 0
  %105 = vmatprep.subr.bf16.mxu0 0
  %106 = vmatpush1.bf16.msra.mxu0 %v97
  %107 = vmatprep.subr.bf16.mxu0 0
  %108 = vmatpush1.bf16.msra.mxu0 %v98
  %109 = vmatprep.subr.bf16.mxu0 0
  %110 = vmatpush1.bf16.msra.mxu0 0
  %111 = vmatprep.subr.bf16.mxu0 0
  %112 = vmatpush1.bf16.msra.mxu0 0
  %113 = vmatprep.subr.bf16.mxu0 0
  %114 = vmatpush1.bf16.msra.mxu0 0
  %115 = vmatprep.subr.bf16.mxu0 0
  %116 = vmatpush1.bf16.msra.mxu0 0
  %117 = vmatprep.subr.bf16.mxu0 0
  %118 = vmatpush1.bf16.msra.mxu0 0
  %119 = vmatprep.subr.bf16.mxu0 0
  %120 = vmatpush1.bf16.msra.mxu0 0
  %121 = vmatprep.subr.bf16.mxu0 0
  %122 = vmatpush1.bf16.msra.mxu0 0
  %123 = vmatprep.subr.bf16.mxu0 0
  %124 = vmatpush1.bf16.msra.mxu0 0
  %125 = vmatprep.subr.bf16.mxu0 0
  %126 = vmatpush1.bf16.msra.mxu0 0
  %127 = vmatprep.subr.bf16.mxu0 0
  %128 = vmatpush1.bf16.msra.mxu0 0
  %129 = vmatprep.subr.bf16.mxu0 0
  %130 = vmatpush1.bf16.msra.mxu0 0
  %131 = vmatprep.subr.bf16.mxu0 0
  %132 = vmatpush1.bf16.msra.mxu0 0
  %133 = vmatprep.subr.bf16.mxu0 0
  %134 = vmatpush1.bf16.msra.mxu0 0
  %135 = vmatprep.subr.bf16.mxu0 0
  %136 = vmatpush1.bf16.msra.mxu0 0
  %137 = vmatprep.mubr.bf16.mxu0 0
  %138 = vmatmul.mubr.bf16.gmra.mrb[0].mxu0 %v103
  %v139 = vpop.f32.mrb[0].mxu0
  %v140 = vadd.f32 %v87, %v139
  %v141 = vpop.f32.mrb[0].mxu0
  %v142 = vpop.f32.mrb[0].mxu0
  %v143 = vadd.f32 %v87, %v142
  %v144 = vpop.f32.mrb[0].mxu0
  %145 = vdwg.mxu0
  %v146 = vpack.c.bf16 %v143, %v140
  %v148 = vunpack.c.l.b16 %v146
  %v149 = vunpack.c.h.b16 %v146
  %v150 = vpack.c.b16 %v148, %v148
  %v151 = vpack.c.b16 %v149, %v149
  %vm154 = vcmask 781312
  %155 = vst.msk [vmem:[%s5] sm:$0xf] %vm154, %v150
  %156 = vst.msk [vmem:[%s5 + $0x4] sm:$0xf] %vm154, %v151
  // Predicated region
  $region26: #{transformer_forward.39} parent=0 // pred_check
    _
  $region27: #{transformer_forward.39} parent=0 // pred_check_branch
    %158 = sbr.rel (0) target = $region29
  $region28: #{transformer_forward.39} parent=0 // pred_region
    _
  $region29: #{transformer_forward.39} parent=0 // pred_fallthru
    _
  // Predicated region
  $region30: #{transformer_forward.39} parent=0 // pred_check
    _
  $region31: #{transformer_forward.39} parent=0 // pred_check_branch
    %160 = sbr.rel (0) target = $region33
  $region32: #{transformer_forward.39} parent=0 // pred_region
    _
  $region33: #{transformer_forward.39} parent=0 // pred_fallthru
    _

// kernel: transformer_forward.42
$region0: #{transformer_forward.42}
  #allocation0 [shape = 'u32[]', space=smem, size = 0x4, offset = 0x4, fixed_abs, tag = 'smem constant byte address 0x4 - core index']
  #allocation1 [shape = 'u32[144,128]{1,0:T(1,128)}', space=vmem, size = 0x12000, scoped, tag = 'internal scratch']
  #allocation2 [shape = 'bf16[16,32]{1,0:T(16,128)(2,1)}', space=vmem, size = 0x1000, scoped, tag = 'scratch operand']
  %s0 = inlined_call_operand.vmem [shape: bf16[16,32], index: 0, kind: input, shape index: {}]
  %s1 = inlined_call_operand.vmem [shape: f32[1,32], index: 1, kind: input, shape index: {}]
  %s2 = inlined_call_operand.vmem [shape: f32[1,32], index: 2, kind: input, shape index: {}]
  %s3 = inlined_call_operand.vmem [shape: bf16[32,32], index: 3, kind: input, shape index: {}]
  %s4 = inlined_call_operand.vmem [shape: f32[1,32], index: 4, kind: input, shape index: {}]
  %s5 = inlined_call_operand.vmem [shape: bf16[16,32], index: 5, kind: output, shape index: {}]
  %s6 = sld [smem:[#allocation0]]
  $region34: #{transformer_forward.42} parent=0
    _
  %s8 = ssub.s32 1, %s6
  %s9 = scalar_select 0, %s8, %s6
  // Predicated region
  $region2: #{transformer_forward.42} parent=0 // pred_check
    _
  $region3: #{transformer_forward.42} parent=0 // pred_check_branch
    %11 = sbr.rel (0) target = $region5
  $region4: #{transformer_forward.42} parent=0 // pred_region
    _
  $region5: #{transformer_forward.42} parent=0 // pred_fallthru
    _
  // Predicated region
  $region6: #{transformer_forward.42} parent=0 // pred_check
    _
  $region7: #{transformer_forward.42} parent=0 // pred_check_branch
    %13 = sbr.rel (0) target = $region9
  $region8: #{transformer_forward.42} parent=0 // pred_region
    _
  $region9: #{transformer_forward.42} parent=0 // pred_fallthru
    _
  // Predicated region
  $region10: #{transformer_forward.42} parent=0 // pred_check
    _
  $region11: #{transformer_forward.42} parent=0 // pred_check_branch
    %15 = sbr.rel (0) target = $region13
  $region12: #{transformer_forward.42} parent=0 // pred_region
    _
  $region13: #{transformer_forward.42} parent=0 // pred_fallthru
    _
  // Predicated region
  $region14: #{transformer_forward.42} parent=0 // pred_check
    _
  $region15: #{transformer_forward.42} parent=0 // pred_check_branch
    %17 = sbr.rel (0) target = $region17
  $region16: #{transformer_forward.42} parent=0 // pred_region
    _
  $region17: #{transformer_forward.42} parent=0 // pred_fallthru
    _
  // Predicated region
  $region18: #{transformer_forward.42} parent=0 // pred_check
    _
  $region19: #{transformer_forward.42} parent=0 // pred_check_branch
    %19 = sbr.rel (0) target = $region21
  $region20: #{transformer_forward.42} parent=0 // pred_region
    _
  $region21: #{transformer_forward.42} parent=0 // pred_fallthru
    _
  %p21 = scmp.eq.s32.totalorder 0, 0
  // Predicated region
  $region22: #{transformer_forward.42} parent=0 // pred_check
    %p22 = pneg %p21
  $region23: #{transformer_forward.42} parent=0 // pred_check_branch
    %24 = sbr.rel (%p22) target = $region25
  $region24: #{transformer_forward.42} parent=0 // pred_region
    %v25 = vld [vmem:[%s0] sm:$0xf]
    %v26 = vld [vmem:[%s0 + $0x4] sm:$0xf]
    %v27 = vunpack.c.l.bf16 %v25
    %v28 = vunpack.c.l.bf16 %v26
    %vm29 = vcmask 261120
    %v30 = vsel %vm29, %v27, 0.0
    %31 = vadd.xlane.f32.xlu0 %v30
    %v32 = vpop.xlane.xlu0 %31
    %v33 = vsel %vm29, %v28, 0.0
    %34 = vadd.xlane.f32.xlu0 %v33
    %v35 = vpop.xlane.xlu0 %34
    %v36 = vrcp.pop 32.0
    %v37 = vmul.f32 %v32, %v36
    %v38 = vmul.f32 %v35, %v36
    %v39 = vsub.f32 %v27, %v37
    %v40 = vsub.f32 %v28, %v38
    %v41 = vmul.f32 %v39, %v39
    %v42 = vmul.f32 %v40, %v40
    %v43 = vsel %vm29, %v41, 0.0
    %44 = vadd.xlane.f32.xlu0 %v43
    %v45 = vpop.xlane.xlu0 %44
    %v46 = vsel %vm29, %v42, 0.0
    %47 = vadd.xlane.f32.xlu0 %v46
    %v48 = vpop.xlane.xlu0 %47
    %v49 = vmul.f32 %v45, %v36
    %v50 = vmul.f32 %v48, %v36
    %v51 = vadd.f32 %v49, 1e-05
    %v52 = vadd.f32 %v50, 1e-05
    %v53 = vrsqrt.pop %v51
    %v54 = vrsqrt.pop %v52
    %v55 = vmul.f32 %v39, %v53
    %v56 = vmul.f32 %v40, %v54
    %v57 = vld [vmem:[%s1] sm:$0x1]
    %v59 = vlaneseq
    %v60 = vshrl.u32 %v59, 7
    %v61 = vsub.s32 0, %v60
    %v62 = vrot.slane %v57, %v61
    %v64 = vmul.f32 %v55, %v62
    %v65 = vmul.f32 %v56, %v62
    %v66 = vld [vmem:[%s2] sm:$0x1]
    %v68 = vlaneseq
    %v69 = vshrl.u32 %v68, 7
    %v70 = vsub.s32 0, %v69
    %v71 = vrot.slane %v66, %v70
    %v73 = vadd.f32 %v64, %v71
    %v74 = vadd.f32 %v65, %v71
    %v75 = vpack.c.bf16 %v74, %v73
    %76 = vst.msk [vmem:[#allocation2] sm:$0xff] %vm29, %v75
  $region25: #{transformer_forward.42} parent=0 // pred_fallthru
    _
  %v77 = vld [vmem:[#allocation2] sm:$0xff]
  %v78 = vld [vmem:[%s3] sm:$0xf]
  %v79 = vld [vmem:[%s3 + $0x4] sm:$0xf]
  %v80 = vld [vmem:[%s3 + $0x8] sm:$0xf]
  %v81 = vld [vmem:[%s3 + $0xc] sm:$0xf]
  %v82 = vld [vmem:[%s4] sm:$0x1]
  %v84 = vlaneseq
  %v85 = vshrl.u32 %v84, 7
  %v86 = vsub.s32 0, %v85
  %v87 = vrot.slane %v82, %v86
  %v93 = vunpack.c.l.b16 %v78
  %v94 = vunpack.c.l.b16 %v79
  %v95 = vunpack.c.l.b16 %v80
  %v96 = vunpack.c.l.b16 %v81
  %v97 = vpack.c.b16 %v94, %v93
  %v98 = vpack.c.b16 %v96, %v95
  %vm101 = vcmask 261120
  %v103 = vsel %vm101, %v77, 0
  %105 = vmatprep.subr.bf16.mxu0 0
  %106 = vmatpush1.bf16.msra.mxu0 %v97
  %107 = vmatprep.subr.bf16.mxu0 0
  %108 = vmatpush1.bf16.msra.mxu0 %v98
  %109 = vmatprep.subr.bf16.mxu0 0
  %110 = vmatpush1.bf16.msra.mxu0 0
  %111 = vmatprep.subr.bf16.mxu0 0
  %112 = vmatpush1.bf16.msra.mxu0 0
  %113 = vmatprep.subr.bf16.mxu0 0
  %114 = vmatpush1.bf16.msra.mxu0 0
  %115 = vmatprep.subr.bf16.mxu0 0
  %116 = vmatpush1.bf16.msra.mxu0 0
  %117 = vmatprep.subr.bf16.mxu0 0
  %118 = vmatpush1.bf16.msra.mxu0 0
  %119 = vmatprep.subr.bf16.mxu0 0
  %120 = vmatpush1.bf16.msra.mxu0 0
  %121 = vmatprep.subr.bf16.mxu0 0
  %122 = vmatpush1.bf16.msra.mxu0 0
  %123 = vmatprep.subr.bf16.mxu0 0
  %124 = vmatpush1.bf16.msra.mxu0 0
  %125 = vmatprep.subr.bf16.mxu0 0
  %126 = vmatpush1.bf16.msra.mxu0 0
  %127 = vmatprep.subr.bf16.mxu0 0
  %128 = vmatpush1.bf16.msra.mxu0 0
  %129 = vmatprep.subr.bf16.mxu0 0
  %130 = vmatpush1.bf16.msra.mxu0 0
  %131 = vmatprep.subr.bf16.mxu0 0
  %132 = vmatpush1.bf16.msra.mxu0 0
  %133 = vmatprep.subr.bf16.mxu0 0
  %134 = vmatpush1.bf16.msra.mxu0 0
  %135 = vmatprep.subr.bf16.mxu0 0
  %136 = vmatpush1.bf16.msra.mxu0 0
  %137 = vmatprep.mubr.bf16.mxu0 0
  %138 = vmatmul.mubr.bf16.gmra.mrb[0].mxu0 %v103
  %v139 = vpop.f32.mrb[0].mxu0
  %v140 = vadd.f32 %v87, %v139
  %v141 = vpop.f32.mrb[0].mxu0
  %v142 = vpop.f32.mrb[0].mxu0
  %v143 = vadd.f32 %v87, %v142
  %v144 = vpop.f32.mrb[0].mxu0
  %145 = vdwg.mxu0
  %v146 = vpack.c.bf16 %v143, %v140
  %v148 = vunpack.c.l.b16 %v146
  %v149 = vunpack.c.h.b16 %v146
  %v150 = vpack.c.b16 %v148, %v148
  %v151 = vpack.c.b16 %v149, %v149
  %vm154 = vcmask 257024
  %155 = vst.msk [vmem:[%s5] sm:$0xf] %vm154, %v150
  %156 = vst.msk [vmem:[%s5 + $0x4] sm:$0xf] %vm154, %v151
  // Predicated region
  $region26: #{transformer_forward.42} parent=0 // pred_check
    _
  $region27: #{transformer_forward.42} parent=0 // pred_check_branch
    %158 = sbr.rel (0) target = $region29
  $region28: #{transformer_forward.42} parent=0 // pred_region
    _
  $region29: #{transformer_forward.42} parent=0 // pred_fallthru
    _
  // Predicated region
  $region30: #{transformer_forward.42} parent=0 // pred_check
    _
  $region31: #{transformer_forward.42} parent=0 // pred_check_branch
    %160 = sbr.rel (0) target = $region33
  $region32: #{transformer_forward.42} parent=0 // pred_region
    _
  $region33: #{transformer_forward.42} parent=0 // pred_fallthru
    _

// kernel: transformer_forward.30
$region0: #{transformer_forward.30}
  #allocation0 [shape = 'u32[]', space=smem, size = 0x4, offset = 0x4, fixed_abs, tag = 'smem constant byte address 0x4 - core index']
  #allocation1 [shape = 'u32[144,128]{1,0:T(1,128)}', space=vmem, size = 0x12000, scoped, tag = 'internal scratch']
  %s0 = inlined_call_operand.vmem [shape: bf16[2,8,96], index: 0, kind: input, shape index: {}]
  %s1 = inlined_call_operand.vmem [shape: f32[2,1,8], index: 1, kind: input, shape index: {}]
  %s2 = inlined_call_operand.vmem [shape: bf16[2,8,32], index: 2, kind: output, shape index: {}]
  %s3 = sld [smem:[#allocation0]]
  $region41: #{transformer_forward.30} parent=0
    _
  %s5 = ssub.s32 1, %s3
  %s6 = scalar_select 0, %s5, %s3
  loop: start=0, step=1, limit=4
  $region2: #{transformer_forward.30} parent=0 // loop_pre_header
    _
  $region3: #{transformer_forward.30} parent=0 // loop_header
    %s8 = sphi 0, %s12
    %p9 = scmp.ge.s32.totalorder %s8, 4
    %s18 = sphi 0, %s20
    %s21 = sphi 0, %s18
    %s22 = sphi 0, %s21
    %s38 = sphi 0, %s22
    %s44 = sphi 0, %s46
    %s47 = sphi 0, %s44
    %s48 = sphi 0, %s47
    %s64 = sphi 0, %s48
    %s70 = sphi 0, %s72
    %s73 = sphi 0, %s70
    %s74 = sphi 0, %s73
    %s90 = sphi 0, %s74
  $region4: #{transformer_forward.30} parent=0 // loop_header_branch
    %11 = sbr.rel (%p9) target = $region8
  $region5: #{transformer_forward.30} parent=0 // loop_body
    %s13 = ssub.s32 %s8, 1
    %s14 = ssub.s32 %s8, 2
    %s15 = sadd.s32 %s8, 1
    %s16 = ssub.s32 %s8, %s15
    %p17 = scmp.eq.s32.totalorder %s16, 0
    %s19 = sadd.s32 %s18, 1
    %s20 = scalar_select %p17, %s18, %s19
    %p23 = pneg %p17
    %p24 = scmp.eq.s32.totalorder %s8, 1
    %p25 = por %p23, %p24
    %p26 = scmp.ne.s32.totalorder %s18, %s21
    %p27 = scmp.eq.s32.totalorder %s8, 0
    %p28 = por %p26, %p27
    %p29 = scmp.ne.s32.totalorder %s18, %s21
    %p30 = scmp.eq.s32.totalorder %s13, 1
    %p31 = por %p29, %p30
    %p32 = scmp.ne.s32.totalorder %s21, %s22
    %p33 = scmp.eq.s32.totalorder %s13, 0
    %p34 = por %p32, %p33
    %p35 = scmp.ne.s32.totalorder %s21, %s22
    %p36 = scmp.eq.s32.totalorder %s14, 1
    %p37 = por %p35, %p36
    %p39 = scmp.ne.s32.totalorder %s22, %s38
    %p40 = scmp.eq.s32.totalorder %s14, 0
    %p41 = por %p39, %p40
    %s42 = ssub.s32 %s8, %s15
    %p43 = scmp.eq.s32.totalorder %s42, 0
    %s45 = sadd.s32 %s44, 1
    %s46 = scalar_select %p43, %s44, %s45
    %p49 = pneg %p43
    %p50 = scmp.eq.s32.totalorder %s8, 1
    %p51 = por %p49, %p50
    %p52 = scmp.ne.s32.totalorder %s44, %s47
    %p53 = scmp.eq.s32.totalorder %s8, 0
    %p54 = por %p52, %p53
    %p55 = scmp.ne.s32.totalorder %s44, %s47
    %p56 = scmp.eq.s32.totalorder %s13, 1
    %p57 = por %p55, %p56
    %p58 = scmp.ne.s32.totalorder %s47, %s48
    %p59 = scmp.eq.s32.totalorder %s13, 0
    %p60 = por %p58, %p59
    %p61 = scmp.ne.s32.totalorder %s47, %s48
    %p62 = scmp.eq.s32.totalorder %s14, 1
    %p63 = por %p61, %p62
    %p65 = scmp.ne.s32.totalorder %s48, %s64
    %p66 = scmp.eq.s32.totalorder %s14, 0
    %p67 = por %p65, %p66
    %s68 = ssub.s32 %s8, %s15
    %p69 = scmp.eq.s32.totalorder %s68, 0
    %s71 = sadd.s32 %s70, 1
    %s72 = scalar_select %p69, %s70, %s71
    %p75 = pneg %p69
    %p76 = scmp.eq.s32.totalorder %s8, 1
    %p77 = por %p75, %p76
    %p78 = scmp.ne.s32.totalorder %s70, %s73
    %p79 = scmp.eq.s32.totalorder %s8, 0
    %p80 = por %p78, %p79
    %p81 = scmp.ne.s32.totalorder %s70, %s73
    %p82 = scmp.eq.s32.totalorder %s13, 1
    %p83 = por %p81, %p82
    %p84 = scmp.ne.s32.totalorder %s73, %s74
    %p85 = scmp.eq.s32.totalorder %s13, 0
    %p86 = por %p84, %p85
    %p87 = scmp.ne.s32.totalorder %s73, %s74
    %p88 = scmp.eq.s32.totalorder %s14, 1
    %p89 = por %p87, %p88
    %p91 = scmp.ne.s32.totalorder %s74, %s90
    %p92 = scmp.eq.s32.totalorder %s14, 0
    %p93 = por %p91, %p92
    %p94 = scmp.le.s32.totalorder 1, %s8
    %p95 = scmp.lt.s32.totalorder %s8, 3
    %p96 = pnand %p94, %p95
    %p97 = pneg %p96
    // Predicated region
    $region9: #{transformer_forward.30} parent=5 // pred_check
      _
    $region10: #{transformer_forward.30} parent=5 // pred_check_branch
      %99 = sbr.rel (%p96) target = $region12
    $region11: #{transformer_forward.30} parent=5 // pred_region
      %s100 = ssub.s32 %s8, 1
    $region12: #{transformer_forward.30} parent=5 // pred_fallthru
      _
    %p101 = scmp.lt.s32.totalorder %s8, 2
    // Predicated region
    $region13: #{transformer_forward.30} parent=5 // pred_check
      %p102 = pneg %p101
    $region14: #{transformer_forward.30} parent=5 // pred_check_branch
      %104 = sbr.rel (%p102) target = $region16
    $region15: #{transformer_forward.30} parent=5 // pred_region
      // Predicated region
      $region17: #{transformer_forward.30} parent=15 // pred_check
        %p105 = pneg %p28
      $region18: #{transformer_forward.30} parent=15 // pred_check_branch
        %107 = sbr.rel (%p105) target = $region20
      $region19: #{transformer_forward.30} parent=15 // pred_region
        %p108 = scmp.lt.s32.totalorder %s8, 1
        %s109 = scalar_select %p108, %s8, 1
        %s110 = smul.addr %s109, 4
        %s111 = scalar_lea.vmem %s0, %s110
      $region20: #{transformer_forward.30} parent=15 // pred_fallthru
        _
      // Predicated region
      $region21: #{transformer_forward.30} parent=15 // pred_check
        %p112 = pneg %p54
      $region22: #{transformer_forward.30} parent=15 // pred_check_branch
        %114 = sbr.rel (%p112) target = $region24
      $region23: #{transformer_forward.30} parent=15 // pred_region
        %p115 = scmp.lt.s32.totalorder %s8, 1
        %s116 = scalar_select %p115, %s8, 1
        %s117 = scalar_lea.vmem %s1, %s116
      $region24: #{transformer_forward.30} parent=15 // pred_fallthru
        _
    $region16: #{transformer_forward.30} parent=5 // pred_fallthru
      _
    %p118 = scmp.le.s32.totalorder 1, %s8
    %p119 = scmp.lt.s32.totalorder %s8, 3
    %p120 = pnand %p118, %p119
    %p121 = pneg %p120
    // Predicated region
    $region25: #{transformer_forward.30} parent=5 // pred_check
      _
    $region26: #{transformer_forward.30} parent=5 // pred_check_branch
      %123 = sbr.rel (%p120) target = $region28
    $region27: #{transformer_forward.30} parent=5 // pred_region
      %s124 = ssub.s32 %s8, 1
      %p125 = scmp.lt.s32.totalorder %s13, 1
      %s126 = scalar_select %p125, %s13, 1
      %s127 = smul.addr %s126, 4
      %s128 = scalar_lea.vmem %s0, %s127
      %p129 = pneg %p34
      %p130 = pneg %p31
      %p131 = scmp.lt.s32.totalorder %s13, 1
      %s132 = scalar_select %p131, %s13, 1
      %s133 = scalar_lea.vmem %s1, %s132
      %p134 = pneg %p60
      %p135 = pneg %p57
      %p136 = pneg %p86
      %p137 = pneg %p83
      %p138 = scmp.lt.s32.totalorder %s13, 1
      %s139 = scalar_select %p138, %s13, 1
      %s140 = smul.addr %s139, 4
      %s141 = scalar_lea.vmem %s2, %s140
      %p142 = scmp.lt.s32.totalorder %s13, 1
      %s143 = scalar_select %p142, %s13, 1
      %s144 = smul.addr %s143, 4
      %s145 = scalar_lea.vmem %s0, %s144
      %p146 = scmp.lt.s32.totalorder %s13, 1
      %s147 = scalar_select %p146, %s13, 1
      %s148 = scalar_lea.vmem %s1, %s147
      %p149 = scmp.lt.s32.totalorder %s13, 1
      %s150 = scalar_select %p149, %s13, 1
      %s151 = smul.addr %s150, 4
      %s152 = scalar_lea.vmem %s2, %s151
      %v154 = vld [vmem:[%s145] sm:$0xf]
      %v155 = vld [vmem:[%s148] sm:$0x1]
      %vm156 = vcmp.ne.f32.partialorder %v155, 0.0
      %v158 = vunpack.c.l.b16 %v154
      %v159 = vpack.c.b16 %v158, %v158
      %160 = vrot.lane.b32.xlu0 %v159, 96
      %v161 = vpop.permute.xlu0 %160
      %vm162 = vcmask 130048
      %v164 = vsel %vm162, %v154, 0
      %v167 = vsel %vm162, %v161, 0
      %169 = vmatprep.subr.bf16.mxu0 0
      %170 = vmatpush1.bf16.xpose.msra.mxu0 %v167
      %171 = vmatprep.subr.bf16.mxu0 0
      %172 = vmatpush1.bf16.xpose.msra.mxu0 0
      %173 = vmatprep.subr.bf16.mxu0 0
      %174 = vmatpush1.bf16.xpose.msra.mxu0 0
      %175 = vmatprep.subr.bf16.mxu0 0
      %176 = vmatpush1.bf16.xpose.msra.mxu0 0
      %177 = vmatprep.subr.bf16.mxu0 0
      %178 = vmatpush1.bf16.xpose.msra.mxu0 0
      %179 = vmatprep.subr.bf16.mxu0 0
      %180 = vmatpush1.bf16.xpose.msra.mxu0 0
      %181 = vmatprep.subr.bf16.mxu0 0
      %182 = vmatpush1.bf16.xpose.msra.mxu0 0
      %183 = vmatprep.subr.bf16.mxu0 0
      %184 = vmatpush1.bf16.xpose.msra.mxu0 0
      %185 = vmatprep.subr.bf16.mxu0 0
      %186 = vmatpush1.bf16.xpose.msra.mxu0 0
      %187 = vmatprep.subr.bf16.mxu0 0
      %188 = vmatpush1.bf16.xpose.msra.mxu0 0
      %189 = vmatprep.subr.bf16.mxu0 0
      %190 = vmatpush1.bf16.xpose.msra.mxu0 0
      %191 = vmatprep.subr.bf16.mxu0 0
      %192 = vmatpush1.bf16.xpose.msra.mxu0 0
      %193 = vmatprep.subr.bf16.mxu0 0
      %194 = vmatpush1.bf16.xpose.msra.mxu0 0
      %195 = vmatprep.subr.bf16.mxu0 0
      %196 = vmatpush1.bf16.xpose.msra.mxu0 0
      %197 = vmatprep.subr.bf16.mxu0 0
      %198 = vmatpush1.bf16.xpose.msra.mxu0 0
      %199 = vmatprep.subr.bf16.mxu0 0
      %200 = vmatpush1.bf16.xpose.msra.mxu0 0
      %201 = vmatprep.mubr.bf16.mxu0 0
      %202 = vmatmul.mubr.bf16.gmra.mrb[0].mxu0 %v164
      %v203 = vpop.f32.mrb[0].mxu0
      %v204 = vadd.f32 0.0, %v203
      %v205 = vpop.f32.mrb[0].mxu0
      %v206 = vpop.f32.mrb[0].mxu0
      %v207 = vpop.f32.mrb[0].mxu0
      %208 = vdwg.mxu0
      %v209 = vsel %vm156, 1, 0
      %v210 = vlaneseq
      %v211 = vshrl.u32 %v210, 7
      %v212 = vsub.s32 0, %v211
      %v213 = vrot.slane %v209, %v212
      %vm214 = vcmp.eq.s32.totalorder %v213, 1
      %v215 = vsel %vm214, %v204, -1e+20
      %v216 = vmul.f32 %v215, 0.25
      %vm217 = vcmask 64512
      %v218 = vsel %vm217, %v216, -inf
      %219 = vmax.xlane.f32.xlu0 %v218
      %v220 = vpop.xlane.xlu0 %219
      %v221 = vsub.f32 %v216, %v220
      %v222 = vmul.f32 %v221, 1.442695
      %v223 = vpow.pop %v222
      %v224 = vsel %vm217, %v223, 0.0
      %225 = vadd.xlane.f32.xlu0 %v224
      %v226 = vpop.xlane.xlu0 %225
      %v227 = vrcp.pop %v226
      %v228 = vmul.f32 %v223, %v227
      %v229 = vpack.c.bf16 %v228, %v228
      %230 = vrot.lane.b32.xlu0 %v159, 64
      %v231 = vpop.permute.xlu0 %230
      %v233 = vsel %vm217, %v229, 0
      %vm235 = vcmask 1043456
      %v237 = vsel %vm235, %v231, 0
      %239 = vmatprep.subr.bf16.mxu0 0
      %240 = vmatpush1.bf16.msra.mxu0 %v237
      %241 = vmatprep.subr.bf16.mxu0 0
      %242 = vmatpush1.bf16.msra.mxu0 0
      %243 = vmatprep.subr.bf16.mxu0 0
      %244 = vmatpush1.bf16.msra.mxu0 0
      %245 = vmatprep.subr.bf16.mxu0 0
      %246 = vmatpush1.bf16.msra.mxu0 0
      %247 = vmatprep.subr.bf16.mxu0 0
      %248 = vmatpush1.bf16.msra.mxu0 0
      %249 = vmatprep.subr.bf16.mxu0 0
      %250 = vmatpush1.bf16.msra.mxu0 0
      %251 = vmatprep.subr.bf16.mxu0 0
      %252 = vmatpush1.bf16.msra.mxu0 0
      %253 = vmatprep.subr.bf16.mxu0 0
      %254 = vmatpush1.bf16.msra.mxu0 0
      %255 = vmatprep.subr.bf16.mxu0 0
      %256 = vmatpush1.bf16.msra.mxu0 0
      %257 = vmatprep.subr.bf16.mxu0 0
      %258 = vmatpush1.bf16.msra.mxu0 0
      %259 = vmatprep.subr.bf16.mxu0 0
      %260 = vmatpush1.bf16.msra.mxu0 0
      %261 = vmatprep.subr.bf16.mxu0 0
      %262 = vmatpush1.bf16.msra.mxu0 0
      %263 = vmatprep.subr.bf16.mxu0 0
      %264 = vmatpush1.bf16.msra.mxu0 0
      %265 = vmatprep.subr.bf16.mxu0 0
      %266 = vmatpush1.bf16.msra.mxu0 0
      %267 = vmatprep.subr.bf16.mxu0 0
      %268 = vmatpush1.bf16.msra.mxu0 0
      %269 = vmatprep.subr.bf16.mxu0 0
      %270 = vmatpush1.bf16.msra.mxu0 0
      %271 = vmatprep.mubr.bf16.mxu0 0
      %272 = vmatmul.mubr.bf16.gmra.mrb[0].mxu0 %v233
      %v273 = vpop.f32.mrb[0].mxu0
      %v274 = vadd.f32 0.0, %v273
      %v275 = vpop.f32.mrb[0].mxu0
      %v276 = vpop.f32.mrb[0].mxu0
      %v277 = vpop.f32.mrb[0].mxu0
      %278 = vdwg.mxu0
      %279 = vrot.lane.b32.xlu0 %v159, 112
      %v280 = vpop.permute.xlu0 %279
      %281 = vrot.lane.b32.xlu0 %v159, 80
      %v282 = vpop.permute.xlu0 %281
      %v284 = vsel %vm162, %v280, 0
      %v287 = vsel %vm162, %v282, 0
      %289 = vmatprep.subr.bf16.mxu0 0
      %290 = vmatpush1.bf16.xpose.msra.mxu0 %v287
      %291 = vmatprep.subr.bf16.mxu0 0
      %292 = vmatpush1.bf16.xpose.msra.mxu0 0
      %293 = vmatprep.subr.bf16.mxu0 0
      %294 = vmatpush1.bf16.xpose.msra.mxu0 0
      %295 = vmatprep.subr.bf16.mxu0 0
      %296 = vmatpush1.bf16.xpose.msra.mxu0 0
      %297 = vmatprep.subr.bf16.mxu0 0
      %298 = vmatpush1.bf16.xpose.msra.mxu0 0
      %299 = vmatprep.subr.bf16.mxu0 0
      %300 = vmatpush1.bf16.xpose.msra.mxu0 0
      %301 = vmatprep.subr.bf16.mxu0 0
      %302 = vmatpush1.bf16.xpose.msra.mxu0 0
      %303 = vmatprep.subr.bf16.mxu0 0
      %304 = vmatpush1.bf16.xpose.msra.mxu0 0
      %305 = vmatprep.subr.bf16.mxu0 0
      %306 = vmatpush1.bf16.xpose.msra.mxu0 0
      %307 = vmatprep.subr.bf16.mxu0 0
      %308 = vmatpush1.bf16.xpose.msra.mxu0 0
      %309 = vmatprep.subr.bf16.mxu0 0
      %310 = vmatpush1.bf16.xpose.msra.mxu0 0
      %311 = vmatprep.subr.bf16.mxu0 0
      %312 = vmatpush1.bf16.xpose.msra.mxu0 0
      %313 = vmatprep.subr.bf16.mxu0 0
      %314 = vmatpush1.bf16.xpose.msra.mxu0 0
      %315 = vmatprep.subr.bf16.mxu0 0
      %316 = vmatpush1.bf16.xpose.msra.mxu0 0
      %317 = vmatprep.subr.bf16.mxu0 0
      %318 = vmatpush1.bf16.xpose.msra.mxu0 0
      %319 = vmatprep.subr.bf16.mxu0 0
      %320 = vmatpush1.bf16.xpose.msra.mxu0 0
      %321 = vmatprep.mubr.bf16.mxu0 0
      %322 = vmatmul.mubr.bf16.gmra.mrb[0].mxu0 %v284
      %v323 = vpop.f32.mrb[0].mxu0
      %v324 = vadd.f32 0.0, %v323
      %v325 = vpop.f32.mrb[0].mxu0
      %v326 = vpop.f32.mrb[0].mxu0
      %v327 = vpop.f32.mrb[0].mxu0
      %328 = vdwg.mxu0
      %v329 = vsel %vm214, %v324, -1e+20
      %v330 = vmul.f32 %v329, 0.25
      %v331 = vsel %vm217, %v330, -inf
      %332 = vmax.xlane.f32.xlu0 %v331
      %v333 = vpop.xlane.xlu0 %332
      %v334 = vsub.f32 %v330, %v333
      %v335 = vmul.f32 %v334, 1.442695
      %v336 = vpow.pop %v335
      %v337 = vsel %vm217, %v336, 0.0
      %338 = vadd.xlane.f32.xlu0 %v337
      %v339 = vpop.xlane.xlu0 %338
      %v340 = vrcp.pop %v339
      %v341 = vmul.f32 %v336, %v340
      %v342 = vpack.c.bf16 %v341, %v341
      %343 = vrot.lane.b32.xlu0 %v159, 48
      %v344 = vpop.permute.xlu0 %343
      %v346 = vsel %vm217, %v342, 0
      %v349 = vsel %vm235, %v344, 0
      %351 = vmatprep.subr.bf16.mxu0 0
      %352 = vmatpush1.bf16.msra.mxu0 %v349
      %353 = vmatprep.subr.bf16.mxu0 0
      %354 = vmatpush1.bf16.msra.mxu0 0
      %355 = vmatprep.subr.bf16.mxu0 0
      %356 = vmatpush1.bf16.msra.mxu0 0
      %357 = vmatprep.subr.bf16.mxu0 0
      %358 = vmatpush1.bf16.msra.mxu0 0
      %359 = vmatprep.subr.bf16.mxu0 0
      %360 = vmatpush1.bf16.msra.mxu0 0
      %361 = vmatprep.subr.bf16.mxu0 0
      %362 = vmatpush1.bf16.msra.mxu0 0
      %363 = vmatprep.subr.bf16.mxu0 0
      %364 = vmatpush1.bf16.msra.mxu0 0
      %365 = vmatprep.subr.bf16.mxu0 0
      %366 = vmatpush1.bf16.msra.mxu0 0
      %367 = vmatprep.subr.bf16.mxu0 0
      %368 = vmatpush1.bf16.msra.mxu0 0
      %369 = vmatprep.subr.bf16.mxu0 0
      %370 = vmatpush1.bf16.msra.mxu0 0
      %371 = vmatprep.subr.bf16.mxu0 0
      %372 = vmatpush1.bf16.msra.mxu0 0
      %373 = vmatprep.subr.bf16.mxu0 0
      %374 = vmatpush1.bf16.msra.mxu0 0
      %375 = vmatprep.subr.bf16.mxu0 0
      %376 = vmatpush1.bf16.msra.mxu0 0
      %377 = vmatprep.subr.bf16.mxu0 0
      %378 = vmatpush1.bf16.msra.mxu0 0
      %379 = vmatprep.subr.bf16.mxu0 0
      %380 = vmatpush1.bf16.msra.mxu0 0
      %381 = vmatprep.subr.bf16.mxu0 0
      %382 = vmatpush1.bf16.msra.mxu0 0
      %383 = vmatprep.mubr.bf16.mxu0 0
      %384 = vmatmul.mubr.bf16.gmra.mrb[0].mxu0 %v346
      %v385 = vpop.f32.mrb[0].mxu0
      %v386 = vadd.f32 0.0, %v385
      %v387 = vpop.f32.mrb[0].mxu0
      %v388 = vpop.f32.mrb[0].mxu0
      %v389 = vpop.f32.mrb[0].mxu0
      %390 = vdwg.mxu0
      %392 = vrot.lane.b32.xlu0 %v386, 16
      %v393 = vpop.permute.xlu0 %392
      %v395 = vsel %vm162, %v274, %v393
      %v396 = vpack.c.bf16 %v395, %v395
      %vm397 = vcmask 257024
      %398 = vst.msk [vmem:[%s152] sm:$0xf] %vm397, %v396
      %p399 = scmp.lt.s32.totalorder %s13, 1
      %s400 = scalar_select %p399, %s13, 1
      %s401 = smul.addr %s400, 4
      %s402 = scalar_lea.vmem %s2, %s401
      // Predicated region
      $region29: #{transformer_forward.30} parent=27 // pred_check
        %p403 = pneg %p83
      $region30: #{transformer_forward.30} parent=27 // pred_check_branch
        %405 = sbr.rel (%p403) target = $region32
      $region31: #{transformer_forward.30} parent=27 // pred_region
        _
      $region32: #{transformer_forward.30} parent=27 // pred_fallthru
        _
    $region28: #{transformer_forward.30} parent=5 // pred_fallthru
      _
    %p406 = scmp.le.s32.totalorder 2, %s8
    // Predicated region
    $region33: #{transformer_forward.30} parent=5 // pred_check
      %p407 = pneg %p406
    $region34: #{transformer_forward.30} parent=5 // pred_check_branch
      %409 = sbr.rel (%p407) target = $region36
    $region35: #{transformer_forward.30} parent=5 // pred_region
      %s410 = ssub.s32 %s8, 2
      // Predicated region
      $region37: #{transformer_forward.30} parent=35 // pred_check
        %p411 = pneg %p89
      $region38: #{transformer_forward.30} parent=35 // pred_check_branch
        %413 = sbr.rel (%p411) target = $region40
      $region39: #{transformer_forward.30} parent=35 // pred_region
        %p414 = scmp.lt.s32.totalorder %s14, 1
        %s415 = scalar_select %p414, %s14, 1
        %s416 = smul.addr %s415, 4
        %s417 = scalar_lea.vmem %s2, %s416
      $region40: #{transformer_forward.30} parent=35 // pred_fallthru
        _
    $region36: #{transformer_forward.30} parent=5 // pred_fallthru
      _
  $region6: #{transformer_forward.30} parent=0 // loop_footer
    %s12 = sadd.s32 1, %s8
  $region7: #{transformer_forward.30} parent=0 // loop_footer_branch
    %7 = sbr.rel target = $region3
  $region8: #{transformer_forward.30} parent=0 // loop_exit
    _

// kernel: transformer_forward.43
$region0: #{transformer_forward.43}
  #allocation0 [shape = 'u32[]', space=smem, size = 0x4, offset = 0x4, fixed_abs, tag = 'smem constant byte address 0x4 - core index']
  #allocation1 [shape = 'u32[144,128]{1,0:T(1,128)}', space=vmem, size = 0x12000, scoped, tag = 'internal scratch']
  #allocation2 [shape = 'bf16[16,32]{1,0:T(16,128)(2,1)}', space=vmem, size = 0x1000, scoped, tag = 'scratch operand']
  %s0 = inlined_call_operand.vmem [shape: bf16[16,32], index: 0, kind: input, shape index: {}]
  %s1 = inlined_call_operand.vmem [shape: f32[1,32], index: 1, kind: input, shape index: {}]
  %s2 = inlined_call_operand.vmem [shape: f32[1,32], index: 2, kind: input, shape index: {}]
  %s3 = inlined_call_operand.vmem [shape: bf16[32,64], index: 3, kind: input, shape index: {}]
  %s4 = inlined_call_operand.vmem [shape: f32[1,64], index: 4, kind: input, shape index: {}]
  %s5 = inlined_call_operand.vmem [shape: bf16[16,64], index: 5, kind: output, shape index: {}]
  %s6 = sld [smem:[#allocation0]]
  $region34: #{transformer_forward.43} parent=0
    _
  %s8 = ssub.s32 1, %s6
  %s9 = scalar_select 0, %s8, %s6
  // Predicated region
  $region2: #{transformer_forward.43} parent=0 // pred_check
    _
  $region3: #{transformer_forward.43} parent=0 // pred_check_branch
    %11 = sbr.rel (0) target = $region5
  $region4: #{transformer_forward.43} parent=0 // pred_region
    _
  $region5: #{transformer_forward.43} parent=0 // pred_fallthru
    _
  // Predicated region
  $region6: #{transformer_forward.43} parent=0 // pred_check
    _
  $region7: #{transformer_forward.43} parent=0 // pred_check_branch
    %13 = sbr.rel (0) target = $region9
  $region8: #{transformer_forward.43} parent=0 // pred_region
    _
  $region9: #{transformer_forward.43} parent=0 // pred_fallthru
    _
  // Predicated region
  $region10: #{transformer_forward.43} parent=0 // pred_check
    _
  $region11: #{transformer_forward.43} parent=0 // pred_check_branch
    %15 = sbr.rel (0) target = $region13
  $region12: #{transformer_forward.43} parent=0 // pred_region
    _
  $region13: #{transformer_forward.43} parent=0 // pred_fallthru
    _
  // Predicated region
  $region14: #{transformer_forward.43} parent=0 // pred_check
    _
  $region15: #{transformer_forward.43} parent=0 // pred_check_branch
    %17 = sbr.rel (0) target = $region17
  $region16: #{transformer_forward.43} parent=0 // pred_region
    _
  $region17: #{transformer_forward.43} parent=0 // pred_fallthru
    _
  // Predicated region
  $region18: #{transformer_forward.43} parent=0 // pred_check
    _
  $region19: #{transformer_forward.43} parent=0 // pred_check_branch
    %19 = sbr.rel (0) target = $region21
  $region20: #{transformer_forward.43} parent=0 // pred_region
    _
  $region21: #{transformer_forward.43} parent=0 // pred_fallthru
    _
  %p21 = scmp.eq.s32.totalorder 0, 0
  // Predicated region
  $region22: #{transformer_forward.43} parent=0 // pred_check
    %p22 = pneg %p21
  $region23: #{transformer_forward.43} parent=0 // pred_check_branch
    %24 = sbr.rel (%p22) target = $region25
  $region24: #{transformer_forward.43} parent=0 // pred_region
    %v25 = vld [vmem:[%s0] sm:$0xf]
    %v26 = vld [vmem:[%s0 + $0x4] sm:$0xf]
    %v27 = vunpack.c.l.bf16 %v25
    %v28 = vunpack.c.l.bf16 %v26
    %vm29 = vcmask 261120
    %v30 = vsel %vm29, %v27, 0.0
    %31 = vadd.xlane.f32.xlu0 %v30
    %v32 = vpop.xlane.xlu0 %31
    %v33 = vsel %vm29, %v28, 0.0
    %34 = vadd.xlane.f32.xlu0 %v33
    %v35 = vpop.xlane.xlu0 %34
    %v36 = vrcp.pop 32.0
    %v37 = vmul.f32 %v32, %v36
    %v38 = vmul.f32 %v35, %v36
    %v39 = vsub.f32 %v27, %v37
    %v40 = vsub.f32 %v28, %v38
    %v41 = vmul.f32 %v39, %v39
    %v42 = vmul.f32 %v40, %v40
    %v43 = vsel %vm29, %v41, 0.0
    %44 = vadd.xlane.f32.xlu0 %v43
    %v45 = vpop.xlane.xlu0 %44
    %v46 = vsel %vm29, %v42, 0.0
    %47 = vadd.xlane.f32.xlu0 %v46
    %v48 = vpop.xlane.xlu0 %47
    %v49 = vmul.f32 %v45, %v36
    %v50 = vmul.f32 %v48, %v36
    %v51 = vadd.f32 %v49, 1e-05
    %v52 = vadd.f32 %v50, 1e-05
    %v53 = vrsqrt.pop %v51
    %v54 = vrsqrt.pop %v52
    %v55 = vmul.f32 %v39, %v53
    %v56 = vmul.f32 %v40, %v54
    %v57 = vld [vmem:[%s1] sm:$0x1]
    %v59 = vlaneseq
    %v60 = vshrl.u32 %v59, 7
    %v61 = vsub.s32 0, %v60
    %v62 = vrot.slane %v57, %v61
    %v64 = vmul.f32 %v55, %v62
    %v65 = vmul.f32 %v56, %v62
    %v66 = vld [vmem:[%s2] sm:$0x1]
    %v68 = vlaneseq
    %v69 = vshrl.u32 %v68, 7
    %v70 = vsub.s32 0, %v69
    %v71 = vrot.slane %v66, %v70
    %v73 = vadd.f32 %v64, %v71
    %v74 = vadd.f32 %v65, %v71
    %v75 = vpack.c.bf16 %v74, %v73
    %76 = vst.msk [vmem:[#allocation2] sm:$0xff] %vm29, %v75
  $region25: #{transformer_forward.43} parent=0 // pred_fallthru
    _
  %v77 = vld [vmem:[#allocation2] sm:$0xff]
  %v78 = vld [vmem:[%s3] sm:$0xf]
  %v79 = vld [vmem:[%s3 + $0x4] sm:$0xf]
  %v80 = vld [vmem:[%s3 + $0x8] sm:$0xf]
  %v81 = vld [vmem:[%s3 + $0xc] sm:$0xf]
  %v82 = vld [vmem:[%s4] sm:$0x1]
  %v84 = vlaneseq
  %v85 = vshrl.u32 %v84, 7
  %v86 = vsub.s32 0, %v85
  %v87 = vrot.slane %v82, %v86
  %v93 = vunpack.c.l.b16 %v78
  %v94 = vunpack.c.l.b16 %v79
  %v95 = vunpack.c.l.b16 %v80
  %v96 = vunpack.c.l.b16 %v81
  %v97 = vpack.c.b16 %v94, %v93
  %v98 = vpack.c.b16 %v96, %v95
  %vm101 = vcmask 261120
  %v103 = vsel %vm101, %v77, 0
  %105 = vmatprep.subr.bf16.mxu0 0
  %106 = vmatpush1.bf16.msra.mxu0 %v97
  %107 = vmatprep.subr.bf16.mxu0 0
  %108 = vmatpush1.bf16.msra.mxu0 %v98
  %109 = vmatprep.subr.bf16.mxu0 0
  %110 = vmatpush1.bf16.msra.mxu0 0
  %111 = vmatprep.subr.bf16.mxu0 0
  %112 = vmatpush1.bf16.msra.mxu0 0
  %113 = vmatprep.subr.bf16.mxu0 0
  %114 = vmatpush1.bf16.msra.mxu0 0
  %115 = vmatprep.subr.bf16.mxu0 0
  %116 = vmatpush1.bf16.msra.mxu0 0
  %117 = vmatprep.subr.bf16.mxu0 0
  %118 = vmatpush1.bf16.msra.mxu0 0
  %119 = vmatprep.subr.bf16.mxu0 0
  %120 = vmatpush1.bf16.msra.mxu0 0
  %121 = vmatprep.subr.bf16.mxu0 0
  %122 = vmatpush1.bf16.msra.mxu0 0
  %123 = vmatprep.subr.bf16.mxu0 0
  %124 = vmatpush1.bf16.msra.mxu0 0
  %125 = vmatprep.subr.bf16.mxu0 0
  %126 = vmatpush1.bf16.msra.mxu0 0
  %127 = vmatprep.subr.bf16.mxu0 0
  %128 = vmatpush1.bf16.msra.mxu0 0
  %129 = vmatprep.subr.bf16.mxu0 0
  %130 = vmatpush1.bf16.msra.mxu0 0
  %131 = vmatprep.subr.bf16.mxu0 0
  %132 = vmatpush1.bf16.msra.mxu0 0
  %133 = vmatprep.subr.bf16.mxu0 0
  %134 = vmatpush1.bf16.msra.mxu0 0
  %135 = vmatprep.subr.bf16.mxu0 0
  %136 = vmatpush1.bf16.msra.mxu0 0
  %137 = vmatprep.mubr.bf16.mxu0 0
  %138 = vmatmul.mubr.bf16.gmra.mrb[0].mxu0 %v103
  %v139 = vpop.f32.mrb[0].mxu0
  %v140 = vadd.f32 %v87, %v139
  %v141 = vpop.f32.mrb[0].mxu0
  %v142 = vpop.f32.mrb[0].mxu0
  %v143 = vadd.f32 %v87, %v142
  %v144 = vpop.f32.mrb[0].mxu0
  %145 = vdwg.mxu0
  %v146 = vpack.c.bf16 %v143, %v140
  %v148 = vunpack.c.l.b16 %v146
  %v149 = vunpack.c.h.b16 %v146
  %v150 = vpack.c.b16 %v148, %v148
  %v151 = vpack.c.b16 %v149, %v149
  %vm154 = vcmask 519168
  %155 = vst.msk [vmem:[%s5] sm:$0xf] %vm154, %v150
  %156 = vst.msk [vmem:[%s5 + $0x4] sm:$0xf] %vm154, %v151
  // Predicated region
  $region26: #{transformer_forward.43} parent=0 // pred_check
    _
  $region27: #{transformer_forward.43} parent=0 // pred_check_branch
    %158 = sbr.rel (0) target = $region29
  $region28: #{transformer_forward.43} parent=0 // pred_region
    _
  $region29: #{transformer_forward.43} parent=0 // pred_fallthru
    _
  // Predicated region
  $region30: #{transformer_forward.43} parent=0 // pred_check
    _
  $region31: #{transformer_forward.43} parent=0 // pred_check_branch
    %160 = sbr.rel (0) target = $region33
  $region32: #{transformer_forward.43} parent=0 // pred_region
    _
  $region33: #{transformer_forward.43} parent=0 // pred_fallthru
    _

// kernel: transformer_forward.33
$region0: #{transformer_forward.33}
  #allocation0 [shape = 'u32[]', space=smem, size = 0x4, offset = 0x4, fixed_abs, tag = 'smem constant byte address 0x4 - core index']
  #allocation1 [shape = 'u32[144,128]{1,0:T(1,128)}', space=vmem, size = 0x12000, scoped, tag = 'internal scratch']
  #allocation2 [shape = 'f32[16,32]{1,0:T(8,128)}', space=vmem, size = 0x2000, scoped, tag = 'scratch operand']
  %s0 = inlined_call_operand.vmem [shape: bf16[16,64], index: 0, kind: input, shape index: {}]
  %s1 = inlined_call_operand.vmem [shape: bf16[64,32], index: 1, kind: input, shape index: {}]
  %s2 = inlined_call_operand.vmem [shape: f32[1,32], index: 2, kind: input, shape index: {}]
  %s3 = inlined_call_operand.vmem [shape: bf16[16,32], index: 3, kind: input, shape index: {}]
  %s4 = inlined_call_operand.vmem [shape: f32[1,32], index: 4, kind: input, shape index: {}]
  %s5 = inlined_call_operand.vmem [shape: f32[1,32], index: 5, kind: input, shape index: {}]
  %s6 = inlined_call_operand.vmem [shape: bf16[16,32], index: 6, kind: output, shape index: {}]
  %s7 = sld [smem:[#allocation0]]
  $region42: #{transformer_forward.33} parent=0
    _
  %s9 = ssub.s32 1, %s7
  %s10 = scalar_select 0, %s9, %s7
  // Predicated region
  $region2: #{transformer_forward.33} parent=0 // pred_check
    _
  $region3: #{transformer_forward.33} parent=0 // pred_check_branch
    %12 = sbr.rel (0) target = $region5
  $region4: #{transformer_forward.33} parent=0 // pred_region
    _
  $region5: #{transformer_forward.33} parent=0 // pred_fallthru
    _
  // Predicated region
  $region6: #{transformer_forward.33} parent=0 // pred_check
    _
  $region7: #{transformer_forward.33} parent=0 // pred_check_branch
    %14 = sbr.rel (0) target = $region9
  $region8: #{transformer_forward.33} parent=0 // pred_region
    _
  $region9: #{transformer_forward.33} parent=0 // pred_fallthru
    _
  // Predicated region
  $region10: #{transformer_forward.33} parent=0 // pred_check
    _
  $region11: #{transformer_forward.33} parent=0 // pred_check_branch
    %16 = sbr.rel (0) target = $region13
  $region12: #{transformer_forward.33} parent=0 // pred_region
    _
  $region13: #{transformer_forward.33} parent=0 // pred_fallthru
    _
  // Predicated region
  $region14: #{transformer_forward.33} parent=0 // pred_check
    _
  $region15: #{transformer_forward.33} parent=0 // pred_check_branch
    %18 = sbr.rel (0) target = $region17
  $region16: #{transformer_forward.33} parent=0 // pred_region
    _
  $region17: #{transformer_forward.33} parent=0 // pred_fallthru
    _
  // Predicated region
  $region18: #{transformer_forward.33} parent=0 // pred_check
    _
  $region19: #{transformer_forward.33} parent=0 // pred_check_branch
    %20 = sbr.rel (0) target = $region21
  $region20: #{transformer_forward.33} parent=0 // pred_region
    _
  $region21: #{transformer_forward.33} parent=0 // pred_fallthru
    _
  // Predicated region
  $region22: #{transformer_forward.33} parent=0 // pred_check
    _
  $region23: #{transformer_forward.33} parent=0 // pred_check_branch
    %22 = sbr.rel (0) target = $region25
  $region24: #{transformer_forward.33} parent=0 // pred_region
    _
  $region25: #{transformer_forward.33} parent=0 // pred_fallthru
    _
  %p24 = scmp.eq.s32.totalorder 0, 0
  // Predicated region
  $region26: #{transformer_forward.33} parent=0 // pred_check
    %p25 = pneg %p24
  $region27: #{transformer_forward.33} parent=0 // pred_check_branch
    %27 = sbr.rel (%p25) target = $region29
  $region28: #{transformer_forward.33} parent=0 // pred_region
    %vm28 = vcmask 261120
    %29 = vst.msk [vmem:[#allocation2] sm:$0xff] %vm28, 0.0
    %30 = vst.msk [vmem:[#allocation2 + $0x8] sm:$0xff] %vm28, 0.0
  $region29: #{transformer_forward.33} parent=0 // pred_fallthru
    _
  %v31 = vld [vmem:[#allocation2] sm:$0xff]
  %v32 = vld [vmem:[#allocation2 + $0x8] sm:$0xff]
  %v33 = vld [vmem:[%s0] sm:$0xf]
  %v34 = vld [vmem:[%s0 + $0x4] sm:$0xf]
  %v35 = vld [vmem:[%s1] sm:$0xf]
  %v36 = vld [vmem:[%s1 + $0x4] sm:$0xf]
  %v37 = vld [vmem:[%s1 + $0x8] sm:$0xf]
  %v38 = vld [vmem:[%s1 + $0xc] sm:$0xf]
  %v39 = vld [vmem:[%s1 + $0x10] sm:$0xf]
  %v40 = vld [vmem:[%s1 + $0x14] sm:$0xf]
  %v41 = vld [vmem:[%s1 + $0x18] sm:$0xf]
  %v42 = vld [vmem:[%s1 + $0x1c] sm:$0xf]
  %v45 = vunpack.c.l.b16 %v33
  %v46 = vunpack.c.l.b16 %v34
  %v47 = vpack.c.b16 %v46, %v45
  %v56 = vunpack.c.l.b16 %v35
  %v57 = vunpack.c.l.b16 %v36
  %v58 = vunpack.c.l.b16 %v37
  %v59 = vunpack.c.l.b16 %v38
  %v60 = vunpack.c.l.b16 %v39
  %v61 = vunpack.c.l.b16 %v40
  %v62 = vunpack.c.l.b16 %v41
  %v63 = vunpack.c.l.b16 %v42
  %v64 = vpack.c.b16 %v57, %v56
  %v65 = vpack.c.b16 %v59, %v58
  %v66 = vpack.c.b16 %v61, %v60
  %v67 = vpack.c.b16 %v63, %v62
  %vm72 = vcmask 523264
  %v74 = vsel %vm72, %v47, 0
  %76 = vmatprep.subr.bf16.mxu0 0
  %77 = vmatpush1.bf16.msra.mxu0 %v64
  %78 = vmatprep.subr.bf16.mxu0 0
  %79 = vmatpush1.bf16.msra.mxu0 %v65
  %80 = vmatprep.subr.bf16.mxu0 0
  %81 = vmatpush1.bf16.msra.mxu0 %v66
  %82 = vmatprep.subr.bf16.mxu0 0
  %83 = vmatpush1.bf16.msra.mxu0 %v67
  %84 = vmatprep.subr.bf16.mxu0 0
  %85 = vmatpush1.bf16.msra.mxu0 0
  %86 = vmatprep.subr.bf16.mxu0 0
  %87 = vmatpush1.bf16.msra.mxu0 0
  %88 = vmatprep.subr.bf16.mxu0 0
  %89 = vmatpush1.bf16.msra.mxu0 0
  %90 = vmatprep.subr.bf16.mxu0 0
  %91 = vmatpush1.bf16.msra.mxu0 0
  %92 = vmatprep.subr.bf16.mxu0 0
  %93 = vmatpush1.bf16.msra.mxu0 0
  %94 = vmatprep.subr.bf16.mxu0 0
  %95 = vmatpush1.bf16.msra.mxu0 0
  %96 = vmatprep.subr.bf16.mxu0 0
  %97 = vmatpush1.bf16.msra.mxu0 0
  %98 = vmatprep.subr.bf16.mxu0 0
  %99 = vmatpush1.bf16.msra.mxu0 0
  %100 = vmatprep.subr.bf16.mxu0 0
  %101 = vmatpush1.bf16.msra.mxu0 0
  %102 = vmatprep.subr.bf16.mxu0 0
  %103 = vmatpush1.bf16.msra.mxu0 0
  %104 = vmatprep.subr.bf16.mxu0 0
  %105 = vmatpush1.bf16.msra.mxu0 0
  %106 = vmatprep.subr.bf16.mxu0 0
  %107 = vmatpush1.bf16.msra.mxu0 0
  %108 = vmatprep.mubr.bf16.mxu0 0
  %109 = vmatmul.mubr.bf16.gmra.mrb[0].mxu0 %v74
  %v110 = vpop.f32.mrb[0].mxu0
  %v111 = vadd.f32 0.0, %v110
  %v112 = vpop.f32.mrb[0].mxu0
  %v113 = vpop.f32.mrb[0].mxu0
  %v114 = vadd.f32 0.0, %v113
  %v115 = vpop.f32.mrb[0].mxu0
  %116 = vdwg.mxu0
  %v117 = vadd.f32 %v31, %v111
  %v118 = vadd.f32 %v32, %v114
  %vm119 = vcmask 261120
  %120 = vst.msk [vmem:[#allocation2] sm:$0xff] %vm119, %v117
  %121 = vst.msk [vmem:[#allocation2 + $0x8] sm:$0xff] %vm119, %v118
  // Predicated region
  $region30: #{transformer_forward.33} parent=0 // pred_check
    %p122 = pneg %p24
  $region31: #{transformer_forward.33} parent=0 // pred_check_branch
    %124 = sbr.rel (%p122) target = $region33
  $region32: #{transformer_forward.33} parent=0 // pred_region
    %v125 = vld [vmem:[#allocation2] sm:$0xff]
    %v126 = vld [vmem:[#allocation2 + $0x8] sm:$0xff]
    %v127 = vld [vmem:[%s2] sm:$0x1]
    %v129 = vlaneseq
    %v130 = vshrl.u32 %v129, 7
    %v131 = vsub.s32 0, %v130
    %v132 = vrot.slane %v127, %v131
    %v134 = vadd.f32 %v125, %v132
    %v135 = vadd.f32 %v126, %v132
    %v136 = vld [vmem:[%s3] sm:$0xf]
    %v137 = vld [vmem:[%s3 + $0x4] sm:$0xf]
    %v138 = vunpack.c.l.bf16 %v136
    %v139 = vunpack.c.l.bf16 %v137
    %v140 = vadd.f32 %v134, %v138
    %v141 = vadd.f32 %v135, %v139
    %v142 = vsel %vm119, %v140, 0.0
    %143 = vadd.xlane.f32.xlu0 %v142
    %v144 = vpop.xlane.xlu0 %143
    %v145 = vsel %vm119, %v141, 0.0
    %146 = vadd.xlane.f32.xlu0 %v145
    %v147 = vpop.xlane.xlu0 %146
    %v148 = vrcp.pop 32.0
    %v149 = vmul.f32 %v144, %v148
    %v150 = vmul.f32 %v147, %v148
    %v151 = vsub.f32 %v140, %v149
    %v152 = vsub.f32 %v141, %v150
    %v153 = vmul.f32 %v151, %v151
    %v154 = vmul.f32 %v152, %v152
    %v155 = vsel %vm119, %v153, 0.0
    %156 = vadd.xlane.f32.xlu0 %v155
    %v157 = vpop.xlane.xlu0 %156
    %v158 = vsel %vm119, %v154, 0.0
    %159 = vadd.xlane.f32.xlu0 %v158
    %v160 = vpop.xlane.xlu0 %159
    %v161 = vmul.f32 %v157, %v148
    %v162 = vmul.f32 %v160, %v148
    %v163 = vadd.f32 %v161, 1e-05
    %v164 = vadd.f32 %v162, 1e-05
    %v165 = vrsqrt.pop %v163
    %v166 = vrsqrt.pop %v164
    %v167 = vmul.f32 %v151, %v165
    %v168 = vmul.f32 %v152, %v166
    %v169 = vld [vmem:[%s4] sm:$0x1]
    %v171 = vlaneseq
    %v172 = vshrl.u32 %v171, 7
    %v173 = vsub.s32 0, %v172
    %v174 = vrot.slane %v169, %v173
    %v176 = vmul.f32 %v167, %v174
    %v177 = vmul.f32 %v168, %v174
    %v178 = vld [vmem:[%s5] sm:$0x1]
    %v180 = vlaneseq
    %v181 = vshrl.u32 %v180, 7
    %v182 = vsub.s32 0, %v181
    %v183 = vrot.slane %v178, %v182
    %v185 = vadd.f32 %v176, %v183
    %v186 = vadd.f32 %v177, %v183
    %v187 = vpack.c.bf16 %v186, %v185
    %v189 = vunpack.c.l.b16 %v187
    %v190 = vunpack.c.h.b16 %v187
    %v191 = vpack.c.b16 %v189, %v189
    %v192 = vpack.c.b16 %v190, %v190
    %vm195 = vcmask 257024
    %196 = vst.msk [vmem:[%s6] sm:$0xf] %vm195, %v191
    %197 = vst.msk [vmem:[%s6 + $0x4] sm:$0xf] %vm195, %v192
  $region33: #{transformer_forward.33} parent=0 // pred_fallthru
    _
  // Predicated region
  $region34: #{transformer_forward.33} parent=0 // pred_check
    _
  $region35: #{transformer_forward.33} parent=0 // pred_check_branch
    %199 = sbr.rel (0) target = $region37
  $region36: #{transformer_forward.33} parent=0 // pred_region
    _
  $region37: #{transformer_forward.33} parent=0 // pred_fallthru
    _
  // Predicated region
  $region38: #{transformer_forward.33} parent=0 // pred_check
    _
  $region39: #{transformer_forward.33} parent=0 // pred_check_branch
    %201 = sbr.rel (0) target = $region41
  $region40: #{transformer_forward.33} parent=0 // pred_region
    _
  $region41: #{transformer_forward.33} parent=0 // pred_fallthru
    _

// kernel: transformer_forward.32
$region0: #{transformer_forward.32}
  #allocation0 [shape = 'u32[]', space=smem, size = 0x4, offset = 0x4, fixed_abs, tag = 'smem constant byte address 0x4 - core index']
  #allocation1 [shape = 'u32[144,128]{1,0:T(1,128)}', space=vmem, size = 0x12000, scoped, tag = 'internal scratch']
  #allocation2 [shape = 'bf16[16,32]{1,0:T(16,128)(2,1)}', space=vmem, size = 0x1000, scoped, tag = 'scratch operand']
  %s0 = inlined_call_operand.vmem [shape: bf16[16,32], index: 0, kind: input, shape index: {}]
  %s1 = inlined_call_operand.vmem [shape: f32[1,32], index: 1, kind: input, shape index: {}]
  %s2 = inlined_call_operand.vmem [shape: f32[1,32], index: 2, kind: input, shape index: {}]
  %s3 = inlined_call_operand.vmem [shape: bf16[32,64], index: 3, kind: input, shape index: {}]
  %s4 = inlined_call_operand.vmem [shape: f32[1,64], index: 4, kind: input, shape index: {}]
  %s5 = inlined_call_operand.vmem [shape: bf16[16,64], index: 5, kind: output, shape index: {}]
  %s6 = sld [smem:[#allocation0]]
  $region34: #{transformer_forward.32} parent=0
    _
  %s8 = ssub.s32 1, %s6
  %s9 = scalar_select 0, %s8, %s6
  // Predicated region
  $region2: #{transformer_forward.32} parent=0 // pred_check
    _
  $region3: #{transformer_forward.32} parent=0 // pred_check_branch
    %11 = sbr.rel (0) target = $region5
  $region4: #{transformer_forward.32} parent=0 // pred_region
    _
  $region5: #{transformer_forward.32} parent=0 // pred_fallthru
    _
  // Predicated region
  $region6: #{transformer_forward.32} parent=0 // pred_check
    _
  $region7: #{transformer_forward.32} parent=0 // pred_check_branch
    %13 = sbr.rel (0) target = $region9
  $region8: #{transformer_forward.32} parent=0 // pred_region
    _
  $region9: #{transformer_forward.32} parent=0 // pred_fallthru
    _
  // Predicated region
  $region10: #{transformer_forward.32} parent=0 // pred_check
    _
  $region11: #{transformer_forward.32} parent=0 // pred_check_branch
    %15 = sbr.rel (0) target = $region13
  $region12: #{transformer_forward.32} parent=0 // pred_region
    _
  $region13: #{transformer_forward.32} parent=0 // pred_fallthru
    _
  // Predicated region
  $region14: #{transformer_forward.32} parent=0 // pred_check
    _
  $region15: #{transformer_forward.32} parent=0 // pred_check_branch
    %17 = sbr.rel (0) target = $region17
  $region16: #{transformer_forward.32} parent=0 // pred_region
    _
  $region17: #{transformer_forward.32} parent=0 // pred_fallthru
    _
  // Predicated region
  $region18: #{transformer_forward.32} parent=0 // pred_check
    _
  $region19: #{transformer_forward.32} parent=0 // pred_check_branch
    %19 = sbr.rel (0) target = $region21
  $region20: #{transformer_forward.32} parent=0 // pred_region
    _
  $region21: #{transformer_forward.32} parent=0 // pred_fallthru
    _
  %p21 = scmp.eq.s32.totalorder 0, 0
  // Predicated region
  $region22: #{transformer_forward.32} parent=0 // pred_check
    %p22 = pneg %p21
  $region23: #{transformer_forward.32} parent=0 // pred_check_branch
    %24 = sbr.rel (%p22) target = $region25
  $region24: #{transformer_forward.32} parent=0 // pred_region
    %v25 = vld [vmem:[%s0] sm:$0xf]
    %v26 = vld [vmem:[%s0 + $0x4] sm:$0xf]
    %v27 = vunpack.c.l.bf16 %v25
    %v28 = vunpack.c.l.bf16 %v26
    %vm29 = vcmask 261120
    %v30 = vsel %vm29, %v27, 0.0
    %31 = vadd.xlane.f32.xlu0 %v30
    %v32 = vpop.xlane.xlu0 %31
    %v33 = vsel %vm29, %v28, 0.0
    %34 = vadd.xlane.f32.xlu0 %v33
    %v35 = vpop.xlane.xlu0 %34
    %v36 = vrcp.pop 32.0
    %v37 = vmul.f32 %v32, %v36
    %v38 = vmul.f32 %v35, %v36
    %v39 = vsub.f32 %v27, %v37
    %v40 = vsub.f32 %v28, %v38
    %v41 = vmul.f32 %v39, %v39
    %v42 = vmul.f32 %v40, %v40
    %v43 = vsel %vm29, %v41, 0.0
    %44 = vadd.xlane.f32.xlu0 %v43
    %v45 = vpop.xlane.xlu0 %44
    %v46 = vsel %vm29, %v42, 0.0
    %47 = vadd.xlane.f32.xlu0 %v46
    %v48 = vpop.xlane.xlu0 %47
    %v49 = vmul.f32 %v45, %v36
    %v50 = vmul.f32 %v48, %v36
    %v51 = vadd.f32 %v49, 1e-05
    %v52 = vadd.f32 %v50, 1e-05
    %v53 = vrsqrt.pop %v51
    %v54 = vrsqrt.pop %v52
    %v55 = vmul.f32 %v39, %v53
    %v56 = vmul.f32 %v40, %v54
    %v57 = vld [vmem:[%s1] sm:$0x1]
    %v59 = vlaneseq
    %v60 = vshrl.u32 %v59, 7
    %v61 = vsub.s32 0, %v60
    %v62 = vrot.slane %v57, %v61
    %v64 = vmul.f32 %v55, %v62
    %v65 = vmul.f32 %v56, %v62
    %v66 = vld [vmem:[%s2] sm:$0x1]
    %v68 = vlaneseq
    %v69 = vshrl.u32 %v68, 7
    %v70 = vsub.s32 0, %v69
    %v71 = vrot.slane %v66, %v70
    %v73 = vadd.f32 %v64, %v71
    %v74 = vadd.f32 %v65, %v71
    %v75 = vpack.c.bf16 %v74, %v73
    %76 = vst.msk [vmem:[#allocation2] sm:$0xff] %vm29, %v75
  $region25: #{transformer_forward.32} parent=0 // pred_fallthru
    _
  %v77 = vld [vmem:[#allocation2] sm:$0xff]
  %v78 = vld [vmem:[%s3] sm:$0xf]
  %v79 = vld [vmem:[%s3 + $0x4] sm:$0xf]
  %v80 = vld [vmem:[%s3 + $0x8] sm:$0xf]
  %v81 = vld [vmem:[%s3 + $0xc] sm:$0xf]
  %v82 = vld [vmem:[%s4] sm:$0x1]
  %v84 = vlaneseq
  %v85 = vshrl.u32 %v84, 7
  %v86 = vsub.s32 0, %v85
  %v87 = vrot.slane %v82, %v86
  %v93 = vunpack.c.l.b16 %v78
  %v94 = vunpack.c.l.b16 %v79
  %v95 = vunpack.c.l.b16 %v80
  %v96 = vunpack.c.l.b16 %v81
  %v97 = vpack.c.b16 %v94, %v93
  %v98 = vpack.c.b16 %v96, %v95
  %vm101 = vcmask 261120
  %v103 = vsel %vm101, %v77, 0
  %105 = vmatprep.subr.bf16.mxu0 0
  %106 = vmatpush1.bf16.msra.mxu0 %v97
  %107 = vmatprep.subr.bf16.mxu0 0
  %108 = vmatpush1.bf16.msra.mxu0 %v98
  %109 = vmatprep.subr.bf16.mxu0 0
  %110 = vmatpush1.bf16.msra.mxu0 0
  %111 = vmatprep.subr.bf16.mxu0 0
  %112 = vmatpush1.bf16.msra.mxu0 0
  %113 = vmatprep.subr.bf16.mxu0 0
  %114 = vmatpush1.bf16.msra.mxu0 0
  %115 = vmatprep.subr.bf16.mxu0 0
  %116 = vmatpush1.bf16.msra.mxu0 0
  %117 = vmatprep.subr.bf16.mxu0 0
  %118 = vmatpush1.bf16.msra.mxu0 0
  %119 = vmatprep.subr.bf16.mxu0 0
  %120 = vmatpush1.bf16.msra.mxu0 0
  %121 = vmatprep.subr.bf16.mxu0 0
  %122 = vmatpush1.bf16.msra.mxu0 0
  %123 = vmatprep.subr.bf16.mxu0 0
  %124 = vmatpush1.bf16.msra.mxu0 0
  %125 = vmatprep.subr.bf16.mxu0 0
  %126 = vmatpush1.bf16.msra.mxu0 0
  %127 = vmatprep.subr.bf16.mxu0 0
  %128 = vmatpush1.bf16.msra.mxu0 0
  %129 = vmatprep.subr.bf16.mxu0 0
  %130 = vmatpush1.bf16.msra.mxu0 0
  %131 = vmatprep.subr.bf16.mxu0 0
  %132 = vmatpush1.bf16.msra.mxu0 0
  %133 = vmatprep.subr.bf16.mxu0 0
  %134 = vmatpush1.bf16.msra.mxu0 0
  %135 = vmatprep.subr.bf16.mxu0 0
  %136 = vmatpush1.bf16.msra.mxu0 0
  %137 = vmatprep.mubr.bf16.mxu0 0
  %138 = vmatmul.mubr.bf16.gmra.mrb[0].mxu0 %v103
  %v139 = vpop.f32.mrb[0].mxu0
  %v140 = vadd.f32 %v87, %v139
  %v141 = vpop.f32.mrb[0].mxu0
  %v142 = vpop.f32.mrb[0].mxu0
  %v143 = vadd.f32 %v87, %v142
  %v144 = vpop.f32.mrb[0].mxu0
  %145 = vdwg.mxu0
  %v146 = vmul.f32 %v140, 0.5
  %v147 = vmul.f32 %v143, 0.5
  %v148 = vmul.f32 %v140, 0.044715
  %v149 = vmul.f32 %v143, 0.044715
  %v150 = vmul.f32 %v148, %v140
  %v151 = vmul.f32 %v149, %v143
  %v152 = vmul.f32 %v150, %v140
  %v153 = vmul.f32 %v151, %v143
  %v154 = vadd.f32 %v140, %v152
  %v155 = vadd.f32 %v143, %v153
  %v156 = vmul.f32 %v154, 0.7978846
  %v157 = vmul.f32 %v155, 0.7978846
  %v158 = vtanh.pop %v156
  %v159 = vtanh.pop %v157
  %v160 = vadd.f32 %v158, 1.0
  %v161 = vadd.f32 %v159, 1.0
  %v162 = vmul.f32 %v146, %v160
  %v163 = vmul.f32 %v147, %v161
  %v164 = vpack.c.bf16 %v163, %v162
  %v166 = vunpack.c.l.b16 %v164
  %v167 = vunpack.c.h.b16 %v164
  %v168 = vpack.c.b16 %v166, %v166
  %v169 = vpack.c.b16 %v167, %v167
  %vm172 = vcmask 519168
  %173 = vst.msk [vmem:[%s5] sm:$0xf] %vm172, %v168
  %174 = vst.msk [vmem:[%s5 + $0x4] sm:$0xf] %vm172, %v169
  // Predicated region
  $region26: #{transformer_forward.32} parent=0 // pred_check
    _
  $region27: #{transformer_forward.32} parent=0 // pred_check_branch
    %176 = sbr.rel (0) target = $region29
  $region28: #{transformer_forward.32} parent=0 // pred_region
    _
  $region29: #{transformer_forward.32} parent=0 // pred_fallthru
    _
  // Predicated region
  $region30: #{transformer_forward.32} parent=0 // pred_check
    _
  $region31: #{transformer_forward.32} parent=0 // pred_check_branch
    %178 = sbr.rel (0) target = $region33
  $region32: #{transformer_forward.32} parent=0 // pred_region
    _
  $region33: #{transformer_forward.32} parent=0 // pred_fallthru
    _

// kernel: transformer_forward.57
$region0: #{transformer_forward.57}
  #allocation0 [shape = 'u32[]', space=smem, size = 0x4, offset = 0x4, fixed_abs, tag = 'smem constant byte address 0x4 - core index']
  #allocation1 [shape = 'u32[144,128]{1,0:T(1,128)}', space=vmem, size = 0x12000, scoped, tag = 'internal scratch']
  #allocation2 [shape = 'f32[16,60]{1,0:T(8,128)}', space=vmem, size = 0x2000, scoped, tag = 'scratch operand']
  %s0 = inlined_call_operand.vmem [shape: bf16[16,32], index: 0, kind: input, shape index: {}]
  %s1 = inlined_call_operand.vmem [shape: bf16[32,60], index: 1, kind: input, shape index: {}]
  %s2 = inlined_call_operand.vmem [shape: f32[1,60], index: 2, kind: input, shape index: {}]
  %s3 = inlined_call_operand.hbm [shape: f32[16,60], index: 3, kind: output, shape index: {}]
  %s4 = sld [smem:[#allocation0]]
  $region30: #{transformer_forward.57} parent=0
    _
  %s6 = ssub.s32 1, %s4
  %s7 = scalar_select 0, %s6, %s4
  $region1: #{transformer_forward.57} parent=0
    #allocation3 [shape = 'u8[8192]{0}', space=vmem, size = 0x2000, scoped, tag = 'output window, operand 0, single buffered']
    #allocation4 [shape = 's32[1]{0}', space=sflag, size = 0x4, scoped, tag = 'scoped memory for transformer_forward.57']
    %8 = vsyncpa [#allocation4], 0
    // Predicated region
    $region2: #{transformer_forward.57} parent=1 // pred_check
      _
    $region3: #{transformer_forward.57} parent=1 // pred_check_branch
      %10 = sbr.rel (0) target = $region5
    $region4: #{transformer_forward.57} parent=1 // pred_region
      _
    $region5: #{transformer_forward.57} parent=1 // pred_fallthru
      _
    // Predicated region
    $region6: #{transformer_forward.57} parent=1 // pred_check
      _
    $region7: #{transformer_forward.57} parent=1 // pred_check_branch
      %12 = sbr.rel (0) target = $region9
    $region8: #{transformer_forward.57} parent=1 // pred_region
      _
    $region9: #{transformer_forward.57} parent=1 // pred_fallthru
      _
    // Predicated region
    $region10: #{transformer_forward.57} parent=1 // pred_check
      _
    $region11: #{transformer_forward.57} parent=1 // pred_check_branch
      %14 = sbr.rel (0) target = $region13
    $region12: #{transformer_forward.57} parent=1 // pred_region
      _
    $region13: #{transformer_forward.57} parent=1 // pred_fallthru
      _
    %p16 = scmp.eq.s32.totalorder 0, 0
    // Predicated region
    $region14: #{transformer_forward.57} parent=1 // pred_check
      %p17 = pneg %p16
    $region15: #{transformer_forward.57} parent=1 // pred_check_branch
      %19 = sbr.rel (%p17) target = $region17
    $region16: #{transformer_forward.57} parent=1 // pred_region
      %vm20 = vcmask 490496
      %21 = vst.msk [vmem:[#allocation2] sm:$0xff] %vm20, 0.0
      %22 = vst.msk [vmem:[#allocation2 + $0x8] sm:$0xff] %vm20, 0.0
    $region17: #{transformer_forward.57} parent=1 // pred_fallthru
      _
    %v23 = vld [vmem:[#allocation2] sm:$0xff]
    %v24 = vld [vmem:[#allocation2 + $0x8] sm:$0xff]
    %v25 = vld [vmem:[%s0] sm:$0xf]
    %v26 = vld [vmem:[%s0 + $0x4] sm:$0xf]
    %v27 = vld [vmem:[%s1] sm:$0xf]
    %v28 = vld [vmem:[%s1 + $0x4] sm:$0xf]
    %v29 = vld [vmem:[%s1 + $0x8] sm:$0xf]
    %v30 = vld [vmem:[%s1 + $0xc] sm:$0xf]
    %v33 = vunpack.c.l.b16 %v25
    %v34 = vunpack.c.l.b16 %v26
    %v35 = vpack.c.b16 %v34, %v33
    %v40 = vunpack.c.l.b16 %v27
    %v41 = vunpack.c.l.b16 %v28
    %v42 = vunpack.c.l.b16 %v29
    %v43 = vunpack.c.l.b16 %v30
    %v44 = vpack.c.b16 %v41, %v40
    %v45 = vpack.c.b16 %v43, %v42
    %vm48 = vcmask 261120
    %v50 = vsel %vm48, %v35, 0
    %52 = vmatprep.subr.bf16.mxu0 0
    %53 = vmatpush1.bf16.msra.mxu0 %v44
    %54 = vmatprep.subr.bf16.mxu0 0
    %55 = vmatpush1.bf16.msra.mxu0 %v45
    %56 = vmatprep.subr.bf16.mxu0 0
    %57 = vmatpush1.bf16.msra.mxu0 0
    %58 = vmatprep.subr.bf16.mxu0 0
    %59 = vmatpush1.bf16.msra.mxu0 0
    %60 = vmatprep.subr.bf16.mxu0 0
    %61 = vmatpush1.bf16.msra.mxu0 0
    %62 = vmatprep.subr.bf16.mxu0 0
    %63 = vmatpush1.bf16.msra.mxu0 0
    %64 = vmatprep.subr.bf16.mxu0 0
    %65 = vmatpush1.bf16.msra.mxu0 0
    %66 = vmatprep.subr.bf16.mxu0 0
    %67 = vmatpush1.bf16.msra.mxu0 0
    %68 = vmatprep.subr.bf16.mxu0 0
    %69 = vmatpush1.bf16.msra.mxu0 0
    %70 = vmatprep.subr.bf16.mxu0 0
    %71 = vmatpush1.bf16.msra.mxu0 0
    %72 = vmatprep.subr.bf16.mxu0 0
    %73 = vmatpush1.bf16.msra.mxu0 0
    %74 = vmatprep.subr.bf16.mxu0 0
    %75 = vmatpush1.bf16.msra.mxu0 0
    %76 = vmatprep.subr.bf16.mxu0 0
    %77 = vmatpush1.bf16.msra.mxu0 0
    %78 = vmatprep.subr.bf16.mxu0 0
    %79 = vmatpush1.bf16.msra.mxu0 0
    %80 = vmatprep.subr.bf16.mxu0 0
    %81 = vmatpush1.bf16.msra.mxu0 0
    %82 = vmatprep.subr.bf16.mxu0 0
    %83 = vmatpush1.bf16.msra.mxu0 0
    %84 = vmatprep.mubr.bf16.mxu0 0
    %85 = vmatmul.mubr.bf16.gmra.mrb[0].mxu0 %v50
    %v86 = vpop.f32.mrb[0].mxu0
    %v87 = vadd.f32 0.0, %v86
    %v88 = vpop.f32.mrb[0].mxu0
    %v89 = vpop.f32.mrb[0].mxu0
    %v90 = vadd.f32 0.0, %v89
    %v91 = vpop.f32.mrb[0].mxu0
    %92 = vdwg.mxu0
    %v93 = vadd.f32 %v23, %v87
    %v94 = vadd.f32 %v24, %v90
    %vm95 = vcmask 490496
    %96 = vst.msk [vmem:[#allocation2] sm:$0xff] %vm95, %v93
    %97 = vst.msk [vmem:[#allocation2 + $0x8] sm:$0xff] %vm95, %v94
    // Predicated region
    $region18: #{transformer_forward.57} parent=1 // pred_check
      %p98 = pneg %p16
    $region19: #{transformer_forward.57} parent=1 // pred_check_branch
      %100 = sbr.rel (%p98) target = $region21
    $region20: #{transformer_forward.57} parent=1 // pred_region
      %v101 = vld [vmem:[#allocation2] sm:$0xff]
      %v102 = vld [vmem:[#allocation2 + $0x8] sm:$0xff]
      %v103 = vld [vmem:[%s2] sm:$0x1]
      %v105 = vlaneseq
      %v106 = vshrl.u32 %v105, 7
      %v107 = vsub.s32 0, %v106
      %v108 = vrot.slane %v103, %v107
      %v110 = vadd.f32 %v101, %v108
      %v111 = vadd.f32 %v102, %v108
      %112 = vst.msk [vmem:[#allocation3] sm:$0xff] %vm95, %v110
      %113 = vst.msk [vmem:[#allocation3 + $0x8] sm:$0xff] %vm95, %v111
    $region21: #{transformer_forward.57} parent=1 // pred_fallthru
      _
    // Predicated region
    $region22: #{transformer_forward.57} parent=1 // pred_check
      _
    $region23: #{transformer_forward.57} parent=1 // pred_check_branch
      %115 = sbr.rel (0) target = $region25
    $region24: #{transformer_forward.57} parent=1 // pred_region
      %s117 = ssub.s32 256, 256
      %118 = vsyncadd [#allocation4], %s117
      %s119 = sshll.u32 [#allocation3], 4
      %s120 = int_to_ptr.vmem [resolvable:$true] %s119
      %125 = dma.vmem_to_hbm [thread:$0]  %s120, 256, %s3, [#allocation4], 128, 128, 8
    $region25: #{transformer_forward.57} parent=1 // pred_fallthru
      _
    // Predicated region
    $region26: #{transformer_forward.57} parent=1 // pred_check
      _
    $region27: #{transformer_forward.57} parent=1 // pred_check_branch
      %127 = sbr.rel (0) target = $region29
    $region28: #{transformer_forward.57} parent=1 // pred_region
      %128 = dma.done [#allocation4], 256
    $region29: #{transformer_forward.57} parent=1 // pred_fallthru
      _
    %129 = vsyncpa [#allocation4], 1

// kernel: transformer_forward.44
$region0: #{transformer_forward.44}
  #allocation0 [shape = 'u32[]', space=smem, size = 0x4, offset = 0x4, fixed_abs, tag = 'smem constant byte address 0x4 - core index']
  #allocation1 [shape = 'u32[144,128]{1,0:T(1,128)}', space=vmem, size = 0x12000, scoped, tag = 'internal scratch']
  %s0 = inlined_call_operand.vmem [shape: bf16[2,8,32], index: 0, kind: input, shape index: {}]
  %s1 = inlined_call_operand.vmem [shape: bf16[2,8,64], index: 1, kind: input, shape index: {}]
  %s2 = inlined_call_operand.vmem [shape: f32[2,1,8], index: 2, kind: input, shape index: {}]
  %s3 = inlined_call_operand.vmem [shape: bf16[2,8,32], index: 3, kind: output, shape index: {}]
  %s4 = sld [smem:[#allocation0]]
  $region45: #{transformer_forward.44} parent=0
    _
  %s6 = ssub.s32 1, %s4
  %s7 = scalar_select 0, %s6, %s4
  loop: start=0, step=1, limit=4
  $region2: #{transformer_forward.44} parent=0 // loop_pre_header
    _
  $region3: #{transformer_forward.44} parent=0 // loop_header
    %s9 = sphi 0, %s13
    %p10 = scmp.ge.s32.totalorder %s9, 4
    %s19 = sphi 0, %s21
    %s22 = sphi 0, %s19
    %s23 = sphi 0, %s22
    %s39 = sphi 0, %s23
    %s45 = sphi 0, %s47
    %s48 = sphi 0, %s45
    %s49 = sphi 0, %s48
    %s65 = sphi 0, %s49
    %s71 = sphi 0, %s73
    %s74 = sphi 0, %s71
    %s75 = sphi 0, %s74
    %s91 = sphi 0, %s75
    %s97 = sphi 0, %s99
    %s100 = sphi 0, %s97
    %s101 = sphi 0, %s100
    %s117 = sphi 0, %s101
  $region4: #{transformer_forward.44} parent=0 // loop_header_branch
    %12 = sbr.rel (%p10) target = $region8
  $region5: #{transformer_forward.44} parent=0 // loop_body
    %s14 = ssub.s32 %s9, 1
    %s15 = ssub.s32 %s9, 2
    %s16 = sadd.s32 %s9, 1
    %s17 = ssub.s32 %s9, %s16
    %p18 = scmp.eq.s32.totalorder %s17, 0
    %s20 = sadd.s32 %s19, 1
    %s21 = scalar_select %p18, %s19, %s20
    %p24 = pneg %p18
    %p25 = scmp.eq.s32.totalorder %s9, 1
    %p26 = por %p24, %p25
    %p27 = scmp.ne.s32.totalorder %s19, %s22
    %p28 = scmp.eq.s32.totalorder %s9, 0
    %p29 = por %p27, %p28
    %p30 = scmp.ne.s32.totalorder %s19, %s22
    %p31 = scmp.eq.s32.totalorder %s14, 1
    %p32 = por %p30, %p31
    %p33 = scmp.ne.s32.totalorder %s22, %s23
    %p34 = scmp.eq.s32.totalorder %s14, 0
    %p35 = por %p33, %p34
    %p36 = scmp.ne.s32.totalorder %s22, %s23
    %p37 = scmp.eq.s32.totalorder %s15, 1
    %p38 = por %p36, %p37
    %p40 = scmp.ne.s32.totalorder %s23, %s39
    %p41 = scmp.eq.s32.totalorder %s15, 0
    %p42 = por %p40, %p41
    %s43 = ssub.s32 %s9, %s16
    %p44 = scmp.eq.s32.totalorder %s43, 0
    %s46 = sadd.s32 %s45, 1
    %s47 = scalar_select %p44, %s45, %s46
    %p50 = pneg %p44
    %p51 = scmp.eq.s32.totalorder %s9, 1
    %p52 = por %p50, %p51
    %p53 = scmp.ne.s32.totalorder %s45, %s48
    %p54 = scmp.eq.s32.totalorder %s9, 0
    %p55 = por %p53, %p54
    %p56 = scmp.ne.s32.totalorder %s45, %s48
    %p57 = scmp.eq.s32.totalorder %s14, 1
    %p58 = por %p56, %p57
    %p59 = scmp.ne.s32.totalorder %s48, %s49
    %p60 = scmp.eq.s32.totalorder %s14, 0
    %p61 = por %p59, %p60
    %p62 = scmp.ne.s32.totalorder %s48, %s49
    %p63 = scmp.eq.s32.totalorder %s15, 1
    %p64 = por %p62, %p63
    %p66 = scmp.ne.s32.totalorder %s49, %s65
    %p67 = scmp.eq.s32.totalorder %s15, 0
    %p68 = por %p66, %p67
    %s69 = ssub.s32 %s9, %s16
    %p70 = scmp.eq.s32.totalorder %s69, 0
    %s72 = sadd.s32 %s71, 1
    %s73 = scalar_select %p70, %s71, %s72
    %p76 = pneg %p70
    %p77 = scmp.eq.s32.totalorder %s9, 1
    %p78 = por %p76, %p77
    %p79 = scmp.ne.s32.totalorder %s71, %s74
    %p80 = scmp.eq.s32.totalorder %s9, 0
    %p81 = por %p79, %p80
    %p82 = scmp.ne.s32.totalorder %s71, %s74
    %p83 = scmp.eq.s32.totalorder %s14, 1
    %p84 = por %p82, %p83
    %p85 = scmp.ne.s32.totalorder %s74, %s75
    %p86 = scmp.eq.s32.totalorder %s14, 0
    %p87 = por %p85, %p86
    %p88 = scmp.ne.s32.totalorder %s74, %s75
    %p89 = scmp.eq.s32.totalorder %s15, 1
    %p90 = por %p88, %p89
    %p92 = scmp.ne.s32.totalorder %s75, %s91
    %p93 = scmp.eq.s32.totalorder %s15, 0
    %p94 = por %p92, %p93
    %s95 = ssub.s32 %s9, %s16
    %p96 = scmp.eq.s32.totalorder %s95, 0
    %s98 = sadd.s32 %s97, 1
    %s99 = scalar_select %p96, %s97, %s98
    %p102 = pneg %p96
    %p103 = scmp.eq.s32.totalorder %s9, 1
    %p104 = por %p102, %p103
    %p105 = scmp.ne.s32.totalorder %s97, %s100
    %p106 = scmp.eq.s32.totalorder %s9, 0
    %p107 = por %p105, %p106
    %p108 = scmp.ne.s32.totalorder %s97, %s100
    %p109 = scmp.eq.s32.totalorder %s14, 1
    %p110 = por %p108, %p109
    %p111 = scmp.ne.s32.totalorder %s100, %s101
    %p112 = scmp.eq.s32.totalorder %s14, 0
    %p113 = por %p111, %p112
    %p114 = scmp.ne.s32.totalorder %s100, %s101
    %p115 = scmp.eq.s32.totalorder %s15, 1
    %p116 = por %p114, %p115
    %p118 = scmp.ne.s32.totalorder %s101, %s117
    %p119 = scmp.eq.s32.totalorder %s15, 0
    %p120 = por %p118, %p119
    %p121 = scmp.le.s32.totalorder 1, %s9
    %p122 = scmp.lt.s32.totalorder %s9, 3
    %p123 = pnand %p121, %p122
    %p124 = pneg %p123
    // Predicated region
    $region9: #{transformer_forward.44} parent=5 // pred_check
      _
    $region10: #{transformer_forward.44} parent=5 // pred_check_branch
      %126 = sbr.rel (%p123) target = $region12
    $region11: #{transformer_forward.44} parent=5 // pred_region
      %s127 = ssub.s32 %s9, 1
    $region12: #{transformer_forward.44} parent=5 // pred_fallthru
      _
    %p128 = scmp.lt.s32.totalorder %s9, 2
    // Predicated region
    $region13: #{transformer_forward.44} parent=5 // pred_check
      %p129 = pneg %p128
    $region14: #{transformer_forward.44} parent=5 // pred_check_branch
      %131 = sbr.rel (%p129) target = $region16
    $region15: #{transformer_forward.44} parent=5 // pred_region
      // Predicated region
      $region17: #{transformer_forward.44} parent=15 // pred_check
        %p132 = pneg %p29
      $region18: #{transformer_forward.44} parent=15 // pred_check_branch
        %134 = sbr.rel (%p132) target = $region20
      $region19: #{transformer_forward.44} parent=15 // pred_region
        %p135 = scmp.lt.s32.totalorder %s9, 1
        %s136 = scalar_select %p135, %s9, 1
        %s137 = smul.addr %s136, 4
        %s138 = scalar_lea.vmem %s0, %s137
      $region20: #{transformer_forward.44} parent=15 // pred_fallthru
        _
      // Predicated region
      $region21: #{transformer_forward.44} parent=15 // pred_check
        %p139 = pneg %p55
      $region22: #{transformer_forward.44} parent=15 // pred_check_branch
        %141 = sbr.rel (%p139) target = $region24
      $region23: #{transformer_forward.44} parent=15 // pred_region
        %p142 = scmp.lt.s32.totalorder %s9, 1
        %s143 = scalar_select %p142, %s9, 1
        %s144 = smul.addr %s143, 4
        %s145 = scalar_lea.vmem %s1, %s144
      $region24: #{transformer_forward.44} parent=15 // pred_fallthru
        _
      // Predicated region
      $region25: #{transformer_forward.44} parent=15 // pred_check
        %p146 = pneg %p81
      $region26: #{transformer_forward.44} parent=15 // pred_check_branch
        %148 = sbr.rel (%p146) target = $region28
      $region27: #{transformer_forward.44} parent=15 // pred_region
        %p149 = scmp.lt.s32.totalorder %s9, 1
        %s150 = scalar_select %p149, %s9, 1
        %s151 = scalar_lea.vmem %s2, %s150
      $region28: #{transformer_forward.44} parent=15 // pred_fallthru
        _
    $region16: #{transformer_forward.44} parent=5 // pred_fallthru
      _
    %p152 = scmp.le.s32.totalorder 1, %s9
    %p153 = scmp.lt.s32.totalorder %s9, 3
    %p154 = pnand %p152, %p153
    %p155 = pneg %p154
    // Predicated region
    $region29: #{transformer_forward.44} parent=5 // pred_check
      _
    $region30: #{transformer_forward.44} parent=5 // pred_check_branch
      %157 = sbr.rel (%p154) target = $region32
    $region31: #{transformer_forward.44} parent=5 // pred_region
      %s158 = ssub.s32 %s9, 1
      %p159 = scmp.lt.s32.totalorder %s14, 1
      %s160 = scalar_select %p159, %s14, 1
      %s161 = smul.addr %s160, 4
      %s162 = scalar_lea.vmem %s0, %s161
      %p163 = pneg %p35
      %p164 = pneg %p32
      %p165 = scmp.lt.s32.totalorder %s14, 1
      %s166 = scalar_select %p165, %s14, 1
      %s167 = smul.addr %s166, 4
      %s168 = scalar_lea.vmem %s1, %s167
      %p169 = pneg %p61
      %p170 = pneg %p58
      %p171 = scmp.lt.s32.totalorder %s14, 1
      %s172 = scalar_select %p171, %s14, 1
      %s173 = scalar_lea.vmem %s2, %s172
      %p174 = pneg %p87
      %p175 = pneg %p84
      %p176 = pneg %p113
      %p177 = pneg %p110
      %p178 = scmp.lt.s32.totalorder %s14, 1
      %s179 = scalar_select %p178, %s14, 1
      %s180 = smul.addr %s179, 4
      %s181 = scalar_lea.vmem %s3, %s180
      %p182 = scmp.lt.s32.totalorder %s14, 1
      %s183 = scalar_select %p182, %s14, 1
      %s184 = smul.addr %s183, 4
      %s185 = scalar_lea.vmem %s0, %s184
      %p186 = scmp.lt.s32.totalorder %s14, 1
      %s187 = scalar_select %p186, %s14, 1
      %s188 = smul.addr %s187, 4
      %s189 = scalar_lea.vmem %s1, %s188
      %p190 = scmp.lt.s32.totalorder %s14, 1
      %s191 = scalar_select %p190, %s14, 1
      %s192 = scalar_lea.vmem %s2, %s191
      %p193 = scmp.lt.s32.totalorder %s14, 1
      %s194 = scalar_select %p193, %s14, 1
      %s195 = smul.addr %s194, 4
      %s196 = scalar_lea.vmem %s3, %s195
      %v198 = vld [vmem:[%s189] sm:$0xf]
      %v199 = vld [vmem:[%s192] sm:$0x1]
      %vm200 = vcmp.ne.f32.partialorder %v199, 0.0
      %v201 = vld [vmem:[%s185] sm:$0xf]
      %vm202 = vcmask 130048
      %v204 = vsel %vm202, %v201, 0
      %v207 = vsel %vm202, %v198, 0
      %209 = vmatprep.subr.bf16.mxu0 0
      %210 = vmatpush1.bf16.xpose.msra.mxu0 %v207
      %211 = vmatprep.subr.bf16.mxu0 0
      %212 = vmatpush1.bf16.xpose.msra.mxu0 0
      %213 = vmatprep.subr.bf16.mxu0 0
      %214 = vmatpush1.bf16.xpose.msra.mxu0 0
      %215 = vmatprep.subr.bf16.mxu0 0
      %216 = vmatpush1.bf16.xpose.msra.mxu0 0
      %217 = vmatprep.subr.bf16.mxu0 0
      %218 = vmatpush1.bf16.xpose.msra.mxu0 0
      %219 = vmatprep.subr.bf16.mxu0 0
      %220 = vmatpush1.bf16.xpose.msra.mxu0 0
      %221 = vmatprep.subr.bf16.mxu0 0
      %222 = vmatpush1.bf16.xpose.msra.mxu0 0
      %223 = vmatprep.subr.bf16.mxu0 0
      %224 = vmatpush1.bf16.xpose.msra.mxu0 0
      %225 = vmatprep.subr.bf16.mxu0 0
      %226 = vmatpush1.bf16.xpose.msra.mxu0 0
      %227 = vmatprep.subr.bf16.mxu0 0
      %228 = vmatpush1.bf16.xpose.msra.mxu0 0
      %229 = vmatprep.subr.bf16.mxu0 0
      %230 = vmatpush1.bf16.xpose.msra.mxu0 0
      %231 = vmatprep.subr.bf16.mxu0 0
      %232 = vmatpush1.bf16.xpose.msra.mxu0 0
      %233 = vmatprep.subr.bf16.mxu0 0
      %234 = vmatpush1.bf16.xpose.msra.mxu0 0
      %235 = vmatprep.subr.bf16.mxu0 0
      %236 = vmatpush1.bf16.xpose.msra.mxu0 0
      %237 = vmatprep.subr.bf16.mxu0 0
      %238 = vmatpush1.bf16.xpose.msra.mxu0 0
      %239 = vmatprep.subr.bf16.mxu0 0
      %240 = vmatpush1.bf16.xpose.msra.mxu0 0
      %241 = vmatprep.mubr.bf16.mxu0 0
      %242 = vmatmul.mubr.bf16.gmra.mrb[0].mxu0 %v204
      %v243 = vpop.f32.mrb[0].mxu0
      %v244 = vadd.f32 0.0, %v243
      %v245 = vpop.f32.mrb[0].mxu0
      %v246 = vpop.f32.mrb[0].mxu0
      %v247 = vpop.f32.mrb[0].mxu0
      %248 = vdwg.mxu0
      %v249 = vsel %vm200, 1, 0
      %v250 = vlaneseq
      %v251 = vshrl.u32 %v250, 7
      %v252 = vsub.s32 0, %v251
      %v253 = vrot.slane %v249, %v252
      %vm254 = vcmp.eq.s32.totalorder %v253, 1
      %v255 = vsel %vm254, %v244, -1e+20
      %v256 = vmul.f32 %v255, 0.25
      %vm257 = vcmask 64512
      %v258 = vsel %vm257, %v256, -inf
      %259 = vmax.xlane.f32.xlu0 %v258
      %v260 = vpop.xlane.xlu0 %259
      %v261 = vsub.f32 %v256, %v260
      %v262 = vmul.f32 %v261, 1.442695
      %v263 = vpow.pop %v262
      %v264 = vsel %vm257, %v263, 0.0
      %265 = vadd.xlane.f32.xlu0 %v264
      %v266 = vpop.xlane.xlu0 %265
      %v267 = vrcp.pop %v266
      %v268 = vmul.f32 %v263, %v267
      %v269 = vpack.c.bf16 %v268, %v268
      %v271 = vunpack.c.l.b16 %v198
      %v272 = vpack.c.b16 %v271, %v271
      %273 = vrot.lane.b32.xlu0 %v272, 96
      %v274 = vpop.permute.xlu0 %273
      %v276 = vsel %vm257, %v269, 0
      %vm278 = vcmask 1043456
      %v280 = vsel %vm278, %v274, 0
      %282 = vmatprep.subr.bf16.mxu0 0
      %283 = vmatpush1.bf16.msra.mxu0 %v280
      %284 = vmatprep.subr.bf16.mxu0 0
      %285 = vmatpush1.bf16.msra.mxu0 0
      %286 = vmatprep.subr.bf16.mxu0 0
      %287 = vmatpush1.bf16.msra.mxu0 0
      %288 = vmatprep.subr.bf16.mxu0 0
      %289 = vmatpush1.bf16.msra.mxu0 0
      %290 = vmatprep.subr.bf16.mxu0 0
      %291 = vmatpush1.bf16.msra.mxu0 0
      %292 = vmatprep.subr.bf16.mxu0 0
      %293 = vmatpush1.bf16.msra.mxu0 0
      %294 = vmatprep.subr.bf16.mxu0 0
      %295 = vmatpush1.bf16.msra.mxu0 0
      %296 = vmatprep.subr.bf16.mxu0 0
      %297 = vmatpush1.bf16.msra.mxu0 0
      %298 = vmatprep.subr.bf16.mxu0 0
      %299 = vmatpush1.bf16.msra.mxu0 0
      %300 = vmatprep.subr.bf16.mxu0 0
      %301 = vmatpush1.bf16.msra.mxu0 0
      %302 = vmatprep.subr.bf16.mxu0 0
      %303 = vmatpush1.bf16.msra.mxu0 0
      %304 = vmatprep.subr.bf16.mxu0 0
      %305 = vmatpush1.bf16.msra.mxu0 0
      %306 = vmatprep.subr.bf16.mxu0 0
      %307 = vmatpush1.bf16.msra.mxu0 0
      %308 = vmatprep.subr.bf16.mxu0 0
      %309 = vmatpush1.bf16.msra.mxu0 0
      %310 = vmatprep.subr.bf16.mxu0 0
      %311 = vmatpush1.bf16.msra.mxu0 0
      %312 = vmatprep.subr.bf16.mxu0 0
      %313 = vmatpush1.bf16.msra.mxu0 0
      %314 = vmatprep.mubr.bf16.mxu0 0
      %315 = vmatmul.mubr.bf16.gmra.mrb[0].mxu0 %v276
      %v316 = vpop.f32.mrb[0].mxu0
      %v317 = vadd.f32 0.0, %v316
      %v318 = vpop.f32.mrb[0].mxu0
      %v319 = vpop.f32.mrb[0].mxu0
      %v320 = vpop.f32.mrb[0].mxu0
      %321 = vdwg.mxu0
      %v323 = vunpack.c.l.b16 %v201
      %v324 = vpack.c.b16 %v323, %v323
      %325 = vrot.lane.b32.xlu0 %v324, 112
      %v326 = vpop.permute.xlu0 %325
      %327 = vrot.lane.b32.xlu0 %v272, 112
      %v328 = vpop.permute.xlu0 %327
      %v330 = vsel %vm202, %v326, 0
      %v333 = vsel %vm202, %v328, 0
      %335 = vmatprep.subr.bf16.mxu0 0
      %336 = vmatpush1.bf16.xpose.msra.mxu0 %v333
      %337 = vmatprep.subr.bf16.mxu0 0
      %338 = vmatpush1.bf16.xpose.msra.mxu0 0
      %339 = vmatprep.subr.bf16.mxu0 0
      %340 = vmatpush1.bf16.xpose.msra.mxu0 0
      %341 = vmatprep.subr.bf16.mxu0 0
      %342 = vmatpush1.bf16.xpose.msra.mxu0 0
      %343 = vmatprep.subr.bf16.mxu0 0
      %344 = vmatpush1.bf16.xpose.msra.mxu0 0
      %345 = vmatprep.subr.bf16.mxu0 0
      %346 = vmatpush1.bf16.xpose.msra.mxu0 0
      %347 = vmatprep.subr.bf16.mxu0 0
      %348 = vmatpush1.bf16.xpose.msra.mxu0 0
      %349 = vmatprep.subr.bf16.mxu0 0
      %350 = vmatpush1.bf16.xpose.msra.mxu0 0
      %351 = vmatprep.subr.bf16.mxu0 0
      %352 = vmatpush1.bf16.xpose.msra.mxu0 0
      %353 = vmatprep.subr.bf16.mxu0 0
      %354 = vmatpush1.bf16.xpose.msra.mxu0 0
      %355 = vmatprep.subr.bf16.mxu0 0
      %356 = vmatpush1.bf16.xpose.msra.mxu0 0
      %357 = vmatprep.subr.bf16.mxu0 0
      %358 = vmatpush1.bf16.xpose.msra.mxu0 0
      %359 = vmatprep.subr.bf16.mxu0 0
      %360 = vmatpush1.bf16.xpose.msra.mxu0 0
      %361 = vmatprep.subr.bf16.mxu0 0
      %362 = vmatpush1.bf16.xpose.msra.mxu0 0
      %363 = vmatprep.subr.bf16.mxu0 0
      %364 = vmatpush1.bf16.xpose.msra.mxu0 0
      %365 = vmatprep.subr.bf16.mxu0 0
      %366 = vmatpush1.bf16.xpose.msra.mxu0 0
      %367 = vmatprep.mubr.bf16.mxu0 0
      %368 = vmatmul.mubr.bf16.gmra.mrb[0].mxu0 %v330
      %v369 = vpop.f32.mrb[0].mxu0
      %v370 = vadd.f32 0.0, %v369
      %v371 = vpop.f32.mrb[0].mxu0
      %v372 = vpop.f32.mrb[0].mxu0
      %v373 = vpop.f32.mrb[0].mxu0
      %374 = vdwg.mxu0
      %v375 = vsel %vm254, %v370, -1e+20
      %v376 = vmul.f32 %v375, 0.25
      %v377 = vsel %vm257, %v376, -inf
      %378 = vmax.xlane.f32.xlu0 %v377
      %v379 = vpop.xlane.xlu0 %378
      %v380 = vsub.f32 %v376, %v379
      %v381 = vmul.f32 %v380, 1.442695
      %v382 = vpow.pop %v381
      %v383 = vsel %vm257, %v382, 0.0
      %384 = vadd.xlane.f32.xlu0 %v383
      %v385 = vpop.xlane.xlu0 %384
      %v386 = vrcp.pop %v385
      %v387 = vmul.f32 %v382, %v386
      %v388 = vpack.c.bf16 %v387, %v387
      %389 = vrot.lane.b32.xlu0 %v272, 80
      %v390 = vpop.permute.xlu0 %389
      %v392 = vsel %vm257, %v388, 0
      %v395 = vsel %vm278, %v390, 0
      %397 = vmatprep.subr.bf16.mxu0 0
      %398 = vmatpush1.bf16.msra.mxu0 %v395
      %399 = vmatprep.subr.bf16.mxu0 0
      %400 = vmatpush1.bf16.msra.mxu0 0
      %401 = vmatprep.subr.bf16.mxu0 0
      %402 = vmatpush1.bf16.msra.mxu0 0
      %403 = vmatprep.subr.bf16.mxu0 0
      %404 = vmatpush1.bf16.msra.mxu0 0
      %405 = vmatprep.subr.bf16.mxu0 0
      %406 = vmatpush1.bf16.msra.mxu0 0
      %407 = vmatprep.subr.bf16.mxu0 0
      %408 = vmatpush1.bf16.msra.mxu0 0
      %409 = vmatprep.subr.bf16.mxu0 0
      %410 = vmatpush1.bf16.msra.mxu0 0
      %411 = vmatprep.subr.bf16.mxu0 0
      %412 = vmatpush1.bf16.msra.mxu0 0
      %413 = vmatprep.subr.bf16.mxu0 0
      %414 = vmatpush1.bf16.msra.mxu0 0
      %415 = vmatprep.subr.bf16.mxu0 0
      %416 = vmatpush1.bf16.msra.mxu0 0
      %417 = vmatprep.subr.bf16.mxu0 0
      %418 = vmatpush1.bf16.msra.mxu0 0
      %419 = vmatprep.subr.bf16.mxu0 0
      %420 = vmatpush1.bf16.msra.mxu0 0
      %421 = vmatprep.subr.bf16.mxu0 0
      %422 = vmatpush1.bf16.msra.mxu0 0
      %423 = vmatprep.subr.bf16.mxu0 0
      %424 = vmatpush1.bf16.msra.mxu0 0
      %425 = vmatprep.subr.bf16.mxu0 0
      %426 = vmatpush1.bf16.msra.mxu0 0
      %427 = vmatprep.subr.bf16.mxu0 0
      %428 = vmatpush1.bf16.msra.mxu0 0
      %429 = vmatprep.mubr.bf16.mxu0 0
      %430 = vmatmul.mubr.bf16.gmra.mrb[0].mxu0 %v392
      %v431 = vpop.f32.mrb[0].mxu0
      %v432 = vadd.f32 0.0, %v431
      %v433 = vpop.f32.mrb[0].mxu0
      %v434 = vpop.f32.mrb[0].mxu0
      %v435 = vpop.f32.mrb[0].mxu0
      %436 = vdwg.mxu0
      %438 = vrot.lane.b32.xlu0 %v432, 16
      %v439 = vpop.permute.xlu0 %438
      %v441 = vsel %vm202, %v317, %v439
      %v442 = vpack.c.bf16 %v441, %v441
      %vm443 = vcmask 257024
      %444 = vst.msk [vmem:[%s196] sm:$0xf] %vm443, %v442
      %p445 = scmp.lt.s32.totalorder %s14, 1
      %s446 = scalar_select %p445, %s14, 1
      %s447 = smul.addr %s446, 4
      %s448 = scalar_lea.vmem %s3, %s447
      // Predicated region
      $region33: #{transformer_forward.44} parent=31 // pred_check
        %p449 = pneg %p110
      $region34: #{transformer_forward.44} parent=31 // pred_check_branch
        %451 = sbr.rel (%p449) target = $region36
      $region35: #{transformer_forward.44} parent=31 // pred_region
        _
      $region36: #{transformer_forward.44} parent=31 // pred_fallthru
        _
    $region32: #{transformer_forward.44} parent=5 // pred_fallthru
      _
    %p452 = scmp.le.s32.totalorder 2, %s9
    // Predicated region
    $region37: #{transformer_forward.44} parent=5 // pred_check
      %p453 = pneg %p452
    $region38: #{transformer_forward.44} parent=5 // pred_check_branch
      %455 = sbr.rel (%p453) target = $region40
    $region39: #{transformer_forward.44} parent=5 // pred_region
      %s456 = ssub.s32 %s9, 2
      // Predicated region
      $region41: #{transformer_forward.44} parent=39 // pred_check
        %p457 = pneg %p116
      $region42: #{transformer_forward.44} parent=39 // pred_check_branch
        %459 = sbr.rel (%p457) target = $region44
      $region43: #{transformer_forward.44} parent=39 // pred_region
        %p460 = scmp.lt.s32.totalorder %s15, 1
        %s461 = scalar_select %p460, %s15, 1
        %s462 = smul.addr %s461, 4
        %s463 = scalar_lea.vmem %s3, %s462
      $region44: #{transformer_forward.44} parent=39 // pred_fallthru
        _
    $region40: #{transformer_forward.44} parent=5 // pred_fallthru
      _
  $region6: #{transformer_forward.44} parent=0 // loop_footer
    %s13 = sadd.s32 1, %s9
  $region7: #{transformer_forward.44} parent=0 // loop_footer_branch
    %8 = sbr.rel target = $region3
  $region8: #{transformer_forward.44} parent=0 // loop_exit
    _

</llo_original>
